<compile_context>
chip_gen: v5e
topology: v5e:2x2
jax: 0.10.0
libtpu: 0.0.40
codegen_flags: <defaults>
</compile_context>

<pallas_src>
import functools
import math

import jax
import jax.numpy as jnp
from jax.experimental import pallas as pl
from jax.experimental.pallas import tpu as pltpu


def _fused_block_kernel(x_ref, w1_ref, b1_ref, w2_ref, b2_ref, o_ref, c1pad_ref):
    # x_ref:     (H+2, 2W+2, Cin)   bf16  W-widened, H/W edge-padded small input
    #                                     (resident in VMEM per image).
    # w1_ref:    (12, Cin, Cout)    bf16  row-folded conv1 taps:
    #                                     [phase E,O] x [row offset a=0,1] x [dx].
    # b1_ref:    (1, Cout)          f32
    # w2_ref:    (9, Cout, Cout)    bf16  conv2 taps, index dy*3+dx.
    # b2_ref:    (1, Cout)          f32
    # o_ref:     (1, TH, 2W, Cout)  bf16  output tile (NHWC).
    # c1pad_ref: (TH+2, 2W+2, Cout) bf16  scratch: conv1 tile + reflect halo.
    t = pl.program_id(1)
    th = o_ref.shape[1]
    ow = o_ref.shape[2]
    cin = x_ref.shape[2]
    cout = o_ref.shape[3]
    half = th // 2
    hrows = half + 1                    # rows per output-row phase (incl. halo)
    neg = jnp.float32(0.2)

    def lrelu(v):
        return jnp.where(v > 0, v, neg * v)

    # ---- conv1 (upsample folded into row weights): tap-accumulated matmuls ---
    rs = pl.multiple_of(t * half, half)
    m1 = hrows * ow
    acc_e = jnp.zeros((m1, cout), jnp.float32)
    acc_o = jnp.zeros((m1, cout), jnp.float32)
    for a in range(2):
        for dx in range(3):
            patch = x_ref[pl.ds(rs + a, hrows), dx:dx + ow, :].reshape(m1, cin)
            acc_e = acc_e + jnp.dot(patch, w1_ref[a * 3 + dx],
                                    preferred_element_type=jnp.float32)
            acc_o = acc_o + jnp.dot(patch, w1_ref[6 + a * 3 + dx],
                                    preferred_element_type=jnp.float32)
    c1_e = lrelu(acc_e + b1_ref[...]).reshape(hrows, ow, cout).astype(c1pad_ref.dtype)
    c1_o = lrelu(acc_o + b1_ref[...]).reshape(hrows, ow, cout).astype(c1pad_ref.dtype)
    # Interleave row phases: slab row k <-> upsampled out row (t*th - 1 + k),
    # i.e. sequence O[0], E[0], O[1], E[1], ...  (cheap: leading-dim shuffle).
    c1 = jnp.stack([c1_o, c1_e], axis=1).reshape(th + 2, ow, cout)

    # ---- reflect-pad conv1 tile into the VMEM scratch (never hits HBM) ------
    c1pad_ref[:, 1:ow + 1, :] = c1
    c1pad_ref[:, 0:1, :] = c1[:, 1:2, :]                   # reflect left
    c1pad_ref[:, ow + 1:ow + 2, :] = c1[:, ow - 2:ow - 1, :]  # reflect right

    @pl.when(t == 0)
    def _():                                               # top image edge
        c1pad_ref[0, :, :] = c1pad_ref[2, :, :]

    @pl.when(t == pl.num_programs(1) - 1)
    def _():                                               # bottom image edge
        c1pad_ref[th + 1, :, :] = c1pad_ref[th - 1, :, :]

    # ---- conv2: tap-accumulated matmuls over per-tap ref slices -------------
    m2 = th * ow
    acc2 = jnp.zeros((m2, cout), jnp.float32)
    for dy in range(3):
        for dx in range(3):
            patch = c1pad_ref[dy:dy + th, dx:dx + ow, :].reshape(m2, cout)
            acc2 = acc2 + jnp.dot(patch, w2_ref[dy * 3 + dx],
                                  preferred_element_type=jnp.float32)
    a2 = lrelu(acc2 + b2_ref[...])
    o_ref[...] = a2.reshape(1, th, ow, cout).astype(o_ref.dtype)


# ------------------------------ wrapper ------------------------------------

def _pick_tile_h(out_h, requested):
    """Largest even divisor of out_h that is <= requested (footgun-free)."""
    if requested is None:
        requested = 16
    for cand in range(min(int(requested), out_h), 1, -1):
        if cand % 2 == 0 and out_h % cand == 0:
            return cand
    return out_h


def progan_generator_block_nhwc(params, x_nhwc, *, tile_h=16):
    """Fused ProGAN generator block, NHWC in -> NHWC bf16 out (preferred path)."""
    # TODO(synk): is_first_block=True (ConvTranspose2d kernel_size=4) path not implemented.
    n, h, w, cin = x_nhwc.shape
    cout = params["w1"].shape[0]
    out_h, out_w = 2 * h, 2 * w
    th = _pick_tile_h(out_h, tile_h)
    num_t = out_h // th
    assert out_h % th == 0 and th % 2 == 0

    x = x_nhwc.astype(jnp.bfloat16)
    # reflect-pad(1) of a 2x nearest-upsample == edge-pad(1) of the upsample.
    # Widen W once on the small input (cheap); the H upsample is folded into
    # conv1's weights inside the kernel, so the 4x image is never materialized.
    xw = jnp.concatenate(
        [x[:, :, :1, :], jnp.repeat(x, 2, axis=2), x[:, :, w - 1:, :]], axis=2)
    xw = jnp.pad(xw, ((0, 0), (1, 1), (0, 0), (0, 0)), mode="edge")
    # xw: (N, H+2, 2W+2, Cin)

    gain1 = math.sqrt(2.0) / math.sqrt(cin * 9)
    gain2 = math.sqrt(2.0) / math.sqrt(cout * 9)
    # (Cout, Cin, 3, 3) -> (dy, dx, ci, co), equalized-lr gain folded in.
    wt1 = jnp.transpose(params["w1"].astype(jnp.float32) * gain1, (2, 3, 1, 0))
    # Row-folded taps (upsampled output-row phases see only 2 source rows):
    #   even rows: a=0 -> dy0,      a=1 -> dy1+dy2
    #   odd  rows: a=0 -> dy0+dy1,  a=1 -> dy2
    w1_taps = jnp.concatenate(
        [wt1[0], wt1[1] + wt1[2], wt1[0] + wt1[1], wt1[2]],
        axis=0).astype(jnp.bfloat16)                        # (12, Cin, Cout)
    w2_taps = jnp.transpose(params["w2"].astype(jnp.float32) * gain2,
                            (2, 3, 1, 0)).reshape(9, cout, cout).astype(jnp.bfloat16)
    b1 = params["b1"].reshape(1, cout).astype(jnp.float32)
    b2 = params["b2"].reshape(1, cout).astype(jnp.float32)

    # VMEM budget (double-buffered x/out, single-buffered weights, scratch).
    bytes_est = (2 * (h + 2) * (out_w + 2) * cin * 2
                 + (12 * cin * cout + 9 * cout * cout) * 2 + 4 * cout * 4
                 + 2 * th * out_w * cout * 2
                 + (th + 2) * (out_w + 2) * cout * 2)
    # v7x has only 64 MiB physical VMEM: lower tile_h there for big blocks.
    vmem_limit = int(min(96 << 20, max(32 << 20, 2 * bytes_est + (4 << 20))))

    flops = 2 * n * out_h * out_w * (6 * cin + 9 * cout) * cout
    bytes_accessed = (xw.size * 2 + w1_taps.size * 2 + w2_taps.size * 2
                      + (b1.size + b2.size) * 4 + n * out_h * out_w * cout * 2)

    out = pl.pallas_call(
        _fused_block_kernel,
        out_shape=jax.ShapeDtypeStruct((n, out_h, out_w, cout), jnp.bfloat16),
        grid=(n, num_t),
        in_specs=[
            # whole small image; block index constant in t -> resident in VMEM
            # across all H tiles of one image.
            pl.BlockSpec((pl.Squeezed(), h + 2, out_w + 2, cin),
                         lambda i, t: (i, 0, 0, 0)),
            pl.BlockSpec((12, cin, cout), lambda i, t: (0, 0, 0),
                         pipeline_mode=pl.Buffered(1)),
            pl.BlockSpec((1, cout), lambda i, t: (0, 0),
                         pipeline_mode=pl.Buffered(1)),
            pl.BlockSpec((9, cout, cout), lambda i, t: (0, 0, 0),
                         pipeline_mode=pl.Buffered(1)),
            pl.BlockSpec((1, cout), lambda i, t: (0, 0),
                         pipeline_mode=pl.Buffered(1)),
        ],
        out_specs=pl.BlockSpec((1, th, out_w, cout), lambda i, t: (i, t, 0, 0)),
        scratch_shapes=[pltpu.VMEM((th + 2, out_w + 2, cout), jnp.bfloat16)],
        compiler_params=pltpu.CompilerParams(
            dimension_semantics=("parallel", "parallel"),
            vmem_limit_bytes=vmem_limit),
        cost_estimate=pl.CostEstimate(flops=flops, transcendentals=0,
                                      bytes_accessed=bytes_accessed),
    )(xw, w1_taps, b1, w2_taps, b2)
    return out


def progan_generator_block(params, x_nchw, *, tile_h=16):
    """NCHW -> NCHW wrapper matching the PyTorch module interface (bf16 out).

    Prefer progan_generator_block_nhwc and keep NHWC across blocks: the two
    transposes here cost a full HBM round-trip of the activations each.
    """
    x = jnp.transpose(x_nchw, (0, 2, 3, 1))
    y = progan_generator_block_nhwc(params, x, tile_h=tile_h)
    return jnp.transpose(y, (0, 3, 1, 2))


# ------------------------- parameter setup (glue) --------------------------

def init_progan_block_params(key, in_channels, out_channels):
    """Deterministic stand-in for torch.randn weights / zero biases."""
    k1, k2 = jax.random.split(key)
    return {
        "w1": jax.random.normal(k1, (out_channels, in_channels, 3, 3), jnp.float32),
        "b1": jnp.zeros((out_channels,), jnp.float32),
        "w2": jax.random.normal(k2, (out_channels, out_channels, 3, 3), jnp.float32),
        "b2": jnp.zeros((out_channels,), jnp.float32),
    }


# ---------------------------- pure-JAX reference ---------------------------

def _ref_forward(params, x_nchw):
    def conv(x, w, b, gain):
        xpad = jnp.pad(x, ((0, 0), (0, 0), (1, 1), (1, 1)), mode="reflect")
        y = jax.lax.conv_general_dilated(
            xpad, w * gain, window_strides=(1, 1), padding="VALID",
            dimension_numbers=("NCHW", "OIHW", "NCHW"))
        return y + b[None, :, None, None]

    lrelu = lambda v: jnp.where(v > 0, v, 0.2 * v)
    cin = x_nchw.shape[1]
    cout = params["w1"].shape[0]
    x = jnp.repeat(jnp.repeat(x_nchw, 2, axis=2), 2, axis=3)
    y = lrelu(conv(x, params["w1"], params["b1"], math.sqrt(2.0) / math.sqrt(cin * 9)))
    z = lrelu(conv(y, params["w2"], params["b2"], math.sqrt(2.0) / math.sqrt(cout * 9)))
    return z


if __name__ == "__main__":
    key = jax.random.PRNGKey(0)
    kx, kp = jax.random.split(key)

    N, Cin, H, W, Cout = 2, 4, 16, 16, 8
    x = jax.random.normal(kx, (N, Cin, H, W), jnp.float32)
    params = init_progan_block_params(kp, Cin, Cout)

    fwd = jax.jit(functools.partial(progan_generator_block, tile_h=8))
    out = jax.block_until_ready(fwd(params, x))
    assert out.shape == (N, Cout, 2 * H, 2 * W), out.shape

    ref = _ref_forward(params, x)
    diff = out.astype(jnp.float32) - ref
    max_abs_err = float(jnp.max(jnp.abs(diff)))
    rel_fro = float(jnp.sqrt(jnp.sum(diff * diff)) / jnp.sqrt(jnp.sum(ref * ref)))
    # bf16 weights/intermediates/output (f32 accumulation) -> loosened tolerance.
    assert max_abs_err < 3.5e-1, (max_abs_err, rel_fro)
    assert rel_fro < 4e-2, (max_abs_err, rel_fro)

    print("KERNEL_OK")
</pallas_src>

<mosaic_0001>
module attributes {stable_mosaic.version = 11 : i64} {
  func.func @_fused_block_kernel(%arg0: i32, %arg1: i32, %arg2: memref<1x18x34x4xbf16, #tpu.memory_space<vmem>>, %arg3: memref<12x4x8xbf16, #tpu.memory_space<vmem>>, %arg4: memref<1x8xf32, #tpu.memory_space<vmem>>, %arg5: memref<9x8x8xbf16, #tpu.memory_space<vmem>>, %arg6: memref<1x8xf32, #tpu.memory_space<vmem>>, %arg7: memref<1x8x32x8xbf16, #tpu.memory_space<vmem>>, %arg8: memref<10x34x8xbf16, #tpu.memory_space<vmem>>) attributes {dimension_semantics = [#tpu.dimension_semantics<parallel>, #tpu.dimension_semantics<parallel>], iteration_bounds = array<i64: 2, 4>, scalar_prefetch = 0 : i64, scratch_operands = 1 : i64, tpu.core_type = #tpu.core_type<tc>, window_params = [{transform_indices = @transform_0, window_bounds = array<i64: 1, 18, 34, 4>}, {pipeline_mode = #tpu.pipeline_mode<synchronous>, transform_indices = @transform_1, window_bounds = array<i64: 12, 4, 8>}, {pipeline_mode = #tpu.pipeline_mode<synchronous>, transform_indices = @transform_2, window_bounds = array<i64: 1, 8>}, {pipeline_mode = #tpu.pipeline_mode<synchronous>, transform_indices = @transform_3, window_bounds = array<i64: 9, 8, 8>}, {pipeline_mode = #tpu.pipeline_mode<synchronous>, transform_indices = @transform_4, window_bounds = array<i64: 1, 8>}, {transform_indices = @transform_5, window_bounds = array<i64: 1, 8, 32, 8>}]} {
    %c4_i32 = arith.constant 4 : i32
    %0 = arith.muli %arg1, %c4_i32 : i32
    %1 = tpu.assume_multiple %0, 4 : i32
    %cst = arith.constant 0.000000e+00 : f32
    %2 = vector.broadcast %cst : f32 to vector<160x8xf32>
    %cst_0 = arith.constant 0.000000e+00 : f32
    %3 = vector.broadcast %cst_0 : f32 to vector<160x8xf32>
    %c0_i32 = arith.constant 0 : i32
    %4 = arith.addi %1, %c0_i32 : i32
    %c0 = arith.constant 0 : index
    %5 = arith.index_cast %4 : i32 to index
    %c0_1 = arith.constant 0 : index
    %c0_2 = arith.constant 0 : index
    %6 = vector.load %arg2[%c0, %5, %c0_1, %c0_2] : memref<1x18x34x4xbf16, #tpu.memory_space<vmem>>, vector<1x5x32x4xbf16>
    %7 = vector.shape_cast %6 : vector<1x5x32x4xbf16> to vector<5x32x4xbf16>
    %8 = vector.shape_cast %7 : vector<5x32x4xbf16> to vector<160x4xbf16>
    %c0_3 = arith.constant 0 : index
    %c0_4 = arith.constant 0 : index
    %c0_5 = arith.constant 0 : index
    %9 = vector.load %arg3[%c0_3, %c0_4, %c0_5] : memref<12x4x8xbf16, #tpu.memory_space<vmem>>, vector<1x4x8xbf16>
    %10 = vector.shape_cast %9 : vector<1x4x8xbf16> to vector<4x8xbf16>
    %cst_6 = arith.constant dense<0.000000e+00> : vector<160x8xf32>
    %11 = tpu.matmul %8, %10, %cst_6 {dimension_numbers = #tpu.dot_dimension_numbers<[1], [0], [0], [1], [0, 0, 1, 1], [], []>} : vector<160x4xbf16>, vector<4x8xbf16>, vector<160x8xf32> -> vector<160x8xf32>
    %12 = arith.addf %2, %11 : vector<160x8xf32>
    %c6 = arith.constant 6 : index
    %c0_7 = arith.constant 0 : index
    %c0_8 = arith.constant 0 : index
    %13 = vector.load %arg3[%c6, %c0_7, %c0_8] : memref<12x4x8xbf16, #tpu.memory_space<vmem>>, vector<1x4x8xbf16>
    %14 = vector.shape_cast %13 : vector<1x4x8xbf16> to vector<4x8xbf16>
    %cst_9 = arith.constant dense<0.000000e+00> : vector<160x8xf32>
    %15 = tpu.matmul %8, %14, %cst_9 {dimension_numbers = #tpu.dot_dimension_numbers<[1], [0], [0], [1], [0, 0, 1, 1], [], []>} : vector<160x4xbf16>, vector<4x8xbf16>, vector<160x8xf32> -> vector<160x8xf32>
    %16 = arith.addf %3, %15 : vector<160x8xf32>
    %c0_i32_10 = arith.constant 0 : i32
    %17 = arith.addi %1, %c0_i32_10 : i32
    %c0_11 = arith.constant 0 : index
    %18 = arith.index_cast %17 : i32 to index
    %c1 = arith.constant 1 : index
    %c0_12 = arith.constant 0 : index
    %19 = vector.load %arg2[%c0_11, %18, %c1, %c0_12] : memref<1x18x34x4xbf16, #tpu.memory_space<vmem>>, vector<1x5x32x4xbf16>
    %20 = vector.shape_cast %19 : vector<1x5x32x4xbf16> to vector<5x32x4xbf16>
    %21 = vector.shape_cast %20 : vector<5x32x4xbf16> to vector<160x4xbf16>
    %c1_13 = arith.constant 1 : index
    %c0_14 = arith.constant 0 : index
    %c0_15 = arith.constant 0 : index
    %22 = vector.load %arg3[%c1_13, %c0_14, %c0_15] : memref<12x4x8xbf16, #tpu.memory_space<vmem>>, vector<1x4x8xbf16>
    %23 = vector.shape_cast %22 : vector<1x4x8xbf16> to vector<4x8xbf16>
    %cst_16 = arith.constant dense<0.000000e+00> : vector<160x8xf32>
    %24 = tpu.matmul %21, %23, %cst_16 {dimension_numbers = #tpu.dot_dimension_numbers<[1], [0], [0], [1], [0, 0, 1, 1], [], []>} : vector<160x4xbf16>, vector<4x8xbf16>, vector<160x8xf32> -> vector<160x8xf32>
    %25 = arith.addf %12, %24 : vector<160x8xf32>
    %c7 = arith.constant 7 : index
    %c0_17 = arith.constant 0 : index
    %c0_18 = arith.constant 0 : index
    %26 = vector.load %arg3[%c7, %c0_17, %c0_18] : memref<12x4x8xbf16, #tpu.memory_space<vmem>>, vector<1x4x8xbf16>
    %27 = vector.shape_cast %26 : vector<1x4x8xbf16> to vector<4x8xbf16>
    %cst_19 = arith.constant dense<0.000000e+00> : vector<160x8xf32>
    %28 = tpu.matmul %21, %27, %cst_19 {dimension_numbers = #tpu.dot_dimension_numbers<[1], [0], [0], [1], [0, 0, 1, 1], [], []>} : vector<160x4xbf16>, vector<4x8xbf16>, vector<160x8xf32> -> vector<160x8xf32>
    %29 = arith.addf %16, %28 : vector<160x8xf32>
    %c0_i32_20 = arith.constant 0 : i32
    %30 = arith.addi %1, %c0_i32_20 : i32
    %c0_21 = arith.constant 0 : index
    %31 = arith.index_cast %30 : i32 to index
    %c2 = arith.constant 2 : index
    %c0_22 = arith.constant 0 : index
    %32 = vector.load %arg2[%c0_21, %31, %c2, %c0_22] : memref<1x18x34x4xbf16, #tpu.memory_space<vmem>>, vector<1x5x32x4xbf16>
    %33 = vector.shape_cast %32 : vector<1x5x32x4xbf16> to vector<5x32x4xbf16>
    %34 = vector.shape_cast %33 : vector<5x32x4xbf16> to vector<160x4xbf16>
    %c2_23 = arith.constant 2 : index
    %c0_24 = arith.constant 0 : index
    %c0_25 = arith.constant 0 : index
    %35 = vector.load %arg3[%c2_23, %c0_24, %c0_25] : memref<12x4x8xbf16, #tpu.memory_space<vmem>>, vector<1x4x8xbf16>
    %36 = vector.shape_cast %35 : vector<1x4x8xbf16> to vector<4x8xbf16>
    %cst_26 = arith.constant dense<0.000000e+00> : vector<160x8xf32>
    %37 = tpu.matmul %34, %36, %cst_26 {dimension_numbers = #tpu.dot_dimension_numbers<[1], [0], [0], [1], [0, 0, 1, 1], [], []>} : vector<160x4xbf16>, vector<4x8xbf16>, vector<160x8xf32> -> vector<160x8xf32>
    %38 = arith.addf %25, %37 : vector<160x8xf32>
    %c8 = arith.constant 8 : index
    %c0_27 = arith.constant 0 : index
    %c0_28 = arith.constant 0 : index
    %39 = vector.load %arg3[%c8, %c0_27, %c0_28] : memref<12x4x8xbf16, #tpu.memory_space<vmem>>, vector<1x4x8xbf16>
    %40 = vector.shape_cast %39 : vector<1x4x8xbf16> to vector<4x8xbf16>
    %cst_29 = arith.constant dense<0.000000e+00> : vector<160x8xf32>
    %41 = tpu.matmul %34, %40, %cst_29 {dimension_numbers = #tpu.dot_dimension_numbers<[1], [0], [0], [1], [0, 0, 1, 1], [], []>} : vector<160x4xbf16>, vector<4x8xbf16>, vector<160x8xf32> -> vector<160x8xf32>
    %42 = arith.addf %29, %41 : vector<160x8xf32>
    %c1_i32 = arith.constant 1 : i32
    %43 = arith.addi %1, %c1_i32 : i32
    %c0_30 = arith.constant 0 : index
    %44 = arith.index_cast %43 : i32 to index
    %c0_31 = arith.constant 0 : index
    %c0_32 = arith.constant 0 : index
    %45 = vector.load %arg2[%c0_30, %44, %c0_31, %c0_32] : memref<1x18x34x4xbf16, #tpu.memory_space<vmem>>, vector<1x5x32x4xbf16>
    %46 = vector.shape_cast %45 : vector<1x5x32x4xbf16> to vector<5x32x4xbf16>
    %47 = vector.shape_cast %46 : vector<5x32x4xbf16> to vector<160x4xbf16>
    %c3 = arith.constant 3 : index
    %c0_33 = arith.constant 0 : index
    %c0_34 = arith.constant 0 : index
    %48 = vector.load %arg3[%c3, %c0_33, %c0_34] : memref<12x4x8xbf16, #tpu.memory_space<vmem>>, vector<1x4x8xbf16>
    %49 = vector.shape_cast %48 : vector<1x4x8xbf16> to vector<4x8xbf16>
    %cst_35 = arith.constant dense<0.000000e+00> : vector<160x8xf32>
    %50 = tpu.matmul %47, %49, %cst_35 {dimension_numbers = #tpu.dot_dimension_numbers<[1], [0], [0], [1], [0, 0, 1, 1], [], []>} : vector<160x4xbf16>, vector<4x8xbf16>, vector<160x8xf32> -> vector<160x8xf32>
    %51 = arith.addf %38, %50 : vector<160x8xf32>
    %c9 = arith.constant 9 : index
    %c0_36 = arith.constant 0 : index
    %c0_37 = arith.constant 0 : index
    %52 = vector.load %arg3[%c9, %c0_36, %c0_37] : memref<12x4x8xbf16, #tpu.memory_space<vmem>>, vector<1x4x8xbf16>
    %53 = vector.shape_cast %52 : vector<1x4x8xbf16> to vector<4x8xbf16>
    %cst_38 = arith.constant dense<0.000000e+00> : vector<160x8xf32>
    %54 = tpu.matmul %47, %53, %cst_38 {dimension_numbers = #tpu.dot_dimension_numbers<[1], [0], [0], [1], [0, 0, 1, 1], [], []>} : vector<160x4xbf16>, vector<4x8xbf16>, vector<160x8xf32> -> vector<160x8xf32>
    %55 = arith.addf %42, %54 : vector<160x8xf32>
    %c1_i32_39 = arith.constant 1 : i32
    %56 = arith.addi %1, %c1_i32_39 : i32
    %c0_40 = arith.constant 0 : index
    %57 = arith.index_cast %56 : i32 to index
    %c1_41 = arith.constant 1 : index
    %c0_42 = arith.constant 0 : index
    %58 = vector.load %arg2[%c0_40, %57, %c1_41, %c0_42] : memref<1x18x34x4xbf16, #tpu.memory_space<vmem>>, vector<1x5x32x4xbf16>
    %59 = vector.shape_cast %58 : vector<1x5x32x4xbf16> to vector<5x32x4xbf16>
    %60 = vector.shape_cast %59 : vector<5x32x4xbf16> to vector<160x4xbf16>
    %c4 = arith.constant 4 : index
    %c0_43 = arith.constant 0 : index
    %c0_44 = arith.constant 0 : index
    %61 = vector.load %arg3[%c4, %c0_43, %c0_44] : memref<12x4x8xbf16, #tpu.memory_space<vmem>>, vector<1x4x8xbf16>
    %62 = vector.shape_cast %61 : vector<1x4x8xbf16> to vector<4x8xbf16>
    %cst_45 = arith.constant dense<0.000000e+00> : vector<160x8xf32>
    %63 = tpu.matmul %60, %62, %cst_45 {dimension_numbers = #tpu.dot_dimension_numbers<[1], [0], [0], [1], [0, 0, 1, 1], [], []>} : vector<160x4xbf16>, vector<4x8xbf16>, vector<160x8xf32> -> vector<160x8xf32>
    %64 = arith.addf %51, %63 : vector<160x8xf32>
    %c10 = arith.constant 10 : index
    %c0_46 = arith.constant 0 : index
    %c0_47 = arith.constant 0 : index
    %65 = vector.load %arg3[%c10, %c0_46, %c0_47] : memref<12x4x8xbf16, #tpu.memory_space<vmem>>, vector<1x4x8xbf16>
    %66 = vector.shape_cast %65 : vector<1x4x8xbf16> to vector<4x8xbf16>
    %cst_48 = arith.constant dense<0.000000e+00> : vector<160x8xf32>
    %67 = tpu.matmul %60, %66, %cst_48 {dimension_numbers = #tpu.dot_dimension_numbers<[1], [0], [0], [1], [0, 0, 1, 1], [], []>} : vector<160x4xbf16>, vector<4x8xbf16>, vector<160x8xf32> -> vector<160x8xf32>
    %68 = arith.addf %55, %67 : vector<160x8xf32>
    %c1_i32_49 = arith.constant 1 : i32
    %69 = arith.addi %1, %c1_i32_49 : i32
    %c0_50 = arith.constant 0 : index
    %70 = arith.index_cast %69 : i32 to index
    %c2_51 = arith.constant 2 : index
    %c0_52 = arith.constant 0 : index
    %71 = vector.load %arg2[%c0_50, %70, %c2_51, %c0_52] : memref<1x18x34x4xbf16, #tpu.memory_space<vmem>>, vector<1x5x32x4xbf16>
    %72 = vector.shape_cast %71 : vector<1x5x32x4xbf16> to vector<5x32x4xbf16>
    %73 = vector.shape_cast %72 : vector<5x32x4xbf16> to vector<160x4xbf16>
    %c5 = arith.constant 5 : index
    %c0_53 = arith.constant 0 : index
    %c0_54 = arith.constant 0 : index
    %74 = vector.load %arg3[%c5, %c0_53, %c0_54] : memref<12x4x8xbf16, #tpu.memory_space<vmem>>, vector<1x4x8xbf16>
    %75 = vector.shape_cast %74 : vector<1x4x8xbf16> to vector<4x8xbf16>
    %cst_55 = arith.constant dense<0.000000e+00> : vector<160x8xf32>
    %76 = tpu.matmul %73, %75, %cst_55 {dimension_numbers = #tpu.dot_dimension_numbers<[1], [0], [0], [1], [0, 0, 1, 1], [], []>} : vector<160x4xbf16>, vector<4x8xbf16>, vector<160x8xf32> -> vector<160x8xf32>
    %77 = arith.addf %64, %76 : vector<160x8xf32>
    %c11 = arith.constant 11 : index
    %c0_56 = arith.constant 0 : index
    %c0_57 = arith.constant 0 : index
    %78 = vector.load %arg3[%c11, %c0_56, %c0_57] : memref<12x4x8xbf16, #tpu.memory_space<vmem>>, vector<1x4x8xbf16>
    %79 = vector.shape_cast %78 : vector<1x4x8xbf16> to vector<4x8xbf16>
    %cst_58 = arith.constant dense<0.000000e+00> : vector<160x8xf32>
    %80 = tpu.matmul %73, %79, %cst_58 {dimension_numbers = #tpu.dot_dimension_numbers<[1], [0], [0], [1], [0, 0, 1, 1], [], []>} : vector<160x4xbf16>, vector<4x8xbf16>, vector<160x8xf32> -> vector<160x8xf32>
    %81 = arith.addf %68, %80 : vector<160x8xf32>
    %c0_59 = arith.constant 0 : index
    %c0_60 = arith.constant 0 : index
    %82 = vector.load %arg4[%c0_59, %c0_60] : memref<1x8xf32, #tpu.memory_space<vmem>>, vector<1x8xf32>
    %83 = vector.broadcast %82 : vector<1x8xf32> to vector<160x8xf32>
    %84 = arith.addf %77, %83 : vector<160x8xf32>
    %cst_61 = arith.constant 0.000000e+00 : f32
    %85 = vector.broadcast %cst_61 : f32 to vector<160x8xf32>
    %86 = arith.cmpf ogt, %84, %85 : vector<160x8xf32>
    %cst_62 = arith.constant 2.000000e-01 : f32
    %87 = vector.broadcast %cst_62 : f32 to vector<160x8xf32>
    %88 = arith.mulf %87, %84 : vector<160x8xf32>
    %89 = arith.select %86, %84, %88 : vector<160x8xi1>, vector<160x8xf32>
    %90 = vector.shape_cast %89 : vector<160x8xf32> to vector<5x32x8xf32>
    %91 = arith.truncf %90 : vector<5x32x8xf32> to vector<5x32x8xbf16>
    %c0_63 = arith.constant 0 : index
    %c0_64 = arith.constant 0 : index
    %92 = vector.load %arg4[%c0_63, %c0_64] : memref<1x8xf32, #tpu.memory_space<vmem>>, vector<1x8xf32>
    %93 = vector.broadcast %92 : vector<1x8xf32> to vector<160x8xf32>
    %94 = arith.addf %81, %93 : vector<160x8xf32>
    %cst_65 = arith.constant 0.000000e+00 : f32
    %95 = vector.broadcast %cst_65 : f32 to vector<160x8xf32>
    %96 = arith.cmpf ogt, %94, %95 : vector<160x8xf32>
    %cst_66 = arith.constant 2.000000e-01 : f32
    %97 = vector.broadcast %cst_66 : f32 to vector<160x8xf32>
    %98 = arith.mulf %97, %94 : vector<160x8xf32>
    %99 = arith.select %96, %94, %98 : vector<160x8xi1>, vector<160x8xf32>
    %100 = vector.shape_cast %99 : vector<160x8xf32> to vector<5x32x8xf32>
    %101 = arith.truncf %100 : vector<5x32x8xf32> to vector<5x32x8xbf16>
    %102 = vector.shape_cast %101 : vector<5x32x8xbf16> to vector<5x1x32x8xbf16>
    %103 = vector.shape_cast %91 : vector<5x32x8xbf16> to vector<5x1x32x8xbf16>
    %104 = tpu.concatenate %102, %103 in 1 : vector<5x1x32x8xbf16>, vector<5x1x32x8xbf16> -> vector<5x2x32x8xbf16>
    %105 = vector.shape_cast %104 : vector<5x2x32x8xbf16> to vector<10x32x8xbf16>
    %c0_67 = arith.constant 0 : index
    %c1_68 = arith.constant 1 : index
    %c0_69 = arith.constant 0 : index
    %106 = vector.load %arg8[%c0_67, %c1_68, %c0_69] : memref<10x34x8xbf16, #tpu.memory_space<vmem>>, vector<10x32x8xbf16>
    tpu.vector_store %arg8[%c0_67, %c1_68, %c0_69], %105 {strides = array<i32>} : memref<10x34x8xbf16, #tpu.memory_space<vmem>>, vector<10x32x8xbf16>,
    %107 = vector.extract_strided_slice %105 {offsets = [0, 1, 0], sizes = [10, 1, 8], strides = [1, 1, 1]} : vector<10x32x8xbf16> to vector<10x1x8xbf16>
    %c0_70 = arith.constant 0 : index
    %c0_71 = arith.constant 0 : index
    %c0_72 = arith.constant 0 : index
    %108 = vector.load %arg8[%c0_70, %c0_71, %c0_72] : memref<10x34x8xbf16, #tpu.memory_space<vmem>>, vector<10x1x8xbf16>
    tpu.vector_store %arg8[%c0_70, %c0_71, %c0_72], %107 {strides = array<i32>} : memref<10x34x8xbf16, #tpu.memory_space<vmem>>, vector<10x1x8xbf16>,
    %109 = vector.extract_strided_slice %105 {offsets = [0, 30, 0], sizes = [10, 1, 8], strides = [1, 1, 1]} : vector<10x32x8xbf16> to vector<10x1x8xbf16>
    %c0_73 = arith.constant 0 : index
    %c33 = arith.constant 33 : index
    %c0_74 = arith.constant 0 : index
    %110 = vector.load %arg8[%c0_73, %c33, %c0_74] : memref<10x34x8xbf16, #tpu.memory_space<vmem>>, vector<10x1x8xbf16>
    tpu.vector_store %arg8[%c0_73, %c33, %c0_74], %109 {strides = array<i32>} : memref<10x34x8xbf16, #tpu.memory_space<vmem>>, vector<10x1x8xbf16>,
    %c0_i32_75 = arith.constant 0 : i32
    %111 = arith.cmpi eq, %arg1, %c0_i32_75 : i32
    %112 = arith.extui %111 : i1 to i32
    %c0_i32_76 = arith.constant 0 : i32
    %113 = arith.cmpi ne, %112, %c0_i32_76 : i32
    scf.if %113 {
      %c2_150 = arith.constant 2 : index
      %c0_151 = arith.constant 0 : index
      %c0_152 = arith.constant 0 : index
      %183 = vector.load %arg8[%c2_150, %c0_151, %c0_152] : memref<10x34x8xbf16, #tpu.memory_space<vmem>>, vector<1x34x8xbf16>
      %184 = vector.shape_cast %183 : vector<1x34x8xbf16> to vector<34x8xbf16>
      %c0_153 = arith.constant 0 : index
      %c0_154 = arith.constant 0 : index
      %c0_155 = arith.constant 0 : index
      %185 = vector.load %arg8[%c0_153, %c0_154, %c0_155] : memref<10x34x8xbf16, #tpu.memory_space<vmem>>, vector<1x34x8xbf16>
      %186 = vector.shape_cast %185 : vector<1x34x8xbf16> to vector<34x8xbf16>
      %187 = vector.shape_cast %184 : vector<34x8xbf16> to vector<1x34x8xbf16>
      tpu.vector_store %arg8[%c0_153, %c0_154, %c0_155], %187 {strides = array<i32>} : memref<10x34x8xbf16, #tpu.memory_space<vmem>>, vector<1x34x8xbf16>,
    } else {
    }
    %c3_i32 = arith.constant 3 : i32
    %114 = arith.cmpi eq, %arg1, %c3_i32 : i32
    %115 = arith.extui %114 : i1 to i32
    %c0_i32_77 = arith.constant 0 : i32
    %116 = arith.cmpi ne, %115, %c0_i32_77 : i32
    scf.if %116 {
      %c7_150 = arith.constant 7 : index
      %c0_151 = arith.constant 0 : index
      %c0_152 = arith.constant 0 : index
      %183 = vector.load %arg8[%c7_150, %c0_151, %c0_152] : memref<10x34x8xbf16, #tpu.memory_space<vmem>>, vector<1x34x8xbf16>
      %184 = vector.shape_cast %183 : vector<1x34x8xbf16> to vector<34x8xbf16>
      %c9_153 = arith.constant 9 : index
      %c0_154 = arith.constant 0 : index
      %c0_155 = arith.constant 0 : index
      %185 = vector.load %arg8[%c9_153, %c0_154, %c0_155] : memref<10x34x8xbf16, #tpu.memory_space<vmem>>, vector<1x34x8xbf16>
      %186 = vector.shape_cast %185 : vector<1x34x8xbf16> to vector<34x8xbf16>
      %187 = vector.shape_cast %184 : vector<34x8xbf16> to vector<1x34x8xbf16>
      tpu.vector_store %arg8[%c9_153, %c0_154, %c0_155], %187 {strides = array<i32>} : memref<10x34x8xbf16, #tpu.memory_space<vmem>>, vector<1x34x8xbf16>,
    } else {
    }
    %cst_78 = arith.constant 0.000000e+00 : f32
    %117 = vector.broadcast %cst_78 : f32 to vector<256x8xf32>
    %c0_79 = arith.constant 0 : index
    %c0_80 = arith.constant 0 : index
    %c0_81 = arith.constant 0 : index
    %118 = vector.load %arg8[%c0_79, %c0_80, %c0_81] : memref<10x34x8xbf16, #tpu.memory_space<vmem>>, vector<8x32x8xbf16>
    %119 = vector.shape_cast %118 : vector<8x32x8xbf16> to vector<256x8xbf16>
    %c0_82 = arith.constant 0 : index
    %c0_83 = arith.constant 0 : index
    %c0_84 = arith.constant 0 : index
    %120 = vector.load %arg5[%c0_82, %c0_83, %c0_84] : memref<9x8x8xbf16, #tpu.memory_space<vmem>>, vector<1x8x8xbf16>
    %121 = vector.shape_cast %120 : vector<1x8x8xbf16> to vector<8x8xbf16>
    %cst_85 = arith.constant dense<0.000000e+00> : vector<256x8xf32>
    %122 = tpu.matmul %119, %121, %cst_85 {dimension_numbers = #tpu.dot_dimension_numbers<[1], [0], [0], [1], [0, 0, 1, 1], [], []>} : vector<256x8xbf16>, vector<8x8xbf16>, vector<256x8xf32> -> vector<256x8xf32>
    %123 = arith.addf %117, %122 : vector<256x8xf32>
    %c0_86 = arith.constant 0 : index
    %c1_87 = arith.constant 1 : index
    %c0_88 = arith.constant 0 : index
    %124 = vector.load %arg8[%c0_86, %c1_87, %c0_88] : memref<10x34x8xbf16, #tpu.memory_space<vmem>>, vector<8x32x8xbf16>
    %125 = vector.shape_cast %124 : vector<8x32x8xbf16> to vector<256x8xbf16>
    %c1_89 = arith.constant 1 : index
    %c0_90 = arith.constant 0 : index
    %c0_91 = arith.constant 0 : index
    %126 = vector.load %arg5[%c1_89, %c0_90, %c0_91] : memref<9x8x8xbf16, #tpu.memory_space<vmem>>, vector<1x8x8xbf16>
    %127 = vector.shape_cast %126 : vector<1x8x8xbf16> to vector<8x8xbf16>
    %cst_92 = arith.constant dense<0.000000e+00> : vector<256x8xf32>
    %128 = tpu.matmul %125, %127, %cst_92 {dimension_numbers = #tpu.dot_dimension_numbers<[1], [0], [0], [1], [0, 0, 1, 1], [], []>} : vector<256x8xbf16>, vector<8x8xbf16>, vector<256x8xf32> -> vector<256x8xf32>
    %129 = arith.addf %123, %128 : vector<256x8xf32>
    %c0_93 = arith.constant 0 : index
    %c2_94 = arith.constant 2 : index
    %c0_95 = arith.constant 0 : index
    %130 = vector.load %arg8[%c0_93, %c2_94, %c0_95] : memref<10x34x8xbf16, #tpu.memory_space<vmem>>, vector<8x32x8xbf16>
    %131 = vector.shape_cast %130 : vector<8x32x8xbf16> to vector<256x8xbf16>
    %c2_96 = arith.constant 2 : index
    %c0_97 = arith.constant 0 : index
    %c0_98 = arith.constant 0 : index
    %132 = vector.load %arg5[%c2_96, %c0_97, %c0_98] : memref<9x8x8xbf16, #tpu.memory_space<vmem>>, vector<1x8x8xbf16>
    %133 = vector.shape_cast %132 : vector<1x8x8xbf16> to vector<8x8xbf16>
    %cst_99 = arith.constant dense<0.000000e+00> : vector<256x8xf32>
    %134 = tpu.matmul %131, %133, %cst_99 {dimension_numbers = #tpu.dot_dimension_numbers<[1], [0], [0], [1], [0, 0, 1, 1], [], []>} : vector<256x8xbf16>, vector<8x8xbf16>, vector<256x8xf32> -> vector<256x8xf32>
    %135 = arith.addf %129, %134 : vector<256x8xf32>
    %c1_100 = arith.constant 1 : index
    %c0_101 = arith.constant 0 : index
    %c0_102 = arith.constant 0 : index
    %136 = vector.load %arg8[%c1_100, %c0_101, %c0_102] : memref<10x34x8xbf16, #tpu.memory_space<vmem>>, vector<8x32x8xbf16>
    %137 = vector.shape_cast %136 : vector<8x32x8xbf16> to vector<256x8xbf16>
    %c3_103 = arith.constant 3 : index
    %c0_104 = arith.constant 0 : index
    %c0_105 = arith.constant 0 : index
    %138 = vector.load %arg5[%c3_103, %c0_104, %c0_105] : memref<9x8x8xbf16, #tpu.memory_space<vmem>>, vector<1x8x8xbf16>
    %139 = vector.shape_cast %138 : vector<1x8x8xbf16> to vector<8x8xbf16>
    %cst_106 = arith.constant dense<0.000000e+00> : vector<256x8xf32>
    %140 = tpu.matmul %137, %139, %cst_106 {dimension_numbers = #tpu.dot_dimension_numbers<[1], [0], [0], [1], [0, 0, 1, 1], [], []>} : vector<256x8xbf16>, vector<8x8xbf16>, vector<256x8xf32> -> vector<256x8xf32>
    %141 = arith.addf %135, %140 : vector<256x8xf32>
    %c1_107 = arith.constant 1 : index
    %c1_108 = arith.constant 1 : index
    %c0_109 = arith.constant 0 : index
    %142 = vector.load %arg8[%c1_107, %c1_108, %c0_109] : memref<10x34x8xbf16, #tpu.memory_space<vmem>>, vector<8x32x8xbf16>
    %143 = vector.shape_cast %142 : vector<8x32x8xbf16> to vector<256x8xbf16>
    %c4_110 = arith.constant 4 : index
    %c0_111 = arith.constant 0 : index
    %c0_112 = arith.constant 0 : index
    %144 = vector.load %arg5[%c4_110, %c0_111, %c0_112] : memref<9x8x8xbf16, #tpu.memory_space<vmem>>, vector<1x8x8xbf16>
    %145 = vector.shape_cast %144 : vector<1x8x8xbf16> to vector<8x8xbf16>
    %cst_113 = arith.constant dense<0.000000e+00> : vector<256x8xf32>
    %146 = tpu.matmul %143, %145, %cst_113 {dimension_numbers = #tpu.dot_dimension_numbers<[1], [0], [0], [1], [0, 0, 1, 1], [], []>} : vector<256x8xbf16>, vector<8x8xbf16>, vector<256x8xf32> -> vector<256x8xf32>
    %147 = arith.addf %141, %146 : vector<256x8xf32>
    %c1_114 = arith.constant 1 : index
    %c2_115 = arith.constant 2 : index
    %c0_116 = arith.constant 0 : index
    %148 = vector.load %arg8[%c1_114, %c2_115, %c0_116] : memref<10x34x8xbf16, #tpu.memory_space<vmem>>, vector<8x32x8xbf16>
    %149 = vector.shape_cast %148 : vector<8x32x8xbf16> to vector<256x8xbf16>
    %c5_117 = arith.constant 5 : index
    %c0_118 = arith.constant 0 : index
    %c0_119 = arith.constant 0 : index
    %150 = vector.load %arg5[%c5_117, %c0_118, %c0_119] : memref<9x8x8xbf16, #tpu.memory_space<vmem>>, vector<1x8x8xbf16>
    %151 = vector.shape_cast %150 : vector<1x8x8xbf16> to vector<8x8xbf16>
    %cst_120 = arith.constant dense<0.000000e+00> : vector<256x8xf32>
    %152 = tpu.matmul %149, %151, %cst_120 {dimension_numbers = #tpu.dot_dimension_numbers<[1], [0], [0], [1], [0, 0, 1, 1], [], []>} : vector<256x8xbf16>, vector<8x8xbf16>, vector<256x8xf32> -> vector<256x8xf32>
    %153 = arith.addf %147, %152 : vector<256x8xf32>
    %c2_121 = arith.constant 2 : index
    %c0_122 = arith.constant 0 : index
    %c0_123 = arith.constant 0 : index
    %154 = vector.load %arg8[%c2_121, %c0_122, %c0_123] : memref<10x34x8xbf16, #tpu.memory_space<vmem>>, vector<8x32x8xbf16>
    %155 = vector.shape_cast %154 : vector<8x32x8xbf16> to vector<256x8xbf16>
    %c6_124 = arith.constant 6 : index
    %c0_125 = arith.constant 0 : index
    %c0_126 = arith.constant 0 : index
    %156 = vector.load %arg5[%c6_124, %c0_125, %c0_126] : memref<9x8x8xbf16, #tpu.memory_space<vmem>>, vector<1x8x8xbf16>
    %157 = vector.shape_cast %156 : vector<1x8x8xbf16> to vector<8x8xbf16>
    %cst_127 = arith.constant dense<0.000000e+00> : vector<256x8xf32>
    %158 = tpu.matmul %155, %157, %cst_127 {dimension_numbers = #tpu.dot_dimension_numbers<[1], [0], [0], [1], [0, 0, 1, 1], [], []>} : vector<256x8xbf16>, vector<8x8xbf16>, vector<256x8xf32> -> vector<256x8xf32>
    %159 = arith.addf %153, %158 : vector<256x8xf32>
    %c2_128 = arith.constant 2 : index
    %c1_129 = arith.constant 1 : index
    %c0_130 = arith.constant 0 : index
    %160 = vector.load %arg8[%c2_128, %c1_129, %c0_130] : memref<10x34x8xbf16, #tpu.memory_space<vmem>>, vector<8x32x8xbf16>
    %161 = vector.shape_cast %160 : vector<8x32x8xbf16> to vector<256x8xbf16>
    %c7_131 = arith.constant 7 : index
    %c0_132 = arith.constant 0 : index
    %c0_133 = arith.constant 0 : index
    %162 = vector.load %arg5[%c7_131, %c0_132, %c0_133] : memref<9x8x8xbf16, #tpu.memory_space<vmem>>, vector<1x8x8xbf16>
    %163 = vector.shape_cast %162 : vector<1x8x8xbf16> to vector<8x8xbf16>
    %cst_134 = arith.constant dense<0.000000e+00> : vector<256x8xf32>
    %164 = tpu.matmul %161, %163, %cst_134 {dimension_numbers = #tpu.dot_dimension_numbers<[1], [0], [0], [1], [0, 0, 1, 1], [], []>} : vector<256x8xbf16>, vector<8x8xbf16>, vector<256x8xf32> -> vector<256x8xf32>
    %165 = arith.addf %159, %164 : vector<256x8xf32>
    %c2_135 = arith.constant 2 : index
    %c2_136 = arith.constant 2 : index
    %c0_137 = arith.constant 0 : index
    %166 = vector.load %arg8[%c2_135, %c2_136, %c0_137] : memref<10x34x8xbf16, #tpu.memory_space<vmem>>, vector<8x32x8xbf16>
    %167 = vector.shape_cast %166 : vector<8x32x8xbf16> to vector<256x8xbf16>
    %c8_138 = arith.constant 8 : index
    %c0_139 = arith.constant 0 : index
    %c0_140 = arith.constant 0 : index
    %168 = vector.load %arg5[%c8_138, %c0_139, %c0_140] : memref<9x8x8xbf16, #tpu.memory_space<vmem>>, vector<1x8x8xbf16>
    %169 = vector.shape_cast %168 : vector<1x8x8xbf16> to vector<8x8xbf16>
    %cst_141 = arith.constant dense<0.000000e+00> : vector<256x8xf32>
    %170 = tpu.matmul %167, %169, %cst_141 {dimension_numbers = #tpu.dot_dimension_numbers<[1], [0], [0], [1], [0, 0, 1, 1], [], []>} : vector<256x8xbf16>, vector<8x8xbf16>, vector<256x8xf32> -> vector<256x8xf32>
    %171 = arith.addf %165, %170 : vector<256x8xf32>
    %c0_142 = arith.constant 0 : index
    %c0_143 = arith.constant 0 : index
    %172 = vector.load %arg6[%c0_142, %c0_143] : memref<1x8xf32, #tpu.memory_space<vmem>>, vector<1x8xf32>
    %173 = vector.broadcast %172 : vector<1x8xf32> to vector<256x8xf32>
    %174 = arith.addf %171, %173 : vector<256x8xf32>
    %cst_144 = arith.constant 0.000000e+00 : f32
    %175 = vector.broadcast %cst_144 : f32 to vector<256x8xf32>
    %176 = arith.cmpf ogt, %174, %175 : vector<256x8xf32>
    %cst_145 = arith.constant 2.000000e-01 : f32
    %177 = vector.broadcast %cst_145 : f32 to vector<256x8xf32>
    %178 = arith.mulf %177, %174 : vector<256x8xf32>
    %179 = arith.select %176, %174, %178 : vector<256x8xi1>, vector<256x8xf32>
    %180 = vector.shape_cast %179 : vector<256x8xf32> to vector<1x8x32x8xf32>
    %181 = arith.truncf %180 : vector<1x8x32x8xf32> to vector<1x8x32x8xbf16>
    %c0_146 = arith.constant 0 : index
    %c0_147 = arith.constant 0 : index
    %c0_148 = arith.constant 0 : index
    %c0_149 = arith.constant 0 : index
    %182 = vector.load %arg7[%c0_146, %c0_147, %c0_148, %c0_149] : memref<1x8x32x8xbf16, #tpu.memory_space<vmem>>, vector<1x8x32x8xbf16>
    tpu.vector_store %arg7[%c0_146, %c0_147, %c0_148, %c0_149], %181 {strides = array<i32>} : memref<1x8x32x8xbf16, #tpu.memory_space<vmem>>, vector<1x8x32x8xbf16>,
    return
  }
  func.func @transform_0(%arg0: i32, %arg1: i32) -> (i32, i32, i32, i32) {
    %c0_i32 = arith.constant 0 : i32
    %c0_i32_0 = arith.constant 0 : i32
    %c0_i32_1 = arith.constant 0 : i32
    %c0_i32_2 = arith.constant 0 : i32
    return %arg0, %c0_i32, %c0_i32_0, %c0_i32_1 : i32, i32, i32, i32
  }
  func.func @transform_1(%arg0: i32, %arg1: i32) -> (i32, i32, i32) {
    %c0_i32 = arith.constant 0 : i32
    %c0_i32_0 = arith.constant 0 : i32
    %c0_i32_1 = arith.constant 0 : i32
    %c0_i32_2 = arith.constant 0 : i32
    return %c0_i32, %c0_i32_0, %c0_i32_1 : i32, i32, i32
  }
  func.func @transform_2(%arg0: i32, %arg1: i32) -> (i32, i32) {
    %c0_i32 = arith.constant 0 : i32
    %c0_i32_0 = arith.constant 0 : i32
    %c0_i32_1 = arith.constant 0 : i32
    return %c0_i32, %c0_i32_0 : i32, i32
  }
  func.func @transform_3(%arg0: i32, %arg1: i32) -> (i32, i32, i32) {
    %c0_i32 = arith.constant 0 : i32
    %c0_i32_0 = arith.constant 0 : i32
    %c0_i32_1 = arith.constant 0 : i32
    %c0_i32_2 = arith.constant 0 : i32
    return %c0_i32, %c0_i32_0, %c0_i32_1 : i32, i32, i32
  }
  func.func @transform_4(%arg0: i32, %arg1: i32) -> (i32, i32) {
    %c0_i32 = arith.constant 0 : i32
    %c0_i32_0 = arith.constant 0 : i32
    %c0_i32_1 = arith.constant 0 : i32
    return %c0_i32, %c0_i32_0 : i32, i32
  }
  func.func @transform_5(%arg0: i32, %arg1: i32) -> (i32, i32, i32, i32) {
    %c0_i32 = arith.constant 0 : i32
    %c0_i32_0 = arith.constant 0 : i32
    %c0_i32_1 = arith.constant 0 : i32
    return %arg0, %arg1, %c0_i32, %c0_i32_0 : i32, i32, i32, i32
  }
}

</mosaic_0001>

<llo_original>
// kernel: progan_generator_block.1
$region0: #{progan_generator_block.1}
  #allocation0 [shape = 'u32[]', space=smem, size = 0x4, offset = 0x4, fixed_abs, tag = 'smem constant byte address 0x4 - core index']
  #allocation1 [shape = 'u32[72,128]{1,0:T(1,128)}', space=vmem, size = 0x9000, scoped, tag = 'internal scratch']
  #allocation2 [shape = 'bf16[10,34,8]{2,1,0:T(8,128)(2,1)}', space=vmem, size = 0x19000, scoped, tag = 'scratch operand']
  %s0 = inlined_call_operand.vmem [shape: bf16[2,18,34,4], index: 0, kind: input, shape index: {}]
  %s1 = inlined_call_operand.vmem [shape: bf16[12,4,8], index: 1, kind: input, shape index: {}]
  %s2 = inlined_call_operand.vmem [shape: f32[1,8], index: 2, kind: input, shape index: {}]
  %s3 = inlined_call_operand.vmem [shape: bf16[9,8,8], index: 3, kind: input, shape index: {}]
  %s4 = inlined_call_operand.vmem [shape: f32[1,8], index: 4, kind: input, shape index: {}]
  %s5 = inlined_call_operand.vmem [shape: bf16[2,32,32,8], index: 5, kind: output, shape index: {}]
  %s6 = sld [smem:[#allocation0]]
  $region61: #{progan_generator_block.1} parent=0
    _
  %s8 = ssub.s32 1, %s6
  %s9 = scalar_select 0, %s8, %s6
  loop: start=0, step=1, limit=10
  $region2: #{progan_generator_block.1} parent=0 // loop_pre_header
    _
  $region3: #{progan_generator_block.1} parent=0 // loop_header
    %s11 = sphi 0, %s15
    %p12 = scmp.ge.s32.totalorder %s11, 10
    %s18 = sphi 0, %s30
    %s19 = sphi 0, %s26
    %s20 = sphi 0, %s18
    %s21 = sphi 0, %s19
    %s22 = sphi 0, %s20
    %s23 = sphi 0, %s21
    %s33 = sphi 0, %s35
    %s36 = sphi 0, %s33
    %s37 = sphi 0, %s36
    %s53 = sphi 0, %s37
    %s57 = sphi 0, %s57
    %s59 = sphi 0, %s57
    %s60 = sphi 0, %s59
    %s74 = sphi 0, %s60
    %s78 = sphi 0, %s78
    %s80 = sphi 0, %s78
    %s81 = sphi 0, %s80
    %s95 = sphi 0, %s81
    %s99 = sphi 0, %s99
    %s101 = sphi 0, %s99
    %s102 = sphi 0, %s101
    %s116 = sphi 0, %s102
    %s120 = sphi 0, %s120
    %s122 = sphi 0, %s120
    %s123 = sphi 0, %s122
    %s137 = sphi 0, %s123
    %s145 = sphi 0, %s147
    %s148 = sphi 0, %s145
    %s149 = sphi 0, %s148
    %s165 = sphi 0, %s149
  $region4: #{progan_generator_block.1} parent=0 // loop_header_branch
    %14 = sbr.rel (%p12) target = $region8
  $region5: #{progan_generator_block.1} parent=0 // loop_body
    %s16 = ssub.s32 %s11, 1
    %s17 = ssub.s32 %s11, 2
    %s24 = sadd.s32 1, %s19
    %p25 = scmp.ge.s32.totalorder %s24, 4
    %s26 = scalar_select %p25, 0, %s24
    %s27 = sadd.s32 1, %s18
    %s28 = scalar_select %p25, %s27, %s18
    %p29 = scmp.ge.s32.totalorder %s28, 2
    %s30 = scalar_select %p29, 0, %s28
    %s31 = ssub.s32 %s18, %s30
    %p32 = scmp.eq.s32.totalorder %s31, 0
    %s34 = sadd.s32 %s33, 1
    %s35 = scalar_select %p32, %s33, %s34
    %p38 = pneg %p32
    %p39 = scmp.eq.s32.totalorder %s11, 7
    %p40 = por %p38, %p39
    %p41 = scmp.ne.s32.totalorder %s33, %s36
    %p42 = scmp.eq.s32.totalorder %s11, 0
    %p43 = por %p41, %p42
    %p44 = scmp.ne.s32.totalorder %s33, %s36
    %p45 = scmp.eq.s32.totalorder %s16, 7
    %p46 = por %p44, %p45
    %p47 = scmp.ne.s32.totalorder %s36, %s37
    %p48 = scmp.eq.s32.totalorder %s16, 0
    %p49 = por %p47, %p48
    %p50 = scmp.ne.s32.totalorder %s36, %s37
    %p51 = scmp.eq.s32.totalorder %s17, 7
    %p52 = por %p50, %p51
    %p54 = scmp.ne.s32.totalorder %s37, %s53
    %p55 = scmp.eq.s32.totalorder %s17, 0
    %p56 = por %p54, %p55
    %s58 = sadd.s32 %s57, 1
    %p61 = scmp.eq.s32.totalorder %s11, 7
    %p62 = scmp.ne.s32.totalorder %s57, %s59
    %p63 = scmp.eq.s32.totalorder %s11, 0
    %p64 = por %p62, %p63
    %p65 = scmp.ne.s32.totalorder %s57, %s59
    %p66 = scmp.eq.s32.totalorder %s16, 7
    %p67 = por %p65, %p66
    %p68 = scmp.ne.s32.totalorder %s59, %s60
    %p69 = scmp.eq.s32.totalorder %s16, 0
    %p70 = por %p68, %p69
    %p71 = scmp.ne.s32.totalorder %s59, %s60
    %p72 = scmp.eq.s32.totalorder %s17, 7
    %p73 = por %p71, %p72
    %p75 = scmp.ne.s32.totalorder %s60, %s74
    %p76 = scmp.eq.s32.totalorder %s17, 0
    %p77 = por %p75, %p76
    %s79 = sadd.s32 %s78, 1
    %p82 = scmp.eq.s32.totalorder %s11, 7
    %p83 = scmp.ne.s32.totalorder %s78, %s80
    %p84 = scmp.eq.s32.totalorder %s11, 0
    %p85 = por %p83, %p84
    %p86 = scmp.ne.s32.totalorder %s78, %s80
    %p87 = scmp.eq.s32.totalorder %s16, 7
    %p88 = por %p86, %p87
    %p89 = scmp.ne.s32.totalorder %s80, %s81
    %p90 = scmp.eq.s32.totalorder %s16, 0
    %p91 = por %p89, %p90
    %p92 = scmp.ne.s32.totalorder %s80, %s81
    %p93 = scmp.eq.s32.totalorder %s17, 7
    %p94 = por %p92, %p93
    %p96 = scmp.ne.s32.totalorder %s81, %s95
    %p97 = scmp.eq.s32.totalorder %s17, 0
    %p98 = por %p96, %p97
    %s100 = sadd.s32 %s99, 1
    %p103 = scmp.eq.s32.totalorder %s11, 7
    %p104 = scmp.ne.s32.totalorder %s99, %s101
    %p105 = scmp.eq.s32.totalorder %s11, 0
    %p106 = por %p104, %p105
    %p107 = scmp.ne.s32.totalorder %s99, %s101
    %p108 = scmp.eq.s32.totalorder %s16, 7
    %p109 = por %p107, %p108
    %p110 = scmp.ne.s32.totalorder %s101, %s102
    %p111 = scmp.eq.s32.totalorder %s16, 0
    %p112 = por %p110, %p111
    %p113 = scmp.ne.s32.totalorder %s101, %s102
    %p114 = scmp.eq.s32.totalorder %s17, 7
    %p115 = por %p113, %p114
    %p117 = scmp.ne.s32.totalorder %s102, %s116
    %p118 = scmp.eq.s32.totalorder %s17, 0
    %p119 = por %p117, %p118
    %s121 = sadd.s32 %s120, 1
    %p124 = scmp.eq.s32.totalorder %s11, 7
    %p125 = scmp.ne.s32.totalorder %s120, %s122
    %p126 = scmp.eq.s32.totalorder %s11, 0
    %p127 = por %p125, %p126
    %p128 = scmp.ne.s32.totalorder %s120, %s122
    %p129 = scmp.eq.s32.totalorder %s16, 7
    %p130 = por %p128, %p129
    %p131 = scmp.ne.s32.totalorder %s122, %s123
    %p132 = scmp.eq.s32.totalorder %s16, 0
    %p133 = por %p131, %p132
    %p134 = scmp.ne.s32.totalorder %s122, %s123
    %p135 = scmp.eq.s32.totalorder %s17, 7
    %p136 = por %p134, %p135
    %p138 = scmp.ne.s32.totalorder %s123, %s137
    %p139 = scmp.eq.s32.totalorder %s17, 0
    %p140 = por %p138, %p139
    %s141 = ssub.s32 %s18, %s30
    %s142 = ssub.s32 %s19, %s26
    %s143 = sor.u32 %s141, %s142
    %p144 = scmp.eq.s32.totalorder %s143, 0
    %s146 = sadd.s32 %s145, 1
    %s147 = scalar_select %p144, %s145, %s146
    %p150 = pneg %p144
    %p151 = scmp.eq.s32.totalorder %s11, 7
    %p152 = por %p150, %p151
    %p153 = scmp.ne.s32.totalorder %s145, %s148
    %p154 = scmp.eq.s32.totalorder %s11, 0
    %p155 = por %p153, %p154
    %p156 = scmp.ne.s32.totalorder %s145, %s148
    %p157 = scmp.eq.s32.totalorder %s16, 7
    %p158 = por %p156, %p157
    %p159 = scmp.ne.s32.totalorder %s148, %s149
    %p160 = scmp.eq.s32.totalorder %s16, 0
    %p161 = por %p159, %p160
    %p162 = scmp.ne.s32.totalorder %s148, %s149
    %p163 = scmp.eq.s32.totalorder %s17, 7
    %p164 = por %p162, %p163
    %p166 = scmp.ne.s32.totalorder %s149, %s165
    %p167 = scmp.eq.s32.totalorder %s17, 0
    %p168 = por %p166, %p167
    %p169 = scmp.le.s32.totalorder 1, %s11
    %p170 = scmp.lt.s32.totalorder %s11, 9
    %p171 = pnand %p169, %p170
    %p172 = pneg %p171
    // Predicated region
    $region9: #{progan_generator_block.1} parent=5 // pred_check
      _
    $region10: #{progan_generator_block.1} parent=5 // pred_check_branch
      %174 = sbr.rel (%p171) target = $region12
    $region11: #{progan_generator_block.1} parent=5 // pred_region
      %s175 = ssub.s32 %s11, 1
      // Predicated region
      $region13: #{progan_generator_block.1} parent=11 // pred_check
        %p176 = pneg %p70
      $region14: #{progan_generator_block.1} parent=11 // pred_check_branch
        %178 = sbr.rel (%p176) target = $region16
      $region15: #{progan_generator_block.1} parent=11 // pred_region
        _
      $region16: #{progan_generator_block.1} parent=11 // pred_fallthru
        _
      // Predicated region
      $region17: #{progan_generator_block.1} parent=11 // pred_check
        %p179 = pneg %p91
      $region18: #{progan_generator_block.1} parent=11 // pred_check_branch
        %181 = sbr.rel (%p179) target = $region20
      $region19: #{progan_generator_block.1} parent=11 // pred_region
        _
      $region20: #{progan_generator_block.1} parent=11 // pred_fallthru
        _
      // Predicated region
      $region21: #{progan_generator_block.1} parent=11 // pred_check
        %p182 = pneg %p112
      $region22: #{progan_generator_block.1} parent=11 // pred_check_branch
        %184 = sbr.rel (%p182) target = $region24
      $region23: #{progan_generator_block.1} parent=11 // pred_region
        _
      $region24: #{progan_generator_block.1} parent=11 // pred_fallthru
        _
      // Predicated region
      $region25: #{progan_generator_block.1} parent=11 // pred_check
        %p185 = pneg %p133
      $region26: #{progan_generator_block.1} parent=11 // pred_check_branch
        %187 = sbr.rel (%p185) target = $region28
      $region27: #{progan_generator_block.1} parent=11 // pred_region
        _
      $region28: #{progan_generator_block.1} parent=11 // pred_fallthru
        _
    $region12: #{progan_generator_block.1} parent=5 // pred_fallthru
      _
    %p188 = scmp.lt.s32.totalorder %s11, 8
    // Predicated region
    $region29: #{progan_generator_block.1} parent=5 // pred_check
      %p189 = pneg %p188
    $region30: #{progan_generator_block.1} parent=5 // pred_check_branch
      %191 = sbr.rel (%p189) target = $region32
    $region31: #{progan_generator_block.1} parent=5 // pred_region
      // Predicated region
      $region33: #{progan_generator_block.1} parent=31 // pred_check
        %p192 = pneg %p43
      $region34: #{progan_generator_block.1} parent=31 // pred_check_branch
        %194 = sbr.rel (%p192) target = $region36
      $region35: #{progan_generator_block.1} parent=31 // pred_region
        %p195 = scmp.lt.s32.totalorder %s18, 1
        %s196 = scalar_select %p195, %s18, 1
        %s197 = smul.addr %s196, 90
        %s198 = smul.addr %s197, 4
        %s199 = scalar_lea.vmem %s0, %s198
      $region36: #{progan_generator_block.1} parent=31 // pred_fallthru
        _
    $region32: #{progan_generator_block.1} parent=5 // pred_fallthru
      _
    %p200 = scmp.le.s32.totalorder 1, %s11
    %p201 = scmp.lt.s32.totalorder %s11, 9
    %p202 = pnand %p200, %p201
    %p203 = pneg %p202
    // Predicated region
    $region37: #{progan_generator_block.1} parent=5 // pred_check
      _
    $region38: #{progan_generator_block.1} parent=5 // pred_check_branch
      %205 = sbr.rel (%p202) target = $region40
    $region39: #{progan_generator_block.1} parent=5 // pred_region
      %s206 = ssub.s32 %s11, 1
      %p207 = scmp.lt.s32.totalorder %s20, 1
      %s208 = scalar_select %p207, %s20, 1
      %s209 = smul.addr %s208, 90
      %s210 = smul.addr %s209, 4
      %s211 = scalar_lea.vmem %s0, %s210
      %p212 = pneg %p49
      %p213 = pneg %p46
      %p214 = pneg %p70
      %p215 = pneg %p67
      %p216 = pneg %p91
      %p217 = pneg %p88
      %p218 = pneg %p112
      %p219 = pneg %p109
      %p220 = pneg %p133
      %p221 = pneg %p130
      %p222 = pneg %p161
      %p223 = pneg %p158
      %s224 = smul.u32 8, %s21
      %p225 = scmp.lt.s32.totalorder %s20, 1
      %s226 = scalar_select %p225, %s20, 1
      %p227 = scmp.lt.s32.totalorder %s224, 31
      %s228 = scalar_select %p227, %s224, 31
      %s229 = smul.addr %s228, 4
      %s230 = smul.addr %s226, 128
      %s231 = sadd.s32 %s229, %s230
      %s232 = smul.addr %s231, 4
      %s233 = scalar_lea.vmem %s5, %s232
      %p234 = scmp.lt.s32.totalorder %s20, 1
      %s235 = scalar_select %p234, %s20, 1
      %s236 = smul.addr %s235, 90
      %s237 = smul.addr %s236, 4
      %s238 = scalar_lea.vmem %s0, %s237
      %s239 = smul.u32 8, %s21
      %p240 = scmp.lt.s32.totalorder %s20, 1
      %s241 = scalar_select %p240, %s20, 1
      %p242 = scmp.lt.s32.totalorder %s239, 31
      %s243 = scalar_select %p242, %s239, 31
      %s244 = smul.addr %s243, 4
      %s245 = smul.addr %s241, 128
      %s246 = sadd.s32 %s244, %s245
      %s247 = smul.addr %s246, 4
      %s248 = scalar_lea.vmem %s5, %s247
      %s249 = smul.u32 8, %s21
      %s251 = smul.u32 %s21, 4
      %s252 = smul.u32 %s251, 5
      %s253 = smul.addr %s252, 4
      %s254 = scalar_lea.vmem %s238, %s253
      %v255 = vld [vmem:[%s254] sm:$0xf]
      %v256 = vld [vmem:[%s254 + $0x4] sm:$0xf]
      %v257 = vld [vmem:[%s254 + $0x8] sm:$0xf]
      %v258 = vld [vmem:[%s254 + $0xc] sm:$0xf]
      %v259 = vld [vmem:[%s254 + $0x14] sm:$0xf]
      %v260 = vld [vmem:[%s254 + $0x18] sm:$0xf]
      %v261 = vld [vmem:[%s254 + $0x1c] sm:$0xf]
      %v262 = vld [vmem:[%s254 + $0x20] sm:$0xf]
      %v263 = vld [vmem:[%s254 + $0x28] sm:$0xf]
      %v264 = vld [vmem:[%s254 + $0x2c] sm:$0xf]
      %v265 = vld [vmem:[%s254 + $0x30] sm:$0xf]
      %v266 = vld [vmem:[%s254 + $0x34] sm:$0xf]
      %v267 = vld [vmem:[%s254 + $0x3c] sm:$0xf]
      %v268 = vld [vmem:[%s254 + $0x40] sm:$0xf]
      %v269 = vld [vmem:[%s254 + $0x44] sm:$0xf]
      %v270 = vld [vmem:[%s254 + $0x48] sm:$0xf]
      %v271 = vld [vmem:[%s254 + $0x50] sm:$0xf]
      %v272 = vld [vmem:[%s254 + $0x54] sm:$0xf]
      %v273 = vld [vmem:[%s254 + $0x58] sm:$0xf]
      %v274 = vld [vmem:[%s254 + $0x5c] sm:$0xf]
      %v275 = vld [vmem:[%s1] sm:$0x3]
      %s276 = scalar_lea.vmem %s1, 12
      %v277 = vld [vmem:[%s276] sm:$0x3]
      %v278 = vld [vmem:[%s254 + $0x10] sm:$0x1]
      %v279 = vld [vmem:[%s254 + $0x24] sm:$0x1]
      %v280 = vld [vmem:[%s254 + $0x38] sm:$0x1]
      %v281 = vld [vmem:[%s254 + $0x4c] sm:$0x1]
      %v282 = vld [vmem:[%s254 + $0x60] sm:$0x1]
      %vm283 = vsmask.f32 3328
      %vm284 = vsmask.f32 7440
      %vm285 = vmor %vm283, %vm284
      %v287 = vshrl.u32 %v255, 16
      %v289 = vrot.slane %v287, 4
      %v290 = vshll.u32 %v255, 16
      %v292 = vrot.slane %v290, 5
      %v293 = vor.u32 %v289, %v292
      %v294 = vrot.slane %v293, 4
      %v296 = vshll.u32 %v256, 16
      %v298 = vrot.slane %v296, 5
      %v299 = vsel %vm285, %v294, %v298
      %v300 = vshrl.u32 %v256, 16
      %v302 = vrot.slane %v300, 4
      %v303 = vor.u32 %v302, %v298
      %v304 = vrot.slane %v303, 4
      %v306 = vshll.u32 %v257, 16
      %v308 = vrot.slane %v306, 5
      %v309 = vsel %vm285, %v304, %v308
      %v310 = vshrl.u32 %v257, 16
      %v312 = vrot.slane %v310, 4
      %v313 = vor.u32 %v312, %v308
      %v314 = vrot.slane %v313, 4
      %v316 = vshll.u32 %v258, 16
      %v318 = vrot.slane %v316, 5
      %v319 = vsel %vm285, %v314, %v318
      %v320 = vshrl.u32 %v258, 16
      %v322 = vrot.slane %v320, 4
      %v323 = vor.u32 %v322, %v318
      %v324 = vrot.slane %v323, 4
      %v326 = vshll.u32 %v278, 16
      %v328 = vrot.slane %v326, 5
      %v329 = vsel %vm285, %v324, %v328
      %v331 = vshrl.u32 %v259, 16
      %v333 = vrot.slane %v331, 4
      %v334 = vshll.u32 %v259, 16
      %v336 = vrot.slane %v334, 5
      %v337 = vor.u32 %v333, %v336
      %v338 = vrot.slane %v337, 4
      %v340 = vshll.u32 %v260, 16
      %v342 = vrot.slane %v340, 5
      %v343 = vsel %vm285, %v338, %v342
      %v344 = vshrl.u32 %v260, 16
      %v346 = vrot.slane %v344, 4
      %v347 = vor.u32 %v346, %v342
      %v348 = vrot.slane %v347, 4
      %v350 = vshll.u32 %v261, 16
      %v352 = vrot.slane %v350, 5
      %v353 = vsel %vm285, %v348, %v352
      %v354 = vshrl.u32 %v261, 16
      %v356 = vrot.slane %v354, 4
      %v357 = vor.u32 %v356, %v352
      %v358 = vrot.slane %v357, 4
      %v360 = vshll.u32 %v262, 16
      %v362 = vrot.slane %v360, 5
      %v363 = vsel %vm285, %v358, %v362
      %v364 = vshrl.u32 %v262, 16
      %v366 = vrot.slane %v364, 4
      %v367 = vor.u32 %v366, %v362
      %v368 = vrot.slane %v367, 4
      %v370 = vshll.u32 %v279, 16
      %v372 = vrot.slane %v370, 5
      %v373 = vsel %vm285, %v368, %v372
      %v375 = vshrl.u32 %v263, 16
      %v377 = vrot.slane %v375, 4
      %v378 = vshll.u32 %v263, 16
      %v380 = vrot.slane %v378, 5
      %v381 = vor.u32 %v377, %v380
      %v382 = vrot.slane %v381, 4
      %v384 = vshll.u32 %v264, 16
      %v386 = vrot.slane %v384, 5
      %v387 = vsel %vm285, %v382, %v386
      %v388 = vshrl.u32 %v264, 16
      %v390 = vrot.slane %v388, 4
      %v391 = vor.u32 %v390, %v386
      %v392 = vrot.slane %v391, 4
      %v394 = vshll.u32 %v265, 16
      %v396 = vrot.slane %v394, 5
      %v397 = vsel %vm285, %v392, %v396
      %v398 = vshrl.u32 %v265, 16
      %v400 = vrot.slane %v398, 4
      %v401 = vor.u32 %v400, %v396
      %v402 = vrot.slane %v401, 4
      %v404 = vshll.u32 %v266, 16
      %v406 = vrot.slane %v404, 5
      %v407 = vsel %vm285, %v402, %v406
      %v408 = vshrl.u32 %v266, 16
      %v410 = vrot.slane %v408, 4
      %v411 = vor.u32 %v410, %v406
      %v412 = vrot.slane %v411, 4
      %v414 = vshll.u32 %v280, 16
      %v416 = vrot.slane %v414, 5
      %v417 = vsel %vm285, %v412, %v416
      %v419 = vshrl.u32 %v267, 16
      %v421 = vrot.slane %v419, 4
      %v422 = vshll.u32 %v267, 16
      %v424 = vrot.slane %v422, 5
      %v425 = vor.u32 %v421, %v424
      %v426 = vrot.slane %v425, 4
      %v428 = vshll.u32 %v268, 16
      %v430 = vrot.slane %v428, 5
      %v431 = vsel %vm285, %v426, %v430
      %v432 = vshrl.u32 %v268, 16
      %v434 = vrot.slane %v432, 4
      %v435 = vor.u32 %v434, %v430
      %v436 = vrot.slane %v435, 4
      %v438 = vshll.u32 %v269, 16
      %v440 = vrot.slane %v438, 5
      %v441 = vsel %vm285, %v436, %v440
      %v442 = vshrl.u32 %v269, 16
      %v444 = vrot.slane %v442, 4
      %v445 = vor.u32 %v444, %v440
      %v446 = vrot.slane %v445, 4
      %v448 = vshll.u32 %v270, 16
      %v450 = vrot.slane %v448, 5
      %v451 = vsel %vm285, %v446, %v450
      %v452 = vshrl.u32 %v270, 16
      %v454 = vrot.slane %v452, 4
      %v455 = vor.u32 %v454, %v450
      %v456 = vrot.slane %v455, 4
      %v458 = vshll.u32 %v281, 16
      %v460 = vrot.slane %v458, 5
      %v461 = vsel %vm285, %v456, %v460
      %v463 = vshrl.u32 %v271, 16
      %v465 = vrot.slane %v463, 4
      %v466 = vshll.u32 %v271, 16
      %v468 = vrot.slane %v466, 5
      %v469 = vor.u32 %v465, %v468
      %v470 = vrot.slane %v469, 4
      %v472 = vshll.u32 %v272, 16
      %v474 = vrot.slane %v472, 5
      %v475 = vsel %vm285, %v470, %v474
      %v476 = vshrl.u32 %v272, 16
      %v478 = vrot.slane %v476, 4
      %v479 = vor.u32 %v478, %v474
      %v480 = vrot.slane %v479, 4
      %v482 = vshll.u32 %v273, 16
      %v484 = vrot.slane %v482, 5
      %v485 = vsel %vm285, %v480, %v484
      %v486 = vshrl.u32 %v273, 16
      %v488 = vrot.slane %v486, 4
      %v489 = vor.u32 %v488, %v484
      %v490 = vrot.slane %v489, 4
      %v492 = vshll.u32 %v274, 16
      %v494 = vrot.slane %v492, 5
      %v495 = vsel %vm285, %v490, %v494
      %v496 = vshrl.u32 %v274, 16
      %v498 = vrot.slane %v496, 4
      %v499 = vor.u32 %v498, %v494
      %v500 = vrot.slane %v499, 4
      %v502 = vshll.u32 %v282, 16
      %v504 = vrot.slane %v502, 5
      %v505 = vsel %vm285, %v500, %v504
      %s506 = scalar_lea.vmem %s1, 2
      %v507 = vld [vmem:[%s506] sm:$0x3]
      %v508 = vunpack.c.l.b16 %v299
      %v509 = vunpack.c.l.b16 %v309
      %v510 = vunpack.c.l.b16 %v319
      %v511 = vunpack.c.l.b16 %v329
      %v512 = vunpack.c.l.b16 %v343
      %v513 = vunpack.c.l.b16 %v353
      %v514 = vunpack.c.l.b16 %v363
      %v515 = vunpack.c.l.b16 %v373
      %v516 = vunpack.c.l.b16 %v387
      %v517 = vunpack.c.l.b16 %v397
      %v518 = vunpack.c.l.b16 %v407
      %v519 = vunpack.c.l.b16 %v417
      %v520 = vunpack.c.l.b16 %v431
      %v521 = vunpack.c.l.b16 %v441
      %v522 = vunpack.c.l.b16 %v451
      %v523 = vunpack.c.l.b16 %v461
      %v524 = vunpack.c.l.b16 %v475
      %v525 = vunpack.c.l.b16 %v485
      %v526 = vunpack.c.l.b16 %v495
      %v527 = vunpack.c.l.b16 %v505
      %v528 = vpack.c.b16 %v509, %v508
      %v529 = vpack.c.b16 %v511, %v510
      %v530 = vpack.c.b16 %v513, %v512
      %v531 = vpack.c.b16 %v515, %v514
      %v532 = vpack.c.b16 %v517, %v516
      %v533 = vpack.c.b16 %v519, %v518
      %v534 = vpack.c.b16 %v521, %v520
      %v535 = vpack.c.b16 %v523, %v522
      %v536 = vpack.c.b16 %v525, %v524
      %v537 = vpack.c.b16 %v527, %v526
      %vm538 = vcmask 31744
      %v540 = vsel %vm538, %v528, 0
      %v543 = vsel %vm538, %v529, 0
      %v546 = vsel %vm538, %v530, 0
      %v549 = vsel %vm538, %v531, 0
      %v552 = vsel %vm538, %v532, 0
      %v555 = vsel %vm538, %v533, 0
      %v558 = vsel %vm538, %v534, 0
      %v561 = vsel %vm538, %v535, 0
      %v564 = vsel %vm538, %v536, 0
      %v567 = vsel %vm538, %v537, 0
      %vm569 = vcmask 1041408
      %v571 = vsel %vm569, %v507, 0
      %573 = vmatpush.bf16.msra.mxu0 0
      %574 = vmatpush.bf16.msra.mxu0 0
      %575 = vmatpush.bf16.msra.mxu0 0
      %576 = vmatpush.bf16.msra.mxu0 0
      %577 = vmatpush.bf16.msra.mxu0 0
      %578 = vmatpush.bf16.msra.mxu0 0
      %579 = vmatpush.bf16.msra.mxu0 0
      %580 = vmatpush.bf16.msra.mxu0 %v571
      %581 = vmatmul.bf16.gmra.mxu0 %v540
      %v582 = vpop.f32.mrf.mxu0
      %v583 = vadd.f32 0.0, %v582
      %v584 = vpop.f32.mrf.mxu0
      %v585 = vadd.f32 0.0, %v584
      %586 = vmatmul.bf16.gmra.mxu0 %v543
      %v587 = vpop.f32.mrf.mxu0
      %v588 = vadd.f32 0.0, %v587
      %v589 = vpop.f32.mrf.mxu0
      %v590 = vadd.f32 0.0, %v589
      %591 = vmatmul.bf16.gmra.mxu0 %v546
      %v592 = vpop.f32.mrf.mxu0
      %v593 = vadd.f32 0.0, %v592
      %v594 = vpop.f32.mrf.mxu0
      %v595 = vadd.f32 0.0, %v594
      %596 = vmatmul.bf16.gmra.mxu0 %v549
      %v597 = vpop.f32.mrf.mxu0
      %v598 = vadd.f32 0.0, %v597
      %v599 = vpop.f32.mrf.mxu0
      %v600 = vadd.f32 0.0, %v599
      %601 = vmatmul.bf16.gmra.mxu0 %v552
      %v602 = vpop.f32.mrf.mxu0
      %v603 = vadd.f32 0.0, %v602
      %v604 = vpop.f32.mrf.mxu0
      %v605 = vadd.f32 0.0, %v604
      %606 = vmatmul.bf16.gmra.mxu0 %v555
      %v607 = vpop.f32.mrf.mxu0
      %v608 = vadd.f32 0.0, %v607
      %v609 = vpop.f32.mrf.mxu0
      %v610 = vadd.f32 0.0, %v609
      %611 = vmatmul.bf16.gmra.mxu0 %v558
      %v612 = vpop.f32.mrf.mxu0
      %v613 = vadd.f32 0.0, %v612
      %v614 = vpop.f32.mrf.mxu0
      %v615 = vadd.f32 0.0, %v614
      %616 = vmatmul.bf16.gmra.mxu0 %v561
      %v617 = vpop.f32.mrf.mxu0
      %v618 = vadd.f32 0.0, %v617
      %v619 = vpop.f32.mrf.mxu0
      %v620 = vadd.f32 0.0, %v619
      %621 = vmatmul.bf16.gmra.mxu0 %v564
      %v622 = vpop.f32.mrf.mxu0
      %v623 = vadd.f32 0.0, %v622
      %v624 = vpop.f32.mrf.mxu0
      %v625 = vadd.f32 0.0, %v624
      %626 = vmatmul.bf16.gmra.mxu0 %v567
      %v627 = vpop.f32.mrf.mxu0
      %v628 = vadd.f32 0.0, %v627
      %v629 = vpop.f32.mrf.mxu0
      %v630 = vadd.f32 0.0, %v629
      %631 = vdwg.mxu0
      %v652 = vunpack.c.l.b16 %v255
      %v653 = vunpack.c.l.b16 %v256
      %v654 = vunpack.c.l.b16 %v257
      %v655 = vunpack.c.l.b16 %v258
      %v656 = vunpack.c.l.b16 %v259
      %v657 = vunpack.c.l.b16 %v260
      %v658 = vunpack.c.l.b16 %v261
      %v659 = vunpack.c.l.b16 %v262
      %v660 = vunpack.c.l.b16 %v263
      %v661 = vunpack.c.l.b16 %v264
      %v662 = vunpack.c.l.b16 %v265
      %v663 = vunpack.c.l.b16 %v266
      %v664 = vunpack.c.l.b16 %v267
      %v665 = vunpack.c.l.b16 %v268
      %v666 = vunpack.c.l.b16 %v269
      %v667 = vunpack.c.l.b16 %v270
      %v668 = vunpack.c.l.b16 %v271
      %v669 = vunpack.c.l.b16 %v272
      %v670 = vunpack.c.l.b16 %v273
      %v671 = vunpack.c.l.b16 %v274
      %v672 = vpack.c.b16 %v653, %v652
      %v673 = vpack.c.b16 %v655, %v654
      %v674 = vpack.c.b16 %v657, %v656
      %v675 = vpack.c.b16 %v659, %v658
      %v676 = vpack.c.b16 %v661, %v660
      %v677 = vpack.c.b16 %v663, %v662
      %v678 = vpack.c.b16 %v665, %v664
      %v679 = vpack.c.b16 %v667, %v666
      %v680 = vpack.c.b16 %v669, %v668
      %v681 = vpack.c.b16 %v671, %v670
      %v683 = vsel %vm538, %v672, 0
      %v686 = vsel %vm538, %v673, 0
      %v689 = vsel %vm538, %v674, 0
      %v692 = vsel %vm538, %v675, 0
      %v695 = vsel %vm538, %v676, 0
      %v698 = vsel %vm538, %v677, 0
      %v701 = vsel %vm538, %v678, 0
      %v704 = vsel %vm538, %v679, 0
      %v707 = vsel %vm538, %v680, 0
      %v710 = vsel %vm538, %v681, 0
      %v713 = vsel %vm569, %v275, 0
      %715 = vmatpush.bf16.msra.mxu0 0
      %716 = vmatpush.bf16.msra.mxu0 0
      %717 = vmatpush.bf16.msra.mxu0 0
      %718 = vmatpush.bf16.msra.mxu0 0
      %719 = vmatpush.bf16.msra.mxu0 0
      %720 = vmatpush.bf16.msra.mxu0 0
      %721 = vmatpush.bf16.msra.mxu0 0
      %722 = vmatpush.bf16.msra.mxu0 %v713
      %723 = vmatmul.bf16.gmra.mxu0 %v683
      %v724 = vpop.f32.mrf.mxu0
      %v725 = vadd.f32 %v583, %v724
      %v726 = vpop.f32.mrf.mxu0
      %v727 = vadd.f32 %v585, %v726
      %728 = vmatmul.bf16.gmra.mxu0 %v686
      %v729 = vpop.f32.mrf.mxu0
      %v730 = vadd.f32 %v588, %v729
      %v731 = vpop.f32.mrf.mxu0
      %v732 = vadd.f32 %v590, %v731
      %733 = vmatmul.bf16.gmra.mxu0 %v689
      %v734 = vpop.f32.mrf.mxu0
      %v735 = vadd.f32 %v593, %v734
      %v736 = vpop.f32.mrf.mxu0
      %v737 = vadd.f32 %v595, %v736
      %738 = vmatmul.bf16.gmra.mxu0 %v692
      %v739 = vpop.f32.mrf.mxu0
      %v740 = vadd.f32 %v598, %v739
      %v741 = vpop.f32.mrf.mxu0
      %v742 = vadd.f32 %v600, %v741
      %743 = vmatmul.bf16.gmra.mxu0 %v695
      %v744 = vpop.f32.mrf.mxu0
      %v745 = vadd.f32 %v603, %v744
      %v746 = vpop.f32.mrf.mxu0
      %v747 = vadd.f32 %v605, %v746
      %748 = vmatmul.bf16.gmra.mxu0 %v698
      %v749 = vpop.f32.mrf.mxu0
      %v750 = vadd.f32 %v608, %v749
      %v751 = vpop.f32.mrf.mxu0
      %v752 = vadd.f32 %v610, %v751
      %753 = vmatmul.bf16.gmra.mxu0 %v701
      %v754 = vpop.f32.mrf.mxu0
      %v755 = vadd.f32 %v613, %v754
      %v756 = vpop.f32.mrf.mxu0
      %v757 = vadd.f32 %v615, %v756
      %758 = vmatmul.bf16.gmra.mxu0 %v704
      %v759 = vpop.f32.mrf.mxu0
      %v760 = vadd.f32 %v618, %v759
      %v761 = vpop.f32.mrf.mxu0
      %v762 = vadd.f32 %v620, %v761
      %763 = vmatmul.bf16.gmra.mxu0 %v707
      %v764 = vpop.f32.mrf.mxu0
      %v765 = vadd.f32 %v623, %v764
      %v766 = vpop.f32.mrf.mxu0
      %v767 = vadd.f32 %v625, %v766
      %768 = vmatmul.bf16.gmra.mxu0 %v710
      %v769 = vpop.f32.mrf.mxu0
      %v770 = vadd.f32 %v628, %v769
      %v771 = vpop.f32.mrf.mxu0
      %v772 = vadd.f32 %v630, %v771
      %773 = vdwg.mxu0
      %s774 = scalar_lea.vmem %s1, 14
      %v775 = vld [vmem:[%s774] sm:$0x3]
      %v777 = vsel %vm569, %v775, 0
      %779 = vmatpush.bf16.msra.mxu0 0
      %780 = vmatpush.bf16.msra.mxu0 0
      %781 = vmatpush.bf16.msra.mxu0 0
      %782 = vmatpush.bf16.msra.mxu0 0
      %783 = vmatpush.bf16.msra.mxu0 0
      %784 = vmatpush.bf16.msra.mxu0 0
      %785 = vmatpush.bf16.msra.mxu0 0
      %786 = vmatpush.bf16.msra.mxu0 %v777
      %787 = vmatmul.bf16.gmra.mxu0 %v540
      %v788 = vpop.f32.mrf.mxu0
      %v789 = vadd.f32 0.0, %v788
      %v790 = vpop.f32.mrf.mxu0
      %v791 = vadd.f32 0.0, %v790
      %792 = vmatmul.bf16.gmra.mxu0 %v543
      %v793 = vpop.f32.mrf.mxu0
      %v794 = vadd.f32 0.0, %v793
      %v795 = vpop.f32.mrf.mxu0
      %v796 = vadd.f32 0.0, %v795
      %797 = vmatmul.bf16.gmra.mxu0 %v546
      %v798 = vpop.f32.mrf.mxu0
      %v799 = vadd.f32 0.0, %v798
      %v800 = vpop.f32.mrf.mxu0
      %v801 = vadd.f32 0.0, %v800
      %802 = vmatmul.bf16.gmra.mxu0 %v549
      %v803 = vpop.f32.mrf.mxu0
      %v804 = vadd.f32 0.0, %v803
      %v805 = vpop.f32.mrf.mxu0
      %v806 = vadd.f32 0.0, %v805
      %807 = vmatmul.bf16.gmra.mxu0 %v552
      %v808 = vpop.f32.mrf.mxu0
      %v809 = vadd.f32 0.0, %v808
      %v810 = vpop.f32.mrf.mxu0
      %v811 = vadd.f32 0.0, %v810
      %812 = vmatmul.bf16.gmra.mxu0 %v555
      %v813 = vpop.f32.mrf.mxu0
      %v814 = vadd.f32 0.0, %v813
      %v815 = vpop.f32.mrf.mxu0
      %v816 = vadd.f32 0.0, %v815
      %817 = vmatmul.bf16.gmra.mxu0 %v558
      %v818 = vpop.f32.mrf.mxu0
      %v819 = vadd.f32 0.0, %v818
      %v820 = vpop.f32.mrf.mxu0
      %v821 = vadd.f32 0.0, %v820
      %822 = vmatmul.bf16.gmra.mxu0 %v561
      %v823 = vpop.f32.mrf.mxu0
      %v824 = vadd.f32 0.0, %v823
      %v825 = vpop.f32.mrf.mxu0
      %v826 = vadd.f32 0.0, %v825
      %827 = vmatmul.bf16.gmra.mxu0 %v564
      %v828 = vpop.f32.mrf.mxu0
      %v829 = vadd.f32 0.0, %v828
      %v830 = vpop.f32.mrf.mxu0
      %v831 = vadd.f32 0.0, %v830
      %832 = vmatmul.bf16.gmra.mxu0 %v567
      %v833 = vpop.f32.mrf.mxu0
      %v834 = vadd.f32 0.0, %v833
      %v835 = vpop.f32.mrf.mxu0
      %v836 = vadd.f32 0.0, %v835
      %837 = vdwg.mxu0
      %v839 = vsel %vm569, %v277, 0
      %841 = vmatpush.bf16.msra.mxu0 0
      %842 = vmatpush.bf16.msra.mxu0 0
      %843 = vmatpush.bf16.msra.mxu0 0
      %844 = vmatpush.bf16.msra.mxu0 0
      %845 = vmatpush.bf16.msra.mxu0 0
      %846 = vmatpush.bf16.msra.mxu0 0
      %847 = vmatpush.bf16.msra.mxu0 0
      %848 = vmatpush.bf16.msra.mxu0 %v839
      %849 = vmatmul.bf16.gmra.mxu0 %v683
      %v850 = vpop.f32.mrf.mxu0
      %v851 = vadd.f32 %v789, %v850
      %v852 = vpop.f32.mrf.mxu0
      %v853 = vadd.f32 %v791, %v852
      %854 = vmatmul.bf16.gmra.mxu0 %v686
      %v855 = vpop.f32.mrf.mxu0
      %v856 = vadd.f32 %v794, %v855
      %v857 = vpop.f32.mrf.mxu0
      %v858 = vadd.f32 %v796, %v857
      %859 = vmatmul.bf16.gmra.mxu0 %v689
      %v860 = vpop.f32.mrf.mxu0
      %v861 = vadd.f32 %v799, %v860
      %v862 = vpop.f32.mrf.mxu0
      %v863 = vadd.f32 %v801, %v862
      %864 = vmatmul.bf16.gmra.mxu0 %v692
      %v865 = vpop.f32.mrf.mxu0
      %v866 = vadd.f32 %v804, %v865
      %v867 = vpop.f32.mrf.mxu0
      %v868 = vadd.f32 %v806, %v867
      %869 = vmatmul.bf16.gmra.mxu0 %v695
      %v870 = vpop.f32.mrf.mxu0
      %v871 = vadd.f32 %v809, %v870
      %v872 = vpop.f32.mrf.mxu0
      %v873 = vadd.f32 %v811, %v872
      %874 = vmatmul.bf16.gmra.mxu0 %v698
      %v875 = vpop.f32.mrf.mxu0
      %v876 = vadd.f32 %v814, %v875
      %v877 = vpop.f32.mrf.mxu0
      %v878 = vadd.f32 %v816, %v877
      %879 = vmatmul.bf16.gmra.mxu0 %v701
      %v880 = vpop.f32.mrf.mxu0
      %v881 = vadd.f32 %v819, %v880
      %v882 = vpop.f32.mrf.mxu0
      %v883 = vadd.f32 %v821, %v882
      %884 = vmatmul.bf16.gmra.mxu0 %v704
      %v885 = vpop.f32.mrf.mxu0
      %v886 = vadd.f32 %v824, %v885
      %v887 = vpop.f32.mrf.mxu0
      %v888 = vadd.f32 %v826, %v887
      %889 = vmatmul.bf16.gmra.mxu0 %v707
      %v890 = vpop.f32.mrf.mxu0
      %v891 = vadd.f32 %v829, %v890
      %v892 = vpop.f32.mrf.mxu0
      %v893 = vadd.f32 %v831, %v892
      %894 = vmatmul.bf16.gmra.mxu0 %v710
      %v895 = vpop.f32.mrf.mxu0
      %v896 = vadd.f32 %v834, %v895
      %v897 = vpop.f32.mrf.mxu0
      %v898 = vadd.f32 %v836, %v897
      %899 = vdwg.mxu0
      %v900 = vld [vmem:[%s254] sm:$0xe]
      %v901 = vld [vmem:[%s254 + $0x14] sm:$0xe]
      %v902 = vld [vmem:[%s254 + $0x28] sm:$0xe]
      %v903 = vld [vmem:[%s254 + $0x3c] sm:$0xe]
      %v904 = vld [vmem:[%s254 + $0x50] sm:$0xe]
      %vm915 = vcmask 1042432
      %vm916 = vcmask 1046532
      %vm917 = vmor %vm915, %vm916
      %v918 = vrot.slane %v900, 5
      %v919 = vrot.slane %v918, 4
      %v920 = vrot.slane %v256, 5
      %v921 = vsel %vm917, %v919, %v920
      %v922 = vrot.slane %v920, 4
      %v923 = vrot.slane %v257, 5
      %v924 = vsel %vm917, %v922, %v923
      %v925 = vrot.slane %v923, 4
      %v926 = vrot.slane %v258, 5
      %v927 = vsel %vm917, %v925, %v926
      %v928 = vrot.slane %v926, 4
      %v929 = vrot.slane %v278, 5
      %v930 = vsel %vm917, %v928, %v929
      %v931 = vrot.slane %v901, 5
      %v932 = vrot.slane %v931, 4
      %v933 = vrot.slane %v260, 5
      %v934 = vsel %vm917, %v932, %v933
      %v935 = vrot.slane %v933, 4
      %v936 = vrot.slane %v261, 5
      %v937 = vsel %vm917, %v935, %v936
      %v938 = vrot.slane %v936, 4
      %v939 = vrot.slane %v262, 5
      %v940 = vsel %vm917, %v938, %v939
      %v941 = vrot.slane %v939, 4
      %v942 = vrot.slane %v279, 5
      %v943 = vsel %vm917, %v941, %v942
      %v944 = vrot.slane %v902, 5
      %v945 = vrot.slane %v944, 4
      %v946 = vrot.slane %v264, 5
      %v947 = vsel %vm917, %v945, %v946
      %v948 = vrot.slane %v946, 4
      %v949 = vrot.slane %v265, 5
      %v950 = vsel %vm917, %v948, %v949
      %v951 = vrot.slane %v949, 4
      %v952 = vrot.slane %v266, 5
      %v953 = vsel %vm917, %v951, %v952
      %v954 = vrot.slane %v952, 4
      %v955 = vrot.slane %v280, 5
      %v956 = vsel %vm917, %v954, %v955
      %v957 = vrot.slane %v903, 5
      %v958 = vrot.slane %v957, 4
      %v959 = vrot.slane %v268, 5
      %v960 = vsel %vm917, %v958, %v959
      %v961 = vrot.slane %v959, 4
      %v962 = vrot.slane %v269, 5
      %v963 = vsel %vm917, %v961, %v962
      %v964 = vrot.slane %v962, 4
      %v965 = vrot.slane %v270, 5
      %v966 = vsel %vm917, %v964, %v965
      %v967 = vrot.slane %v965, 4
      %v968 = vrot.slane %v281, 5
      %v969 = vsel %vm917, %v967, %v968
      %v970 = vrot.slane %v904, 5
      %v971 = vrot.slane %v970, 4
      %v972 = vrot.slane %v272, 5
      %v973 = vsel %vm917, %v971, %v972
      %v974 = vrot.slane %v972, 4
      %v975 = vrot.slane %v273, 5
      %v976 = vsel %vm917, %v974, %v975
      %v977 = vrot.slane %v975, 4
      %v978 = vrot.slane %v274, 5
      %v979 = vsel %vm917, %v977, %v978
      %v980 = vrot.slane %v978, 4
      %v981 = vrot.slane %v282, 5
      %v982 = vsel %vm917, %v980, %v981
      %s983 = scalar_lea.vmem %s1, 4
      %v984 = vld [vmem:[%s983] sm:$0x3]
      %v985 = vunpack.c.l.b16 %v921
      %v986 = vunpack.c.l.b16 %v924
      %v987 = vunpack.c.l.b16 %v927
      %v988 = vunpack.c.l.b16 %v930
      %v989 = vunpack.c.l.b16 %v934
      %v990 = vunpack.c.l.b16 %v937
      %v991 = vunpack.c.l.b16 %v940
      %v992 = vunpack.c.l.b16 %v943
      %v993 = vunpack.c.l.b16 %v947
      %v994 = vunpack.c.l.b16 %v950
      %v995 = vunpack.c.l.b16 %v953
      %v996 = vunpack.c.l.b16 %v956
      %v997 = vunpack.c.l.b16 %v960
      %v998 = vunpack.c.l.b16 %v963
      %v999 = vunpack.c.l.b16 %v966
      %v1000 = vunpack.c.l.b16 %v969
      %v1001 = vunpack.c.l.b16 %v973
      %v1002 = vunpack.c.l.b16 %v976
      %v1003 = vunpack.c.l.b16 %v979
      %v1004 = vunpack.c.l.b16 %v982
      %v1005 = vpack.c.b16 %v986, %v985
      %v1006 = vpack.c.b16 %v988, %v987
      %v1007 = vpack.c.b16 %v990, %v989
      %v1008 = vpack.c.b16 %v992, %v991
      %v1009 = vpack.c.b16 %v994, %v993
      %v1010 = vpack.c.b16 %v996, %v995
      %v1011 = vpack.c.b16 %v998, %v997
      %v1012 = vpack.c.b16 %v1000, %v999
      %v1013 = vpack.c.b16 %v1002, %v1001
      %v1014 = vpack.c.b16 %v1004, %v1003
      %v1016 = vsel %vm538, %v1005, 0
      %v1019 = vsel %vm538, %v1006, 0
      %v1022 = vsel %vm538, %v1007, 0
      %v1025 = vsel %vm538, %v1008, 0
      %v1028 = vsel %vm538, %v1009, 0
      %v1031 = vsel %vm538, %v1010, 0
      %v1034 = vsel %vm538, %v1011, 0
      %v1037 = vsel %vm538, %v1012, 0
      %v1040 = vsel %vm538, %v1013, 0
      %v1043 = vsel %vm538, %v1014, 0
      %v1046 = vsel %vm569, %v984, 0
      %1048 = vmatpush.bf16.msra.mxu0 0
      %1049 = vmatpush.bf16.msra.mxu0 0
      %1050 = vmatpush.bf16.msra.mxu0 0
      %1051 = vmatpush.bf16.msra.mxu0 0
      %1052 = vmatpush.bf16.msra.mxu0 0
      %1053 = vmatpush.bf16.msra.mxu0 0
      %1054 = vmatpush.bf16.msra.mxu0 0
      %1055 = vmatpush.bf16.msra.mxu0 %v1046
      %1056 = vmatmul.bf16.gmra.mxu0 %v1016
      %v1057 = vpop.f32.mrf.mxu0
      %v1058 = vadd.f32 0.0, %v1057
      %v1059 = vpop.f32.mrf.mxu0
      %v1060 = vadd.f32 0.0, %v1059
      %1061 = vmatmul.bf16.gmra.mxu0 %v1019
      %v1062 = vpop.f32.mrf.mxu0
      %v1063 = vadd.f32 0.0, %v1062
      %v1064 = vpop.f32.mrf.mxu0
      %v1065 = vadd.f32 0.0, %v1064
      %1066 = vmatmul.bf16.gmra.mxu0 %v1022
      %v1067 = vpop.f32.mrf.mxu0
      %v1068 = vadd.f32 0.0, %v1067
      %v1069 = vpop.f32.mrf.mxu0
      %v1070 = vadd.f32 0.0, %v1069
      %1071 = vmatmul.bf16.gmra.mxu0 %v1025
      %v1072 = vpop.f32.mrf.mxu0
      %v1073 = vadd.f32 0.0, %v1072
      %v1074 = vpop.f32.mrf.mxu0
      %v1075 = vadd.f32 0.0, %v1074
      %1076 = vmatmul.bf16.gmra.mxu0 %v1028
      %v1077 = vpop.f32.mrf.mxu0
      %v1078 = vadd.f32 0.0, %v1077
      %v1079 = vpop.f32.mrf.mxu0
      %v1080 = vadd.f32 0.0, %v1079
      %1081 = vmatmul.bf16.gmra.mxu0 %v1031
      %v1082 = vpop.f32.mrf.mxu0
      %v1083 = vadd.f32 0.0, %v1082
      %v1084 = vpop.f32.mrf.mxu0
      %v1085 = vadd.f32 0.0, %v1084
      %1086 = vmatmul.bf16.gmra.mxu0 %v1034
      %v1087 = vpop.f32.mrf.mxu0
      %v1088 = vadd.f32 0.0, %v1087
      %v1089 = vpop.f32.mrf.mxu0
      %v1090 = vadd.f32 0.0, %v1089
      %1091 = vmatmul.bf16.gmra.mxu0 %v1037
      %v1092 = vpop.f32.mrf.mxu0
      %v1093 = vadd.f32 0.0, %v1092
      %v1094 = vpop.f32.mrf.mxu0
      %v1095 = vadd.f32 0.0, %v1094
      %1096 = vmatmul.bf16.gmra.mxu0 %v1040
      %v1097 = vpop.f32.mrf.mxu0
      %v1098 = vadd.f32 0.0, %v1097
      %v1099 = vpop.f32.mrf.mxu0
      %v1100 = vadd.f32 0.0, %v1099
      %1101 = vmatmul.bf16.gmra.mxu0 %v1043
      %v1102 = vpop.f32.mrf.mxu0
      %v1103 = vadd.f32 0.0, %v1102
      %v1104 = vpop.f32.mrf.mxu0
      %v1105 = vadd.f32 0.0, %v1104
      %1106 = vdwg.mxu0
      %v1107 = vadd.f32 %v725, %v1058
      %v1108 = vadd.f32 %v727, %v1060
      %v1109 = vadd.f32 %v730, %v1063
      %v1110 = vadd.f32 %v732, %v1065
      %v1111 = vadd.f32 %v735, %v1068
      %v1112 = vadd.f32 %v737, %v1070
      %v1113 = vadd.f32 %v740, %v1073
      %v1114 = vadd.f32 %v742, %v1075
      %v1115 = vadd.f32 %v745, %v1078
      %v1116 = vadd.f32 %v747, %v1080
      %v1117 = vadd.f32 %v750, %v1083
      %v1118 = vadd.f32 %v752, %v1085
      %v1119 = vadd.f32 %v755, %v1088
      %v1120 = vadd.f32 %v757, %v1090
      %v1121 = vadd.f32 %v760, %v1093
      %v1122 = vadd.f32 %v762, %v1095
      %v1123 = vadd.f32 %v765, %v1098
      %v1124 = vadd.f32 %v767, %v1100
      %v1125 = vadd.f32 %v770, %v1103
      %v1126 = vadd.f32 %v772, %v1105
      %s1127 = scalar_lea.vmem %s1, 16
      %v1128 = vld [vmem:[%s1127] sm:$0x3]
      %v1130 = vsel %vm569, %v1128, 0
      %1132 = vmatpush.bf16.msra.mxu0 0
      %1133 = vmatpush.bf16.msra.mxu0 0
      %1134 = vmatpush.bf16.msra.mxu0 0
      %1135 = vmatpush.bf16.msra.mxu0 0
      %1136 = vmatpush.bf16.msra.mxu0 0
      %1137 = vmatpush.bf16.msra.mxu0 0
      %1138 = vmatpush.bf16.msra.mxu0 0
      %1139 = vmatpush.bf16.msra.mxu0 %v1130
      %1140 = vmatmul.bf16.gmra.mxu0 %v1016
      %v1141 = vpop.f32.mrf.mxu0
      %v1142 = vadd.f32 0.0, %v1141
      %v1143 = vpop.f32.mrf.mxu0
      %v1144 = vadd.f32 0.0, %v1143
      %1145 = vmatmul.bf16.gmra.mxu0 %v1019
      %v1146 = vpop.f32.mrf.mxu0
      %v1147 = vadd.f32 0.0, %v1146
      %v1148 = vpop.f32.mrf.mxu0
      %v1149 = vadd.f32 0.0, %v1148
      %1150 = vmatmul.bf16.gmra.mxu0 %v1022
      %v1151 = vpop.f32.mrf.mxu0
      %v1152 = vadd.f32 0.0, %v1151
      %v1153 = vpop.f32.mrf.mxu0
      %v1154 = vadd.f32 0.0, %v1153
      %1155 = vmatmul.bf16.gmra.mxu0 %v1025
      %v1156 = vpop.f32.mrf.mxu0
      %v1157 = vadd.f32 0.0, %v1156
      %v1158 = vpop.f32.mrf.mxu0
      %v1159 = vadd.f32 0.0, %v1158
      %1160 = vmatmul.bf16.gmra.mxu0 %v1028
      %v1161 = vpop.f32.mrf.mxu0
      %v1162 = vadd.f32 0.0, %v1161
      %v1163 = vpop.f32.mrf.mxu0
      %v1164 = vadd.f32 0.0, %v1163
      %1165 = vmatmul.bf16.gmra.mxu0 %v1031
      %v1166 = vpop.f32.mrf.mxu0
      %v1167 = vadd.f32 0.0, %v1166
      %v1168 = vpop.f32.mrf.mxu0
      %v1169 = vadd.f32 0.0, %v1168
      %1170 = vmatmul.bf16.gmra.mxu0 %v1034
      %v1171 = vpop.f32.mrf.mxu0
      %v1172 = vadd.f32 0.0, %v1171
      %v1173 = vpop.f32.mrf.mxu0
      %v1174 = vadd.f32 0.0, %v1173
      %1175 = vmatmul.bf16.gmra.mxu0 %v1037
      %v1176 = vpop.f32.mrf.mxu0
      %v1177 = vadd.f32 0.0, %v1176
      %v1178 = vpop.f32.mrf.mxu0
      %v1179 = vadd.f32 0.0, %v1178
      %1180 = vmatmul.bf16.gmra.mxu0 %v1040
      %v1181 = vpop.f32.mrf.mxu0
      %v1182 = vadd.f32 0.0, %v1181
      %v1183 = vpop.f32.mrf.mxu0
      %v1184 = vadd.f32 0.0, %v1183
      %1185 = vmatmul.bf16.gmra.mxu0 %v1043
      %v1186 = vpop.f32.mrf.mxu0
      %v1187 = vadd.f32 0.0, %v1186
      %v1188 = vpop.f32.mrf.mxu0
      %v1189 = vadd.f32 0.0, %v1188
      %1190 = vdwg.mxu0
      %v1191 = vadd.f32 %v851, %v1142
      %v1192 = vadd.f32 %v853, %v1144
      %v1193 = vadd.f32 %v856, %v1147
      %v1194 = vadd.f32 %v858, %v1149
      %v1195 = vadd.f32 %v861, %v1152
      %v1196 = vadd.f32 %v863, %v1154
      %v1197 = vadd.f32 %v866, %v1157
      %v1198 = vadd.f32 %v868, %v1159
      %v1199 = vadd.f32 %v871, %v1162
      %v1200 = vadd.f32 %v873, %v1164
      %v1201 = vadd.f32 %v876, %v1167
      %v1202 = vadd.f32 %v878, %v1169
      %v1203 = vadd.f32 %v881, %v1172
      %v1204 = vadd.f32 %v883, %v1174
      %v1205 = vadd.f32 %v886, %v1177
      %v1206 = vadd.f32 %v888, %v1179
      %v1207 = vadd.f32 %v891, %v1182
      %v1208 = vadd.f32 %v893, %v1184
      %v1209 = vadd.f32 %v896, %v1187
      %v1210 = vadd.f32 %v898, %v1189
      %s1211 = sadd.s32 %s251, 1
      %s1212 = smul.u32 %s1211, 5
      %s1213 = smul.addr %s1212, 4
      %s1214 = scalar_lea.vmem %s238, %s1213
      %v1215 = vld [vmem:[%s1214] sm:$0xf]
      %v1216 = vld [vmem:[%s1214 + $0x4] sm:$0xf]
      %v1217 = vld [vmem:[%s1214 + $0x8] sm:$0xf]
      %v1218 = vld [vmem:[%s1214 + $0xc] sm:$0xf]
      %v1219 = vld [vmem:[%s1214 + $0x14] sm:$0xf]
      %v1220 = vld [vmem:[%s1214 + $0x18] sm:$0xf]
      %v1221 = vld [vmem:[%s1214 + $0x1c] sm:$0xf]
      %v1222 = vld [vmem:[%s1214 + $0x20] sm:$0xf]
      %v1223 = vld [vmem:[%s1214 + $0x28] sm:$0xf]
      %v1224 = vld [vmem:[%s1214 + $0x2c] sm:$0xf]
      %v1225 = vld [vmem:[%s1214 + $0x30] sm:$0xf]
      %v1226 = vld [vmem:[%s1214 + $0x34] sm:$0xf]
      %v1227 = vld [vmem:[%s1214 + $0x3c] sm:$0xf]
      %v1228 = vld [vmem:[%s1214 + $0x40] sm:$0xf]
      %v1229 = vld [vmem:[%s1214 + $0x44] sm:$0xf]
      %v1230 = vld [vmem:[%s1214 + $0x48] sm:$0xf]
      %v1231 = vld [vmem:[%s1214 + $0x50] sm:$0xf]
      %v1232 = vld [vmem:[%s1214 + $0x54] sm:$0xf]
      %v1233 = vld [vmem:[%s1214 + $0x58] sm:$0xf]
      %v1234 = vld [vmem:[%s1214 + $0x5c] sm:$0xf]
      %s1235 = scalar_lea.vmem %s1, 6
      %v1236 = vld [vmem:[%s1235] sm:$0x3]
      %v1257 = vunpack.c.l.b16 %v1215
      %v1258 = vunpack.c.l.b16 %v1216
      %v1259 = vunpack.c.l.b16 %v1217
      %v1260 = vunpack.c.l.b16 %v1218
      %v1261 = vunpack.c.l.b16 %v1219
      %v1262 = vunpack.c.l.b16 %v1220
      %v1263 = vunpack.c.l.b16 %v1221
      %v1264 = vunpack.c.l.b16 %v1222
      %v1265 = vunpack.c.l.b16 %v1223
      %v1266 = vunpack.c.l.b16 %v1224
      %v1267 = vunpack.c.l.b16 %v1225
      %v1268 = vunpack.c.l.b16 %v1226
      %v1269 = vunpack.c.l.b16 %v1227
      %v1270 = vunpack.c.l.b16 %v1228
      %v1271 = vunpack.c.l.b16 %v1229
      %v1272 = vunpack.c.l.b16 %v1230
      %v1273 = vunpack.c.l.b16 %v1231
      %v1274 = vunpack.c.l.b16 %v1232
      %v1275 = vunpack.c.l.b16 %v1233
      %v1276 = vunpack.c.l.b16 %v1234
      %v1277 = vpack.c.b16 %v1258, %v1257
      %v1278 = vpack.c.b16 %v1260, %v1259
      %v1279 = vpack.c.b16 %v1262, %v1261
      %v1280 = vpack.c.b16 %v1264, %v1263
      %v1281 = vpack.c.b16 %v1266, %v1265
      %v1282 = vpack.c.b16 %v1268, %v1267
      %v1283 = vpack.c.b16 %v1270, %v1269
      %v1284 = vpack.c.b16 %v1272, %v1271
      %v1285 = vpack.c.b16 %v1274, %v1273
      %v1286 = vpack.c.b16 %v1276, %v1275
      %v1288 = vsel %vm538, %v1277, 0
      %v1291 = vsel %vm538, %v1278, 0
      %v1294 = vsel %vm538, %v1279, 0
      %v1297 = vsel %vm538, %v1280, 0
      %v1300 = vsel %vm538, %v1281, 0
      %v1303 = vsel %vm538, %v1282, 0
      %v1306 = vsel %vm538, %v1283, 0
      %v1309 = vsel %vm538, %v1284, 0
      %v1312 = vsel %vm538, %v1285, 0
      %v1315 = vsel %vm538, %v1286, 0
      %v1318 = vsel %vm569, %v1236, 0
      %1320 = vmatpush.bf16.msra.mxu0 0
      %1321 = vmatpush.bf16.msra.mxu0 0
      %1322 = vmatpush.bf16.msra.mxu0 0
      %1323 = vmatpush.bf16.msra.mxu0 0
      %1324 = vmatpush.bf16.msra.mxu0 0
      %1325 = vmatpush.bf16.msra.mxu0 0
      %1326 = vmatpush.bf16.msra.mxu0 0
      %1327 = vmatpush.bf16.msra.mxu0 %v1318
      %1328 = vmatmul.bf16.gmra.mxu0 %v1288
      %v1329 = vpop.f32.mrf.mxu0
      %v1330 = vadd.f32 0.0, %v1329
      %v1331 = vpop.f32.mrf.mxu0
      %v1332 = vadd.f32 0.0, %v1331
      %1333 = vmatmul.bf16.gmra.mxu0 %v1291
      %v1334 = vpop.f32.mrf.mxu0
      %v1335 = vadd.f32 0.0, %v1334
      %v1336 = vpop.f32.mrf.mxu0
      %v1337 = vadd.f32 0.0, %v1336
      %1338 = vmatmul.bf16.gmra.mxu0 %v1294
      %v1339 = vpop.f32.mrf.mxu0
      %v1340 = vadd.f32 0.0, %v1339
      %v1341 = vpop.f32.mrf.mxu0
      %v1342 = vadd.f32 0.0, %v1341
      %1343 = vmatmul.bf16.gmra.mxu0 %v1297
      %v1344 = vpop.f32.mrf.mxu0
      %v1345 = vadd.f32 0.0, %v1344
      %v1346 = vpop.f32.mrf.mxu0
      %v1347 = vadd.f32 0.0, %v1346
      %1348 = vmatmul.bf16.gmra.mxu0 %v1300
      %v1349 = vpop.f32.mrf.mxu0
      %v1350 = vadd.f32 0.0, %v1349
      %v1351 = vpop.f32.mrf.mxu0
      %v1352 = vadd.f32 0.0, %v1351
      %1353 = vmatmul.bf16.gmra.mxu0 %v1303
      %v1354 = vpop.f32.mrf.mxu0
      %v1355 = vadd.f32 0.0, %v1354
      %v1356 = vpop.f32.mrf.mxu0
      %v1357 = vadd.f32 0.0, %v1356
      %1358 = vmatmul.bf16.gmra.mxu0 %v1306
      %v1359 = vpop.f32.mrf.mxu0
      %v1360 = vadd.f32 0.0, %v1359
      %v1361 = vpop.f32.mrf.mxu0
      %v1362 = vadd.f32 0.0, %v1361
      %1363 = vmatmul.bf16.gmra.mxu0 %v1309
      %v1364 = vpop.f32.mrf.mxu0
      %v1365 = vadd.f32 0.0, %v1364
      %v1366 = vpop.f32.mrf.mxu0
      %v1367 = vadd.f32 0.0, %v1366
      %1368 = vmatmul.bf16.gmra.mxu0 %v1312
      %v1369 = vpop.f32.mrf.mxu0
      %v1370 = vadd.f32 0.0, %v1369
      %v1371 = vpop.f32.mrf.mxu0
      %v1372 = vadd.f32 0.0, %v1371
      %1373 = vmatmul.bf16.gmra.mxu0 %v1315
      %v1374 = vpop.f32.mrf.mxu0
      %v1375 = vadd.f32 0.0, %v1374
      %v1376 = vpop.f32.mrf.mxu0
      %v1377 = vadd.f32 0.0, %v1376
      %1378 = vdwg.mxu0
      %v1379 = vadd.f32 %v1107, %v1330
      %v1380 = vadd.f32 %v1108, %v1332
      %v1381 = vadd.f32 %v1109, %v1335
      %v1382 = vadd.f32 %v1110, %v1337
      %v1383 = vadd.f32 %v1111, %v1340
      %v1384 = vadd.f32 %v1112, %v1342
      %v1385 = vadd.f32 %v1113, %v1345
      %v1386 = vadd.f32 %v1114, %v1347
      %v1387 = vadd.f32 %v1115, %v1350
      %v1388 = vadd.f32 %v1116, %v1352
      %v1389 = vadd.f32 %v1117, %v1355
      %v1390 = vadd.f32 %v1118, %v1357
      %v1391 = vadd.f32 %v1119, %v1360
      %v1392 = vadd.f32 %v1120, %v1362
      %v1393 = vadd.f32 %v1121, %v1365
      %v1394 = vadd.f32 %v1122, %v1367
      %v1395 = vadd.f32 %v1123, %v1370
      %v1396 = vadd.f32 %v1124, %v1372
      %v1397 = vadd.f32 %v1125, %v1375
      %v1398 = vadd.f32 %v1126, %v1377
      %s1399 = scalar_lea.vmem %s1, 18
      %v1400 = vld [vmem:[%s1399] sm:$0x3]
      %v1402 = vsel %vm569, %v1400, 0
      %1404 = vmatpush.bf16.msra.mxu0 0
      %1405 = vmatpush.bf16.msra.mxu0 0
      %1406 = vmatpush.bf16.msra.mxu0 0
      %1407 = vmatpush.bf16.msra.mxu0 0
      %1408 = vmatpush.bf16.msra.mxu0 0
      %1409 = vmatpush.bf16.msra.mxu0 0
      %1410 = vmatpush.bf16.msra.mxu0 0
      %1411 = vmatpush.bf16.msra.mxu0 %v1402
      %1412 = vmatmul.bf16.gmra.mxu0 %v1288
      %v1413 = vpop.f32.mrf.mxu0
      %v1414 = vadd.f32 0.0, %v1413
      %v1415 = vpop.f32.mrf.mxu0
      %v1416 = vadd.f32 0.0, %v1415
      %1417 = vmatmul.bf16.gmra.mxu0 %v1291
      %v1418 = vpop.f32.mrf.mxu0
      %v1419 = vadd.f32 0.0, %v1418
      %v1420 = vpop.f32.mrf.mxu0
      %v1421 = vadd.f32 0.0, %v1420
      %1422 = vmatmul.bf16.gmra.mxu0 %v1294
      %v1423 = vpop.f32.mrf.mxu0
      %v1424 = vadd.f32 0.0, %v1423
      %v1425 = vpop.f32.mrf.mxu0
      %v1426 = vadd.f32 0.0, %v1425
      %1427 = vmatmul.bf16.gmra.mxu0 %v1297
      %v1428 = vpop.f32.mrf.mxu0
      %v1429 = vadd.f32 0.0, %v1428
      %v1430 = vpop.f32.mrf.mxu0
      %v1431 = vadd.f32 0.0, %v1430
      %1432 = vmatmul.bf16.gmra.mxu0 %v1300
      %v1433 = vpop.f32.mrf.mxu0
      %v1434 = vadd.f32 0.0, %v1433
      %v1435 = vpop.f32.mrf.mxu0
      %v1436 = vadd.f32 0.0, %v1435
      %1437 = vmatmul.bf16.gmra.mxu0 %v1303
      %v1438 = vpop.f32.mrf.mxu0
      %v1439 = vadd.f32 0.0, %v1438
      %v1440 = vpop.f32.mrf.mxu0
      %v1441 = vadd.f32 0.0, %v1440
      %1442 = vmatmul.bf16.gmra.mxu0 %v1306
      %v1443 = vpop.f32.mrf.mxu0
      %v1444 = vadd.f32 0.0, %v1443
      %v1445 = vpop.f32.mrf.mxu0
      %v1446 = vadd.f32 0.0, %v1445
      %1447 = vmatmul.bf16.gmra.mxu0 %v1309
      %v1448 = vpop.f32.mrf.mxu0
      %v1449 = vadd.f32 0.0, %v1448
      %v1450 = vpop.f32.mrf.mxu0
      %v1451 = vadd.f32 0.0, %v1450
      %1452 = vmatmul.bf16.gmra.mxu0 %v1312
      %v1453 = vpop.f32.mrf.mxu0
      %v1454 = vadd.f32 0.0, %v1453
      %v1455 = vpop.f32.mrf.mxu0
      %v1456 = vadd.f32 0.0, %v1455
      %1457 = vmatmul.bf16.gmra.mxu0 %v1315
      %v1458 = vpop.f32.mrf.mxu0
      %v1459 = vadd.f32 0.0, %v1458
      %v1460 = vpop.f32.mrf.mxu0
      %v1461 = vadd.f32 0.0, %v1460
      %1462 = vdwg.mxu0
      %v1463 = vadd.f32 %v1191, %v1414
      %v1464 = vadd.f32 %v1192, %v1416
      %v1465 = vadd.f32 %v1193, %v1419
      %v1466 = vadd.f32 %v1194, %v1421
      %v1467 = vadd.f32 %v1195, %v1424
      %v1468 = vadd.f32 %v1196, %v1426
      %v1469 = vadd.f32 %v1197, %v1429
      %v1470 = vadd.f32 %v1198, %v1431
      %v1471 = vadd.f32 %v1199, %v1434
      %v1472 = vadd.f32 %v1200, %v1436
      %v1473 = vadd.f32 %v1201, %v1439
      %v1474 = vadd.f32 %v1202, %v1441
      %v1475 = vadd.f32 %v1203, %v1444
      %v1476 = vadd.f32 %v1204, %v1446
      %v1477 = vadd.f32 %v1205, %v1449
      %v1478 = vadd.f32 %v1206, %v1451
      %v1479 = vadd.f32 %v1207, %v1454
      %v1480 = vadd.f32 %v1208, %v1456
      %v1481 = vadd.f32 %v1209, %v1459
      %v1482 = vadd.f32 %v1210, %v1461
      %v1483 = vld [vmem:[%s1214] sm:$0xf]
      %v1484 = vld [vmem:[%s1214 + $0x4] sm:$0xf]
      %v1485 = vld [vmem:[%s1214 + $0x8] sm:$0xf]
      %v1486 = vld [vmem:[%s1214 + $0xc] sm:$0xf]
      %v1487 = vld [vmem:[%s1214 + $0x10] sm:$0x1]
      %v1488 = vld [vmem:[%s1214 + $0x14] sm:$0xf]
      %v1489 = vld [vmem:[%s1214 + $0x18] sm:$0xf]
      %v1490 = vld [vmem:[%s1214 + $0x1c] sm:$0xf]
      %v1491 = vld [vmem:[%s1214 + $0x20] sm:$0xf]
      %v1492 = vld [vmem:[%s1214 + $0x24] sm:$0x1]
      %v1493 = vld [vmem:[%s1214 + $0x28] sm:$0xf]
      %v1494 = vld [vmem:[%s1214 + $0x2c] sm:$0xf]
      %v1495 = vld [vmem:[%s1214 + $0x30] sm:$0xf]
      %v1496 = vld [vmem:[%s1214 + $0x34] sm:$0xf]
      %v1497 = vld [vmem:[%s1214 + $0x38] sm:$0x1]
      %v1498 = vld [vmem:[%s1214 + $0x3c] sm:$0xf]
      %v1499 = vld [vmem:[%s1214 + $0x40] sm:$0xf]
      %v1500 = vld [vmem:[%s1214 + $0x44] sm:$0xf]
      %v1501 = vld [vmem:[%s1214 + $0x48] sm:$0xf]
      %v1502 = vld [vmem:[%s1214 + $0x4c] sm:$0x1]
      %v1503 = vld [vmem:[%s1214 + $0x50] sm:$0xf]
      %v1504 = vld [vmem:[%s1214 + $0x54] sm:$0xf]
      %v1505 = vld [vmem:[%s1214 + $0x58] sm:$0xf]
      %v1506 = vld [vmem:[%s1214 + $0x5c] sm:$0xf]
      %v1507 = vld [vmem:[%s1214 + $0x60] sm:$0x1]
      %v1509 = vshrl.u32 %v1483, 16
      %v1511 = vrot.slane %v1509, 4
      %v1512 = vshll.u32 %v1483, 16
      %v1514 = vrot.slane %v1512, 5
      %v1515 = vor.u32 %v1511, %v1514
      %v1516 = vrot.slane %v1515, 4
      %v1518 = vshll.u32 %v1484, 16
      %v1520 = vrot.slane %v1518, 5
      %v1521 = vsel %vm285, %v1516, %v1520
      %v1522 = vshrl.u32 %v1484, 16
      %v1524 = vrot.slane %v1522, 4
      %v1525 = vor.u32 %v1524, %v1520
      %v1526 = vrot.slane %v1525, 4
      %v1528 = vshll.u32 %v1485, 16
      %v1530 = vrot.slane %v1528, 5
      %v1531 = vsel %vm285, %v1526, %v1530
      %v1532 = vshrl.u32 %v1485, 16
      %v1534 = vrot.slane %v1532, 4
      %v1535 = vor.u32 %v1534, %v1530
      %v1536 = vrot.slane %v1535, 4
      %v1538 = vshll.u32 %v1486, 16
      %v1540 = vrot.slane %v1538, 5
      %v1541 = vsel %vm285, %v1536, %v1540
      %v1542 = vshrl.u32 %v1486, 16
      %v1544 = vrot.slane %v1542, 4
      %v1545 = vor.u32 %v1544, %v1540
      %v1546 = vrot.slane %v1545, 4
      %v1548 = vshll.u32 %v1487, 16
      %v1550 = vrot.slane %v1548, 5
      %v1551 = vsel %vm285, %v1546, %v1550
      %v1553 = vshrl.u32 %v1488, 16
      %v1555 = vrot.slane %v1553, 4
      %v1556 = vshll.u32 %v1488, 16
      %v1558 = vrot.slane %v1556, 5
      %v1559 = vor.u32 %v1555, %v1558
      %v1560 = vrot.slane %v1559, 4
      %v1562 = vshll.u32 %v1489, 16
      %v1564 = vrot.slane %v1562, 5
      %v1565 = vsel %vm285, %v1560, %v1564
      %v1566 = vshrl.u32 %v1489, 16
      %v1568 = vrot.slane %v1566, 4
      %v1569 = vor.u32 %v1568, %v1564
      %v1570 = vrot.slane %v1569, 4
      %v1572 = vshll.u32 %v1490, 16
      %v1574 = vrot.slane %v1572, 5
      %v1575 = vsel %vm285, %v1570, %v1574
      %v1576 = vshrl.u32 %v1490, 16
      %v1578 = vrot.slane %v1576, 4
      %v1579 = vor.u32 %v1578, %v1574
      %v1580 = vrot.slane %v1579, 4
      %v1582 = vshll.u32 %v1491, 16
      %v1584 = vrot.slane %v1582, 5
      %v1585 = vsel %vm285, %v1580, %v1584
      %v1586 = vshrl.u32 %v1491, 16
      %v1588 = vrot.slane %v1586, 4
      %v1589 = vor.u32 %v1588, %v1584
      %v1590 = vrot.slane %v1589, 4
      %v1592 = vshll.u32 %v1492, 16
      %v1594 = vrot.slane %v1592, 5
      %v1595 = vsel %vm285, %v1590, %v1594
      %v1597 = vshrl.u32 %v1493, 16
      %v1599 = vrot.slane %v1597, 4
      %v1600 = vshll.u32 %v1493, 16
      %v1602 = vrot.slane %v1600, 5
      %v1603 = vor.u32 %v1599, %v1602
      %v1604 = vrot.slane %v1603, 4
      %v1606 = vshll.u32 %v1494, 16
      %v1608 = vrot.slane %v1606, 5
      %v1609 = vsel %vm285, %v1604, %v1608
      %v1610 = vshrl.u32 %v1494, 16
      %v1612 = vrot.slane %v1610, 4
      %v1613 = vor.u32 %v1612, %v1608
      %v1614 = vrot.slane %v1613, 4
      %v1616 = vshll.u32 %v1495, 16
      %v1618 = vrot.slane %v1616, 5
      %v1619 = vsel %vm285, %v1614, %v1618
      %v1620 = vshrl.u32 %v1495, 16
      %v1622 = vrot.slane %v1620, 4
      %v1623 = vor.u32 %v1622, %v1618
      %v1624 = vrot.slane %v1623, 4
      %v1626 = vshll.u32 %v1496, 16
      %v1628 = vrot.slane %v1626, 5
      %v1629 = vsel %vm285, %v1624, %v1628
      %v1630 = vshrl.u32 %v1496, 16
      %v1632 = vrot.slane %v1630, 4
      %v1633 = vor.u32 %v1632, %v1628
      %v1634 = vrot.slane %v1633, 4
      %v1636 = vshll.u32 %v1497, 16
      %v1638 = vrot.slane %v1636, 5
      %v1639 = vsel %vm285, %v1634, %v1638
      %v1641 = vshrl.u32 %v1498, 16
      %v1643 = vrot.slane %v1641, 4
      %v1644 = vshll.u32 %v1498, 16
      %v1646 = vrot.slane %v1644, 5
      %v1647 = vor.u32 %v1643, %v1646
      %v1648 = vrot.slane %v1647, 4
      %v1650 = vshll.u32 %v1499, 16
      %v1652 = vrot.slane %v1650, 5
      %v1653 = vsel %vm285, %v1648, %v1652
      %v1654 = vshrl.u32 %v1499, 16
      %v1656 = vrot.slane %v1654, 4
      %v1657 = vor.u32 %v1656, %v1652
      %v1658 = vrot.slane %v1657, 4
      %v1660 = vshll.u32 %v1500, 16
      %v1662 = vrot.slane %v1660, 5
      %v1663 = vsel %vm285, %v1658, %v1662
      %v1664 = vshrl.u32 %v1500, 16
      %v1666 = vrot.slane %v1664, 4
      %v1667 = vor.u32 %v1666, %v1662
      %v1668 = vrot.slane %v1667, 4
      %v1670 = vshll.u32 %v1501, 16
      %v1672 = vrot.slane %v1670, 5
      %v1673 = vsel %vm285, %v1668, %v1672
      %v1674 = vshrl.u32 %v1501, 16
      %v1676 = vrot.slane %v1674, 4
      %v1677 = vor.u32 %v1676, %v1672
      %v1678 = vrot.slane %v1677, 4
      %v1680 = vshll.u32 %v1502, 16
      %v1682 = vrot.slane %v1680, 5
      %v1683 = vsel %vm285, %v1678, %v1682
      %v1685 = vshrl.u32 %v1503, 16
      %v1687 = vrot.slane %v1685, 4
      %v1688 = vshll.u32 %v1503, 16
      %v1690 = vrot.slane %v1688, 5
      %v1691 = vor.u32 %v1687, %v1690
      %v1692 = vrot.slane %v1691, 4
      %v1694 = vshll.u32 %v1504, 16
      %v1696 = vrot.slane %v1694, 5
      %v1697 = vsel %vm285, %v1692, %v1696
      %v1698 = vshrl.u32 %v1504, 16
      %v1700 = vrot.slane %v1698, 4
      %v1701 = vor.u32 %v1700, %v1696
      %v1702 = vrot.slane %v1701, 4
      %v1704 = vshll.u32 %v1505, 16
      %v1706 = vrot.slane %v1704, 5
      %v1707 = vsel %vm285, %v1702, %v1706
      %v1708 = vshrl.u32 %v1505, 16
      %v1710 = vrot.slane %v1708, 4
      %v1711 = vor.u32 %v1710, %v1706
      %v1712 = vrot.slane %v1711, 4
      %v1714 = vshll.u32 %v1506, 16
      %v1716 = vrot.slane %v1714, 5
      %v1717 = vsel %vm285, %v1712, %v1716
      %v1718 = vshrl.u32 %v1506, 16
      %v1720 = vrot.slane %v1718, 4
      %v1721 = vor.u32 %v1720, %v1716
      %v1722 = vrot.slane %v1721, 4
      %v1724 = vshll.u32 %v1507, 16
      %v1726 = vrot.slane %v1724, 5
      %v1727 = vsel %vm285, %v1722, %v1726
      %s1728 = scalar_lea.vmem %s1, 8
      %v1729 = vld [vmem:[%s1728] sm:$0x3]
      %v1730 = vunpack.c.l.b16 %v1521
      %v1731 = vunpack.c.l.b16 %v1531
      %v1732 = vunpack.c.l.b16 %v1541
      %v1733 = vunpack.c.l.b16 %v1551
      %v1734 = vunpack.c.l.b16 %v1565
      %v1735 = vunpack.c.l.b16 %v1575
      %v1736 = vunpack.c.l.b16 %v1585
      %v1737 = vunpack.c.l.b16 %v1595
      %v1738 = vunpack.c.l.b16 %v1609
      %v1739 = vunpack.c.l.b16 %v1619
      %v1740 = vunpack.c.l.b16 %v1629
      %v1741 = vunpack.c.l.b16 %v1639
      %v1742 = vunpack.c.l.b16 %v1653
      %v1743 = vunpack.c.l.b16 %v1663
      %v1744 = vunpack.c.l.b16 %v1673
      %v1745 = vunpack.c.l.b16 %v1683
      %v1746 = vunpack.c.l.b16 %v1697
      %v1747 = vunpack.c.l.b16 %v1707
      %v1748 = vunpack.c.l.b16 %v1717
      %v1749 = vunpack.c.l.b16 %v1727
      %v1750 = vpack.c.b16 %v1731, %v1730
      %v1751 = vpack.c.b16 %v1733, %v1732
      %v1752 = vpack.c.b16 %v1735, %v1734
      %v1753 = vpack.c.b16 %v1737, %v1736
      %v1754 = vpack.c.b16 %v1739, %v1738
      %v1755 = vpack.c.b16 %v1741, %v1740
      %v1756 = vpack.c.b16 %v1743, %v1742
      %v1757 = vpack.c.b16 %v1745, %v1744
      %v1758 = vpack.c.b16 %v1747, %v1746
      %v1759 = vpack.c.b16 %v1749, %v1748
      %v1761 = vsel %vm538, %v1750, 0
      %v1764 = vsel %vm538, %v1751, 0
      %v1767 = vsel %vm538, %v1752, 0
      %v1770 = vsel %vm538, %v1753, 0
      %v1773 = vsel %vm538, %v1754, 0
      %v1776 = vsel %vm538, %v1755, 0
      %v1779 = vsel %vm538, %v1756, 0
      %v1782 = vsel %vm538, %v1757, 0
      %v1785 = vsel %vm538, %v1758, 0
      %v1788 = vsel %vm538, %v1759, 0
      %v1791 = vsel %vm569, %v1729, 0
      %1793 = vmatpush.bf16.msra.mxu0 0
      %1794 = vmatpush.bf16.msra.mxu0 0
      %1795 = vmatpush.bf16.msra.mxu0 0
      %1796 = vmatpush.bf16.msra.mxu0 0
      %1797 = vmatpush.bf16.msra.mxu0 0
      %1798 = vmatpush.bf16.msra.mxu0 0
      %1799 = vmatpush.bf16.msra.mxu0 0
      %1800 = vmatpush.bf16.msra.mxu0 %v1791
      %1801 = vmatmul.bf16.gmra.mxu0 %v1761
      %v1802 = vpop.f32.mrf.mxu0
      %v1803 = vadd.f32 0.0, %v1802
      %v1804 = vpop.f32.mrf.mxu0
      %v1805 = vadd.f32 0.0, %v1804
      %1806 = vmatmul.bf16.gmra.mxu0 %v1764
      %v1807 = vpop.f32.mrf.mxu0
      %v1808 = vadd.f32 0.0, %v1807
      %v1809 = vpop.f32.mrf.mxu0
      %v1810 = vadd.f32 0.0, %v1809
      %1811 = vmatmul.bf16.gmra.mxu0 %v1767
      %v1812 = vpop.f32.mrf.mxu0
      %v1813 = vadd.f32 0.0, %v1812
      %v1814 = vpop.f32.mrf.mxu0
      %v1815 = vadd.f32 0.0, %v1814
      %1816 = vmatmul.bf16.gmra.mxu0 %v1770
      %v1817 = vpop.f32.mrf.mxu0
      %v1818 = vadd.f32 0.0, %v1817
      %v1819 = vpop.f32.mrf.mxu0
      %v1820 = vadd.f32 0.0, %v1819
      %1821 = vmatmul.bf16.gmra.mxu0 %v1773
      %v1822 = vpop.f32.mrf.mxu0
      %v1823 = vadd.f32 0.0, %v1822
      %v1824 = vpop.f32.mrf.mxu0
      %v1825 = vadd.f32 0.0, %v1824
      %1826 = vmatmul.bf16.gmra.mxu0 %v1776
      %v1827 = vpop.f32.mrf.mxu0
      %v1828 = vadd.f32 0.0, %v1827
      %v1829 = vpop.f32.mrf.mxu0
      %v1830 = vadd.f32 0.0, %v1829
      %1831 = vmatmul.bf16.gmra.mxu0 %v1779
      %v1832 = vpop.f32.mrf.mxu0
      %v1833 = vadd.f32 0.0, %v1832
      %v1834 = vpop.f32.mrf.mxu0
      %v1835 = vadd.f32 0.0, %v1834
      %1836 = vmatmul.bf16.gmra.mxu0 %v1782
      %v1837 = vpop.f32.mrf.mxu0
      %v1838 = vadd.f32 0.0, %v1837
      %v1839 = vpop.f32.mrf.mxu0
      %v1840 = vadd.f32 0.0, %v1839
      %1841 = vmatmul.bf16.gmra.mxu0 %v1785
      %v1842 = vpop.f32.mrf.mxu0
      %v1843 = vadd.f32 0.0, %v1842
      %v1844 = vpop.f32.mrf.mxu0
      %v1845 = vadd.f32 0.0, %v1844
      %1846 = vmatmul.bf16.gmra.mxu0 %v1788
      %v1847 = vpop.f32.mrf.mxu0
      %v1848 = vadd.f32 0.0, %v1847
      %v1849 = vpop.f32.mrf.mxu0
      %v1850 = vadd.f32 0.0, %v1849
      %1851 = vdwg.mxu0
      %v1852 = vadd.f32 %v1379, %v1803
      %v1853 = vadd.f32 %v1380, %v1805
      %v1854 = vadd.f32 %v1381, %v1808
      %v1855 = vadd.f32 %v1382, %v1810
      %v1856 = vadd.f32 %v1383, %v1813
      %v1857 = vadd.f32 %v1384, %v1815
      %v1858 = vadd.f32 %v1385, %v1818
      %v1859 = vadd.f32 %v1386, %v1820
      %v1860 = vadd.f32 %v1387, %v1823
      %v1861 = vadd.f32 %v1388, %v1825
      %v1862 = vadd.f32 %v1389, %v1828
      %v1863 = vadd.f32 %v1390, %v1830
      %v1864 = vadd.f32 %v1391, %v1833
      %v1865 = vadd.f32 %v1392, %v1835
      %v1866 = vadd.f32 %v1393, %v1838
      %v1867 = vadd.f32 %v1394, %v1840
      %v1868 = vadd.f32 %v1395, %v1843
      %v1869 = vadd.f32 %v1396, %v1845
      %v1870 = vadd.f32 %v1397, %v1848
      %v1871 = vadd.f32 %v1398, %v1850
      %s1872 = scalar_lea.vmem %s1, 20
      %v1873 = vld [vmem:[%s1872] sm:$0x3]
      %v1875 = vsel %vm569, %v1873, 0
      %1877 = vmatpush.bf16.msra.mxu0 0
      %1878 = vmatpush.bf16.msra.mxu0 0
      %1879 = vmatpush.bf16.msra.mxu0 0
      %1880 = vmatpush.bf16.msra.mxu0 0
      %1881 = vmatpush.bf16.msra.mxu0 0
      %1882 = vmatpush.bf16.msra.mxu0 0
      %1883 = vmatpush.bf16.msra.mxu0 0
      %1884 = vmatpush.bf16.msra.mxu0 %v1875
      %1885 = vmatmul.bf16.gmra.mxu0 %v1761
      %v1886 = vpop.f32.mrf.mxu0
      %v1887 = vadd.f32 0.0, %v1886
      %v1888 = vpop.f32.mrf.mxu0
      %v1889 = vadd.f32 0.0, %v1888
      %1890 = vmatmul.bf16.gmra.mxu0 %v1764
      %v1891 = vpop.f32.mrf.mxu0
      %v1892 = vadd.f32 0.0, %v1891
      %v1893 = vpop.f32.mrf.mxu0
      %v1894 = vadd.f32 0.0, %v1893
      %1895 = vmatmul.bf16.gmra.mxu0 %v1767
      %v1896 = vpop.f32.mrf.mxu0
      %v1897 = vadd.f32 0.0, %v1896
      %v1898 = vpop.f32.mrf.mxu0
      %v1899 = vadd.f32 0.0, %v1898
      %1900 = vmatmul.bf16.gmra.mxu0 %v1770
      %v1901 = vpop.f32.mrf.mxu0
      %v1902 = vadd.f32 0.0, %v1901
      %v1903 = vpop.f32.mrf.mxu0
      %v1904 = vadd.f32 0.0, %v1903
      %1905 = vmatmul.bf16.gmra.mxu0 %v1773
      %v1906 = vpop.f32.mrf.mxu0
      %v1907 = vadd.f32 0.0, %v1906
      %v1908 = vpop.f32.mrf.mxu0
      %v1909 = vadd.f32 0.0, %v1908
      %1910 = vmatmul.bf16.gmra.mxu0 %v1776
      %v1911 = vpop.f32.mrf.mxu0
      %v1912 = vadd.f32 0.0, %v1911
      %v1913 = vpop.f32.mrf.mxu0
      %v1914 = vadd.f32 0.0, %v1913
      %1915 = vmatmul.bf16.gmra.mxu0 %v1779
      %v1916 = vpop.f32.mrf.mxu0
      %v1917 = vadd.f32 0.0, %v1916
      %v1918 = vpop.f32.mrf.mxu0
      %v1919 = vadd.f32 0.0, %v1918
      %1920 = vmatmul.bf16.gmra.mxu0 %v1782
      %v1921 = vpop.f32.mrf.mxu0
      %v1922 = vadd.f32 0.0, %v1921
      %v1923 = vpop.f32.mrf.mxu0
      %v1924 = vadd.f32 0.0, %v1923
      %1925 = vmatmul.bf16.gmra.mxu0 %v1785
      %v1926 = vpop.f32.mrf.mxu0
      %v1927 = vadd.f32 0.0, %v1926
      %v1928 = vpop.f32.mrf.mxu0
      %v1929 = vadd.f32 0.0, %v1928
      %1930 = vmatmul.bf16.gmra.mxu0 %v1788
      %v1931 = vpop.f32.mrf.mxu0
      %v1932 = vadd.f32 0.0, %v1931
      %v1933 = vpop.f32.mrf.mxu0
      %v1934 = vadd.f32 0.0, %v1933
      %1935 = vdwg.mxu0
      %v1936 = vadd.f32 %v1463, %v1887
      %v1937 = vadd.f32 %v1464, %v1889
      %v1938 = vadd.f32 %v1465, %v1892
      %v1939 = vadd.f32 %v1466, %v1894
      %v1940 = vadd.f32 %v1467, %v1897
      %v1941 = vadd.f32 %v1468, %v1899
      %v1942 = vadd.f32 %v1469, %v1902
      %v1943 = vadd.f32 %v1470, %v1904
      %v1944 = vadd.f32 %v1471, %v1907
      %v1945 = vadd.f32 %v1472, %v1909
      %v1946 = vadd.f32 %v1473, %v1912
      %v1947 = vadd.f32 %v1474, %v1914
      %v1948 = vadd.f32 %v1475, %v1917
      %v1949 = vadd.f32 %v1476, %v1919
      %v1950 = vadd.f32 %v1477, %v1922
      %v1951 = vadd.f32 %v1478, %v1924
      %v1952 = vadd.f32 %v1479, %v1927
      %v1953 = vadd.f32 %v1480, %v1929
      %v1954 = vadd.f32 %v1481, %v1932
      %v1955 = vadd.f32 %v1482, %v1934
      %v1956 = vld [vmem:[%s1214] sm:$0xe]
      %v1957 = vld [vmem:[%s1214 + $0x14] sm:$0xe]
      %v1958 = vld [vmem:[%s1214 + $0x28] sm:$0xe]
      %v1959 = vld [vmem:[%s1214 + $0x3c] sm:$0xe]
      %v1960 = vld [vmem:[%s1214 + $0x50] sm:$0xe]
      %v1986 = vrot.slane %v1956, 5
      %v1987 = vrot.slane %v1986, 4
      %v1988 = vrot.slane %v1484, 5
      %v1989 = vsel %vm917, %v1987, %v1988
      %v1990 = vrot.slane %v1988, 4
      %v1991 = vrot.slane %v1485, 5
      %v1992 = vsel %vm917, %v1990, %v1991
      %v1993 = vrot.slane %v1991, 4
      %v1994 = vrot.slane %v1486, 5
      %v1995 = vsel %vm917, %v1993, %v1994
      %v1996 = vrot.slane %v1994, 4
      %v1997 = vrot.slane %v1487, 5
      %v1998 = vsel %vm917, %v1996, %v1997
      %v1999 = vrot.slane %v1957, 5
      %v2000 = vrot.slane %v1999, 4
      %v2001 = vrot.slane %v1489, 5
      %v2002 = vsel %vm917, %v2000, %v2001
      %v2003 = vrot.slane %v2001, 4
      %v2004 = vrot.slane %v1490, 5
      %v2005 = vsel %vm917, %v2003, %v2004
      %v2006 = vrot.slane %v2004, 4
      %v2007 = vrot.slane %v1491, 5
      %v2008 = vsel %vm917, %v2006, %v2007
      %v2009 = vrot.slane %v2007, 4
      %v2010 = vrot.slane %v1492, 5
      %v2011 = vsel %vm917, %v2009, %v2010
      %v2012 = vrot.slane %v1958, 5
      %v2013 = vrot.slane %v2012, 4
      %v2014 = vrot.slane %v1494, 5
      %v2015 = vsel %vm917, %v2013, %v2014
      %v2016 = vrot.slane %v2014, 4
      %v2017 = vrot.slane %v1495, 5
      %v2018 = vsel %vm917, %v2016, %v2017
      %v2019 = vrot.slane %v2017, 4
      %v2020 = vrot.slane %v1496, 5
      %v2021 = vsel %vm917, %v2019, %v2020
      %v2022 = vrot.slane %v2020, 4
      %v2023 = vrot.slane %v1497, 5
      %v2024 = vsel %vm917, %v2022, %v2023
      %v2025 = vrot.slane %v1959, 5
      %v2026 = vrot.slane %v2025, 4
      %v2027 = vrot.slane %v1499, 5
      %v2028 = vsel %vm917, %v2026, %v2027
      %v2029 = vrot.slane %v2027, 4
      %v2030 = vrot.slane %v1500, 5
      %v2031 = vsel %vm917, %v2029, %v2030
      %v2032 = vrot.slane %v2030, 4
      %v2033 = vrot.slane %v1501, 5
      %v2034 = vsel %vm917, %v2032, %v2033
      %v2035 = vrot.slane %v2033, 4
      %v2036 = vrot.slane %v1502, 5
      %v2037 = vsel %vm917, %v2035, %v2036
      %v2038 = vrot.slane %v1960, 5
      %v2039 = vrot.slane %v2038, 4
      %v2040 = vrot.slane %v1504, 5
      %v2041 = vsel %vm917, %v2039, %v2040
      %v2042 = vrot.slane %v2040, 4
      %v2043 = vrot.slane %v1505, 5
      %v2044 = vsel %vm917, %v2042, %v2043
      %v2045 = vrot.slane %v2043, 4
      %v2046 = vrot.slane %v1506, 5
      %v2047 = vsel %vm917, %v2045, %v2046
      %v2048 = vrot.slane %v2046, 4
      %v2049 = vrot.slane %v1507, 5
      %v2050 = vsel %vm917, %v2048, %v2049
      %s2051 = scalar_lea.vmem %s1, 10
      %v2052 = vld [vmem:[%s2051] sm:$0x3]
      %v2053 = vunpack.c.l.b16 %v1989
      %v2054 = vunpack.c.l.b16 %v1992
      %v2055 = vunpack.c.l.b16 %v1995
      %v2056 = vunpack.c.l.b16 %v1998
      %v2057 = vunpack.c.l.b16 %v2002
      %v2058 = vunpack.c.l.b16 %v2005
      %v2059 = vunpack.c.l.b16 %v2008
      %v2060 = vunpack.c.l.b16 %v2011
      %v2061 = vunpack.c.l.b16 %v2015
      %v2062 = vunpack.c.l.b16 %v2018
      %v2063 = vunpack.c.l.b16 %v2021
      %v2064 = vunpack.c.l.b16 %v2024
      %v2065 = vunpack.c.l.b16 %v2028
      %v2066 = vunpack.c.l.b16 %v2031
      %v2067 = vunpack.c.l.b16 %v2034
      %v2068 = vunpack.c.l.b16 %v2037
      %v2069 = vunpack.c.l.b16 %v2041
      %v2070 = vunpack.c.l.b16 %v2044
      %v2071 = vunpack.c.l.b16 %v2047
      %v2072 = vunpack.c.l.b16 %v2050
      %v2073 = vpack.c.b16 %v2054, %v2053
      %v2074 = vpack.c.b16 %v2056, %v2055
      %v2075 = vpack.c.b16 %v2058, %v2057
      %v2076 = vpack.c.b16 %v2060, %v2059
      %v2077 = vpack.c.b16 %v2062, %v2061
      %v2078 = vpack.c.b16 %v2064, %v2063
      %v2079 = vpack.c.b16 %v2066, %v2065
      %v2080 = vpack.c.b16 %v2068, %v2067
      %v2081 = vpack.c.b16 %v2070, %v2069
      %v2082 = vpack.c.b16 %v2072, %v2071
      %v2084 = vsel %vm538, %v2073, 0
      %v2087 = vsel %vm538, %v2074, 0
      %v2090 = vsel %vm538, %v2075, 0
      %v2093 = vsel %vm538, %v2076, 0
      %v2096 = vsel %vm538, %v2077, 0
      %v2099 = vsel %vm538, %v2078, 0
      %v2102 = vsel %vm538, %v2079, 0
      %v2105 = vsel %vm538, %v2080, 0
      %v2108 = vsel %vm538, %v2081, 0
      %v2111 = vsel %vm538, %v2082, 0
      %v2114 = vsel %vm569, %v2052, 0
      %2116 = vmatpush.bf16.msra.mxu0 0
      %2117 = vmatpush.bf16.msra.mxu0 0
      %2118 = vmatpush.bf16.msra.mxu0 0
      %2119 = vmatpush.bf16.msra.mxu0 0
      %2120 = vmatpush.bf16.msra.mxu0 0
      %2121 = vmatpush.bf16.msra.mxu0 0
      %2122 = vmatpush.bf16.msra.mxu0 0
      %2123 = vmatpush.bf16.msra.mxu0 %v2114
      %2124 = vmatmul.bf16.gmra.mxu0 %v2084
      %v2125 = vpop.f32.mrf.mxu0
      %v2126 = vadd.f32 0.0, %v2125
      %v2127 = vpop.f32.mrf.mxu0
      %v2128 = vadd.f32 0.0, %v2127
      %2129 = vmatmul.bf16.gmra.mxu0 %v2087
      %v2130 = vpop.f32.mrf.mxu0
      %v2131 = vadd.f32 0.0, %v2130
      %v2132 = vpop.f32.mrf.mxu0
      %v2133 = vadd.f32 0.0, %v2132
      %2134 = vmatmul.bf16.gmra.mxu0 %v2090
      %v2135 = vpop.f32.mrf.mxu0
      %v2136 = vadd.f32 0.0, %v2135
      %v2137 = vpop.f32.mrf.mxu0
      %v2138 = vadd.f32 0.0, %v2137
      %2139 = vmatmul.bf16.gmra.mxu0 %v2093
      %v2140 = vpop.f32.mrf.mxu0
      %v2141 = vadd.f32 0.0, %v2140
      %v2142 = vpop.f32.mrf.mxu0
      %v2143 = vadd.f32 0.0, %v2142
      %2144 = vmatmul.bf16.gmra.mxu0 %v2096
      %v2145 = vpop.f32.mrf.mxu0
      %v2146 = vadd.f32 0.0, %v2145
      %v2147 = vpop.f32.mrf.mxu0
      %v2148 = vadd.f32 0.0, %v2147
      %2149 = vmatmul.bf16.gmra.mxu0 %v2099
      %v2150 = vpop.f32.mrf.mxu0
      %v2151 = vadd.f32 0.0, %v2150
      %v2152 = vpop.f32.mrf.mxu0
      %v2153 = vadd.f32 0.0, %v2152
      %2154 = vmatmul.bf16.gmra.mxu0 %v2102
      %v2155 = vpop.f32.mrf.mxu0
      %v2156 = vadd.f32 0.0, %v2155
      %v2157 = vpop.f32.mrf.mxu0
      %v2158 = vadd.f32 0.0, %v2157
      %2159 = vmatmul.bf16.gmra.mxu0 %v2105
      %v2160 = vpop.f32.mrf.mxu0
      %v2161 = vadd.f32 0.0, %v2160
      %v2162 = vpop.f32.mrf.mxu0
      %v2163 = vadd.f32 0.0, %v2162
      %2164 = vmatmul.bf16.gmra.mxu0 %v2108
      %v2165 = vpop.f32.mrf.mxu0
      %v2166 = vadd.f32 0.0, %v2165
      %v2167 = vpop.f32.mrf.mxu0
      %v2168 = vadd.f32 0.0, %v2167
      %2169 = vmatmul.bf16.gmra.mxu0 %v2111
      %v2170 = vpop.f32.mrf.mxu0
      %v2171 = vadd.f32 0.0, %v2170
      %v2172 = vpop.f32.mrf.mxu0
      %v2173 = vadd.f32 0.0, %v2172
      %2174 = vdwg.mxu0
      %v2175 = vadd.f32 %v1852, %v2126
      %v2176 = vadd.f32 %v1853, %v2128
      %v2177 = vadd.f32 %v1854, %v2131
      %v2178 = vadd.f32 %v1855, %v2133
      %v2179 = vadd.f32 %v1856, %v2136
      %v2180 = vadd.f32 %v1857, %v2138
      %v2181 = vadd.f32 %v1858, %v2141
      %v2182 = vadd.f32 %v1859, %v2143
      %v2183 = vadd.f32 %v1860, %v2146
      %v2184 = vadd.f32 %v1861, %v2148
      %v2185 = vadd.f32 %v1862, %v2151
      %v2186 = vadd.f32 %v1863, %v2153
      %v2187 = vadd.f32 %v1864, %v2156
      %v2188 = vadd.f32 %v1865, %v2158
      %v2189 = vadd.f32 %v1866, %v2161
      %v2190 = vadd.f32 %v1867, %v2163
      %v2191 = vadd.f32 %v1868, %v2166
      %v2192 = vadd.f32 %v1869, %v2168
      %v2193 = vadd.f32 %v1870, %v2171
      %v2194 = vadd.f32 %v1871, %v2173
      %s2195 = scalar_lea.vmem %s1, 22
      %v2196 = vld [vmem:[%s2195] sm:$0x3]
      %v2198 = vsel %vm569, %v2196, 0
      %2200 = vmatpush.bf16.msra.mxu0 0
      %2201 = vmatpush.bf16.msra.mxu0 0
      %2202 = vmatpush.bf16.msra.mxu0 0
      %2203 = vmatpush.bf16.msra.mxu0 0
      %2204 = vmatpush.bf16.msra.mxu0 0
      %2205 = vmatpush.bf16.msra.mxu0 0
      %2206 = vmatpush.bf16.msra.mxu0 0
      %2207 = vmatpush.bf16.msra.mxu0 %v2198
      %2208 = vmatmul.bf16.gmra.mxu0 %v2084
      %v2209 = vpop.f32.mrf.mxu0
      %v2210 = vadd.f32 0.0, %v2209
      %v2211 = vpop.f32.mrf.mxu0
      %v2212 = vadd.f32 0.0, %v2211
      %2213 = vmatmul.bf16.gmra.mxu0 %v2087
      %v2214 = vpop.f32.mrf.mxu0
      %v2215 = vadd.f32 0.0, %v2214
      %v2216 = vpop.f32.mrf.mxu0
      %v2217 = vadd.f32 0.0, %v2216
      %2218 = vmatmul.bf16.gmra.mxu0 %v2090
      %v2219 = vpop.f32.mrf.mxu0
      %v2220 = vadd.f32 0.0, %v2219
      %v2221 = vpop.f32.mrf.mxu0
      %v2222 = vadd.f32 0.0, %v2221
      %2223 = vmatmul.bf16.gmra.mxu0 %v2093
      %v2224 = vpop.f32.mrf.mxu0
      %v2225 = vadd.f32 0.0, %v2224
      %v2226 = vpop.f32.mrf.mxu0
      %v2227 = vadd.f32 0.0, %v2226
      %2228 = vmatmul.bf16.gmra.mxu0 %v2096
      %v2229 = vpop.f32.mrf.mxu0
      %v2230 = vadd.f32 0.0, %v2229
      %v2231 = vpop.f32.mrf.mxu0
      %v2232 = vadd.f32 0.0, %v2231
      %2233 = vmatmul.bf16.gmra.mxu0 %v2099
      %v2234 = vpop.f32.mrf.mxu0
      %v2235 = vadd.f32 0.0, %v2234
      %v2236 = vpop.f32.mrf.mxu0
      %v2237 = vadd.f32 0.0, %v2236
      %2238 = vmatmul.bf16.gmra.mxu0 %v2102
      %v2239 = vpop.f32.mrf.mxu0
      %v2240 = vadd.f32 0.0, %v2239
      %v2241 = vpop.f32.mrf.mxu0
      %v2242 = vadd.f32 0.0, %v2241
      %2243 = vmatmul.bf16.gmra.mxu0 %v2105
      %v2244 = vpop.f32.mrf.mxu0
      %v2245 = vadd.f32 0.0, %v2244
      %v2246 = vpop.f32.mrf.mxu0
      %v2247 = vadd.f32 0.0, %v2246
      %2248 = vmatmul.bf16.gmra.mxu0 %v2108
      %v2249 = vpop.f32.mrf.mxu0
      %v2250 = vadd.f32 0.0, %v2249
      %v2251 = vpop.f32.mrf.mxu0
      %v2252 = vadd.f32 0.0, %v2251
      %2253 = vmatmul.bf16.gmra.mxu0 %v2111
      %v2254 = vpop.f32.mrf.mxu0
      %v2255 = vadd.f32 0.0, %v2254
      %v2256 = vpop.f32.mrf.mxu0
      %v2257 = vadd.f32 0.0, %v2256
      %2258 = vdwg.mxu0
      %v2259 = vadd.f32 %v1936, %v2210
      %v2260 = vadd.f32 %v1937, %v2212
      %v2261 = vadd.f32 %v1938, %v2215
      %v2262 = vadd.f32 %v1939, %v2217
      %v2263 = vadd.f32 %v1940, %v2220
      %v2264 = vadd.f32 %v1941, %v2222
      %v2265 = vadd.f32 %v1942, %v2225
      %v2266 = vadd.f32 %v1943, %v2227
      %v2267 = vadd.f32 %v1944, %v2230
      %v2268 = vadd.f32 %v1945, %v2232
      %v2269 = vadd.f32 %v1946, %v2235
      %v2270 = vadd.f32 %v1947, %v2237
      %v2271 = vadd.f32 %v1948, %v2240
      %v2272 = vadd.f32 %v1949, %v2242
      %v2273 = vadd.f32 %v1950, %v2245
      %v2274 = vadd.f32 %v1951, %v2247
      %v2275 = vadd.f32 %v1952, %v2250
      %v2276 = vadd.f32 %v1953, %v2252
      %v2277 = vadd.f32 %v1954, %v2255
      %v2278 = vadd.f32 %v1955, %v2257
      %v2279 = vld [vmem:[%s2] sm:$0x1]
      %v2281 = vperm.slane %v2279, 0
      %v2283 = vadd.f32 %v2175, %v2281
      %v2284 = vadd.f32 %v2176, %v2281
      %v2285 = vadd.f32 %v2177, %v2281
      %v2286 = vadd.f32 %v2178, %v2281
      %v2287 = vadd.f32 %v2179, %v2281
      %v2288 = vadd.f32 %v2180, %v2281
      %v2289 = vadd.f32 %v2181, %v2281
      %v2290 = vadd.f32 %v2182, %v2281
      %v2291 = vadd.f32 %v2183, %v2281
      %v2292 = vadd.f32 %v2184, %v2281
      %v2293 = vadd.f32 %v2185, %v2281
      %v2294 = vadd.f32 %v2186, %v2281
      %v2295 = vadd.f32 %v2187, %v2281
      %v2296 = vadd.f32 %v2188, %v2281
      %v2297 = vadd.f32 %v2189, %v2281
      %v2298 = vadd.f32 %v2190, %v2281
      %v2299 = vadd.f32 %v2191, %v2281
      %v2300 = vadd.f32 %v2192, %v2281
      %v2301 = vadd.f32 %v2193, %v2281
      %v2302 = vadd.f32 %v2194, %v2281
      %vm2303 = vcmp.gt.f32.partialorder %v2283, 0.0
      %vm2304 = vcmp.gt.f32.partialorder %v2284, 0.0
      %vm2305 = vcmp.gt.f32.partialorder %v2285, 0.0
      %vm2306 = vcmp.gt.f32.partialorder %v2286, 0.0
      %vm2307 = vcmp.gt.f32.partialorder %v2287, 0.0
      %vm2308 = vcmp.gt.f32.partialorder %v2288, 0.0
      %vm2309 = vcmp.gt.f32.partialorder %v2289, 0.0
      %vm2310 = vcmp.gt.f32.partialorder %v2290, 0.0
      %vm2311 = vcmp.gt.f32.partialorder %v2291, 0.0
      %vm2312 = vcmp.gt.f32.partialorder %v2292, 0.0
      %vm2313 = vcmp.gt.f32.partialorder %v2293, 0.0
      %vm2314 = vcmp.gt.f32.partialorder %v2294, 0.0
      %vm2315 = vcmp.gt.f32.partialorder %v2295, 0.0
      %vm2316 = vcmp.gt.f32.partialorder %v2296, 0.0
      %vm2317 = vcmp.gt.f32.partialorder %v2297, 0.0
      %vm2318 = vcmp.gt.f32.partialorder %v2298, 0.0
      %vm2319 = vcmp.gt.f32.partialorder %v2299, 0.0
      %vm2320 = vcmp.gt.f32.partialorder %v2300, 0.0
      %vm2321 = vcmp.gt.f32.partialorder %v2301, 0.0
      %vm2322 = vcmp.gt.f32.partialorder %v2302, 0.0
      %v2323 = vmul.f32 %v2283, 0.2
      %v2324 = vmul.f32 %v2284, 0.2
      %v2325 = vmul.f32 %v2285, 0.2
      %v2326 = vmul.f32 %v2286, 0.2
      %v2327 = vmul.f32 %v2287, 0.2
      %v2328 = vmul.f32 %v2288, 0.2
      %v2329 = vmul.f32 %v2289, 0.2
      %v2330 = vmul.f32 %v2290, 0.2
      %v2331 = vmul.f32 %v2291, 0.2
      %v2332 = vmul.f32 %v2292, 0.2
      %v2333 = vmul.f32 %v2293, 0.2
      %v2334 = vmul.f32 %v2294, 0.2
      %v2335 = vmul.f32 %v2295, 0.2
      %v2336 = vmul.f32 %v2296, 0.2
      %v2337 = vmul.f32 %v2297, 0.2
      %v2338 = vmul.f32 %v2298, 0.2
      %v2339 = vmul.f32 %v2299, 0.2
      %v2340 = vmul.f32 %v2300, 0.2
      %v2341 = vmul.f32 %v2301, 0.2
      %v2342 = vmul.f32 %v2302, 0.2
      %v2343 = vsel %vm2303, %v2283, %v2323
      %v2344 = vsel %vm2304, %v2284, %v2324
      %v2345 = vsel %vm2305, %v2285, %v2325
      %v2346 = vsel %vm2306, %v2286, %v2326
      %v2347 = vsel %vm2307, %v2287, %v2327
      %v2348 = vsel %vm2308, %v2288, %v2328
      %v2349 = vsel %vm2309, %v2289, %v2329
      %v2350 = vsel %vm2310, %v2290, %v2330
      %v2351 = vsel %vm2311, %v2291, %v2331
      %v2352 = vsel %vm2312, %v2292, %v2332
      %v2353 = vsel %vm2313, %v2293, %v2333
      %v2354 = vsel %vm2314, %v2294, %v2334
      %v2355 = vsel %vm2315, %v2295, %v2335
      %v2356 = vsel %vm2316, %v2296, %v2336
      %v2357 = vsel %vm2317, %v2297, %v2337
      %v2358 = vsel %vm2318, %v2298, %v2338
      %v2359 = vsel %vm2319, %v2299, %v2339
      %v2360 = vsel %vm2320, %v2300, %v2340
      %v2361 = vsel %vm2321, %v2301, %v2341
      %v2362 = vsel %vm2322, %v2302, %v2342
      %v2363 = vpack.c.bf16 %v2343, %v2343
      %v2364 = vpack.c.bf16 %v2344, %v2344
      %v2365 = vpack.c.bf16 %v2345, %v2345
      %v2366 = vpack.c.bf16 %v2346, %v2346
      %v2367 = vpack.c.bf16 %v2347, %v2347
      %v2368 = vpack.c.bf16 %v2348, %v2348
      %v2369 = vpack.c.bf16 %v2349, %v2349
      %v2370 = vpack.c.bf16 %v2350, %v2350
      %v2371 = vpack.c.bf16 %v2351, %v2351
      %v2372 = vpack.c.bf16 %v2352, %v2352
      %v2373 = vpack.c.bf16 %v2353, %v2353
      %v2374 = vpack.c.bf16 %v2354, %v2354
      %v2375 = vpack.c.bf16 %v2355, %v2355
      %v2376 = vpack.c.bf16 %v2356, %v2356
      %v2377 = vpack.c.bf16 %v2357, %v2357
      %v2378 = vpack.c.bf16 %v2358, %v2358
      %v2379 = vpack.c.bf16 %v2359, %v2359
      %v2380 = vpack.c.bf16 %v2360, %v2360
      %v2381 = vpack.c.bf16 %v2361, %v2361
      %v2382 = vpack.c.bf16 %v2362, %v2362
      %v2383 = vadd.f32 %v2259, %v2281
      %v2384 = vadd.f32 %v2260, %v2281
      %v2385 = vadd.f32 %v2261, %v2281
      %v2386 = vadd.f32 %v2262, %v2281
      %v2387 = vadd.f32 %v2263, %v2281
      %v2388 = vadd.f32 %v2264, %v2281
      %v2389 = vadd.f32 %v2265, %v2281
      %v2390 = vadd.f32 %v2266, %v2281
      %v2391 = vadd.f32 %v2267, %v2281
      %v2392 = vadd.f32 %v2268, %v2281
      %v2393 = vadd.f32 %v2269, %v2281
      %v2394 = vadd.f32 %v2270, %v2281
      %v2395 = vadd.f32 %v2271, %v2281
      %v2396 = vadd.f32 %v2272, %v2281
      %v2397 = vadd.f32 %v2273, %v2281
      %v2398 = vadd.f32 %v2274, %v2281
      %v2399 = vadd.f32 %v2275, %v2281
      %v2400 = vadd.f32 %v2276, %v2281
      %v2401 = vadd.f32 %v2277, %v2281
      %v2402 = vadd.f32 %v2278, %v2281
      %vm2403 = vcmp.gt.f32.partialorder %v2383, 0.0
      %vm2404 = vcmp.gt.f32.partialorder %v2384, 0.0
      %vm2405 = vcmp.gt.f32.partialorder %v2385, 0.0
      %vm2406 = vcmp.gt.f32.partialorder %v2386, 0.0
      %vm2407 = vcmp.gt.f32.partialorder %v2387, 0.0
      %vm2408 = vcmp.gt.f32.partialorder %v2388, 0.0
      %vm2409 = vcmp.gt.f32.partialorder %v2389, 0.0
      %vm2410 = vcmp.gt.f32.partialorder %v2390, 0.0
      %vm2411 = vcmp.gt.f32.partialorder %v2391, 0.0
      %vm2412 = vcmp.gt.f32.partialorder %v2392, 0.0
      %vm2413 = vcmp.gt.f32.partialorder %v2393, 0.0
      %vm2414 = vcmp.gt.f32.partialorder %v2394, 0.0
      %vm2415 = vcmp.gt.f32.partialorder %v2395, 0.0
      %vm2416 = vcmp.gt.f32.partialorder %v2396, 0.0
      %vm2417 = vcmp.gt.f32.partialorder %v2397, 0.0
      %vm2418 = vcmp.gt.f32.partialorder %v2398, 0.0
      %vm2419 = vcmp.gt.f32.partialorder %v2399, 0.0
      %vm2420 = vcmp.gt.f32.partialorder %v2400, 0.0
      %vm2421 = vcmp.gt.f32.partialorder %v2401, 0.0
      %vm2422 = vcmp.gt.f32.partialorder %v2402, 0.0
      %v2423 = vmul.f32 %v2383, 0.2
      %v2424 = vmul.f32 %v2384, 0.2
      %v2425 = vmul.f32 %v2385, 0.2
      %v2426 = vmul.f32 %v2386, 0.2
      %v2427 = vmul.f32 %v2387, 0.2
      %v2428 = vmul.f32 %v2388, 0.2
      %v2429 = vmul.f32 %v2389, 0.2
      %v2430 = vmul.f32 %v2390, 0.2
      %v2431 = vmul.f32 %v2391, 0.2
      %v2432 = vmul.f32 %v2392, 0.2
      %v2433 = vmul.f32 %v2393, 0.2
      %v2434 = vmul.f32 %v2394, 0.2
      %v2435 = vmul.f32 %v2395, 0.2
      %v2436 = vmul.f32 %v2396, 0.2
      %v2437 = vmul.f32 %v2397, 0.2
      %v2438 = vmul.f32 %v2398, 0.2
      %v2439 = vmul.f32 %v2399, 0.2
      %v2440 = vmul.f32 %v2400, 0.2
      %v2441 = vmul.f32 %v2401, 0.2
      %v2442 = vmul.f32 %v2402, 0.2
      %v2443 = vsel %vm2403, %v2383, %v2423
      %v2444 = vsel %vm2404, %v2384, %v2424
      %v2445 = vsel %vm2405, %v2385, %v2425
      %v2446 = vsel %vm2406, %v2386, %v2426
      %v2447 = vsel %vm2407, %v2387, %v2427
      %v2448 = vsel %vm2408, %v2388, %v2428
      %v2449 = vsel %vm2409, %v2389, %v2429
      %v2450 = vsel %vm2410, %v2390, %v2430
      %v2451 = vsel %vm2411, %v2391, %v2431
      %v2452 = vsel %vm2412, %v2392, %v2432
      %v2453 = vsel %vm2413, %v2393, %v2433
      %v2454 = vsel %vm2414, %v2394, %v2434
      %v2455 = vsel %vm2415, %v2395, %v2435
      %v2456 = vsel %vm2416, %v2396, %v2436
      %v2457 = vsel %vm2417, %v2397, %v2437
      %v2458 = vsel %vm2418, %v2398, %v2438
      %v2459 = vsel %vm2419, %v2399, %v2439
      %v2460 = vsel %vm2420, %v2400, %v2440
      %v2461 = vsel %vm2421, %v2401, %v2441
      %v2462 = vsel %vm2422, %v2402, %v2442
      %v2463 = vpack.c.bf16 %v2443, %v2443
      %v2464 = vpack.c.bf16 %v2444, %v2444
      %v2465 = vpack.c.bf16 %v2445, %v2445
      %v2466 = vpack.c.bf16 %v2446, %v2446
      %v2467 = vpack.c.bf16 %v2447, %v2447
      %v2468 = vpack.c.bf16 %v2448, %v2448
      %v2469 = vpack.c.bf16 %v2449, %v2449
      %v2470 = vpack.c.bf16 %v2450, %v2450
      %v2471 = vpack.c.bf16 %v2451, %v2451
      %v2472 = vpack.c.bf16 %v2452, %v2452
      %v2473 = vpack.c.bf16 %v2453, %v2453
      %v2474 = vpack.c.bf16 %v2454, %v2454
      %v2475 = vpack.c.bf16 %v2455, %v2455
      %v2476 = vpack.c.bf16 %v2456, %v2456
      %v2477 = vpack.c.bf16 %v2457, %v2457
      %v2478 = vpack.c.bf16 %v2458, %v2458
      %v2479 = vpack.c.bf16 %v2459, %v2459
      %v2480 = vpack.c.bf16 %v2460, %v2460
      %v2481 = vpack.c.bf16 %v2461, %v2461
      %v2482 = vpack.c.bf16 %v2462, %v2462
      %vm2483 = vsmask.f32 256
      %vm2484 = vsmask.f32 4368
      %vm2485 = vmor %vm2483, %vm2484
      %v2487 = vshrl.u32 %v2463, 16
      %v2489 = vrot.slane %v2487, 7
      %v2490 = vshll.u32 %v2463, 16
      %v2492 = vor.u32 %v2489, %v2490
      %v2493 = vrot.slane %v2489, 4
      %v2495 = vshrl.u32 %v2464, 16
      %v2497 = vrot.slane %v2495, 7
      %v2498 = vshll.u32 %v2464, 16
      %v2500 = vor.u32 %v2497, %v2498
      %v2501 = vsel %vm2485, %v2493, %v2500
      %v2502 = vrot.slane %v2497, 4
      %v2504 = vshrl.u32 %v2465, 16
      %v2506 = vrot.slane %v2504, 7
      %v2507 = vshll.u32 %v2465, 16
      %v2509 = vor.u32 %v2506, %v2507
      %v2510 = vsel %vm2485, %v2502, %v2509
      %v2511 = vrot.slane %v2506, 4
      %v2513 = vshrl.u32 %v2466, 16
      %v2515 = vrot.slane %v2513, 7
      %v2516 = vshll.u32 %v2466, 16
      %v2518 = vor.u32 %v2515, %v2516
      %v2519 = vsel %vm2485, %v2511, %v2518
      %v2520 = vrot.slane %v2515, 4
      %v2522 = vshrl.u32 %v2363, 16
      %v2524 = vrot.slane %v2522, 7
      %v2525 = vshll.u32 %v2363, 16
      %v2527 = vor.u32 %v2524, %v2525
      %v2528 = vrot.slane %v2524, 4
      %v2530 = vshrl.u32 %v2364, 16
      %v2532 = vrot.slane %v2530, 7
      %v2533 = vshll.u32 %v2364, 16
      %v2535 = vor.u32 %v2532, %v2533
      %v2536 = vsel %vm2485, %v2528, %v2535
      %v2537 = vrot.slane %v2532, 4
      %v2539 = vshrl.u32 %v2365, 16
      %v2541 = vrot.slane %v2539, 7
      %v2542 = vshll.u32 %v2365, 16
      %v2544 = vor.u32 %v2541, %v2542
      %v2545 = vsel %vm2485, %v2537, %v2544
      %v2546 = vrot.slane %v2541, 4
      %v2548 = vshrl.u32 %v2366, 16
      %v2550 = vrot.slane %v2548, 7
      %v2551 = vshll.u32 %v2366, 16
      %v2553 = vor.u32 %v2550, %v2551
      %v2554 = vsel %vm2485, %v2546, %v2553
      %v2555 = vrot.slane %v2550, 4
      %v2557 = vshrl.u32 %v2467, 16
      %v2559 = vrot.slane %v2557, 7
      %v2560 = vshll.u32 %v2467, 16
      %v2562 = vor.u32 %v2559, %v2560
      %v2563 = vrot.slane %v2559, 4
      %v2565 = vshrl.u32 %v2468, 16
      %v2567 = vrot.slane %v2565, 7
      %v2568 = vshll.u32 %v2468, 16
      %v2570 = vor.u32 %v2567, %v2568
      %v2571 = vsel %vm2485, %v2563, %v2570
      %v2572 = vrot.slane %v2567, 4
      %v2574 = vshrl.u32 %v2469, 16
      %v2576 = vrot.slane %v2574, 7
      %v2577 = vshll.u32 %v2469, 16
      %v2579 = vor.u32 %v2576, %v2577
      %v2580 = vsel %vm2485, %v2572, %v2579
      %v2581 = vrot.slane %v2576, 4
      %v2583 = vshrl.u32 %v2470, 16
      %v2585 = vrot.slane %v2583, 7
      %v2586 = vshll.u32 %v2470, 16
      %v2588 = vor.u32 %v2585, %v2586
      %v2589 = vsel %vm2485, %v2581, %v2588
      %v2590 = vrot.slane %v2585, 4
      %v2592 = vshrl.u32 %v2367, 16
      %v2594 = vrot.slane %v2592, 7
      %v2595 = vshll.u32 %v2367, 16
      %v2597 = vor.u32 %v2594, %v2595
      %v2598 = vrot.slane %v2594, 4
      %v2600 = vshrl.u32 %v2368, 16
      %v2602 = vrot.slane %v2600, 7
      %v2603 = vshll.u32 %v2368, 16
      %v2605 = vor.u32 %v2602, %v2603
      %v2606 = vsel %vm2485, %v2598, %v2605
      %v2607 = vrot.slane %v2602, 4
      %v2609 = vshrl.u32 %v2369, 16
      %v2611 = vrot.slane %v2609, 7
      %v2612 = vshll.u32 %v2369, 16
      %v2614 = vor.u32 %v2611, %v2612
      %v2615 = vsel %vm2485, %v2607, %v2614
      %v2616 = vrot.slane %v2611, 4
      %v2618 = vshrl.u32 %v2370, 16
      %v2620 = vrot.slane %v2618, 7
      %v2621 = vshll.u32 %v2370, 16
      %v2623 = vor.u32 %v2620, %v2621
      %v2624 = vsel %vm2485, %v2616, %v2623
      %v2625 = vrot.slane %v2620, 4
      %v2627 = vshrl.u32 %v2471, 16
      %v2629 = vrot.slane %v2627, 7
      %v2630 = vshll.u32 %v2471, 16
      %v2632 = vor.u32 %v2629, %v2630
      %v2633 = vrot.slane %v2629, 4
      %v2635 = vshrl.u32 %v2472, 16
      %v2637 = vrot.slane %v2635, 7
      %v2638 = vshll.u32 %v2472, 16
      %v2640 = vor.u32 %v2637, %v2638
      %v2641 = vsel %vm2485, %v2633, %v2640
      %v2642 = vrot.slane %v2637, 4
      %v2644 = vshrl.u32 %v2473, 16
      %v2646 = vrot.slane %v2644, 7
      %v2647 = vshll.u32 %v2473, 16
      %v2649 = vor.u32 %v2646, %v2647
      %v2650 = vsel %vm2485, %v2642, %v2649
      %v2651 = vrot.slane %v2646, 4
      %v2653 = vshrl.u32 %v2474, 16
      %v2655 = vrot.slane %v2653, 7
      %v2656 = vshll.u32 %v2474, 16
      %v2658 = vor.u32 %v2655, %v2656
      %v2659 = vsel %vm2485, %v2651, %v2658
      %v2660 = vrot.slane %v2655, 4
      %v2662 = vshrl.u32 %v2371, 16
      %v2664 = vrot.slane %v2662, 7
      %v2665 = vshll.u32 %v2371, 16
      %v2667 = vor.u32 %v2664, %v2665
      %v2668 = vrot.slane %v2664, 4
      %v2670 = vshrl.u32 %v2372, 16
      %v2672 = vrot.slane %v2670, 7
      %v2673 = vshll.u32 %v2372, 16
      %v2675 = vor.u32 %v2672, %v2673
      %v2676 = vsel %vm2485, %v2668, %v2675
      %v2677 = vrot.slane %v2672, 4
      %v2679 = vshrl.u32 %v2373, 16
      %v2681 = vrot.slane %v2679, 7
      %v2682 = vshll.u32 %v2373, 16
      %v2684 = vor.u32 %v2681, %v2682
      %v2685 = vsel %vm2485, %v2677, %v2684
      %v2686 = vrot.slane %v2681, 4
      %v2688 = vshrl.u32 %v2374, 16
      %v2690 = vrot.slane %v2688, 7
      %v2691 = vshll.u32 %v2374, 16
      %v2693 = vor.u32 %v2690, %v2691
      %v2694 = vsel %vm2485, %v2686, %v2693
      %v2695 = vrot.slane %v2690, 4
      %v2697 = vshrl.u32 %v2475, 16
      %v2699 = vrot.slane %v2697, 7
      %v2700 = vshll.u32 %v2475, 16
      %v2702 = vor.u32 %v2699, %v2700
      %v2703 = vrot.slane %v2699, 4
      %v2705 = vshrl.u32 %v2476, 16
      %v2707 = vrot.slane %v2705, 7
      %v2708 = vshll.u32 %v2476, 16
      %v2710 = vor.u32 %v2707, %v2708
      %v2711 = vsel %vm2485, %v2703, %v2710
      %v2712 = vrot.slane %v2707, 4
      %v2714 = vshrl.u32 %v2477, 16
      %v2716 = vrot.slane %v2714, 7
      %v2717 = vshll.u32 %v2477, 16
      %v2719 = vor.u32 %v2716, %v2717
      %v2720 = vsel %vm2485, %v2712, %v2719
      %v2721 = vrot.slane %v2716, 4
      %v2723 = vshrl.u32 %v2478, 16
      %v2725 = vrot.slane %v2723, 7
      %v2726 = vshll.u32 %v2478, 16
      %v2728 = vor.u32 %v2725, %v2726
      %v2729 = vsel %vm2485, %v2721, %v2728
      %v2730 = vrot.slane %v2725, 4
      %v2732 = vshrl.u32 %v2375, 16
      %v2734 = vrot.slane %v2732, 7
      %v2735 = vshll.u32 %v2375, 16
      %v2737 = vor.u32 %v2734, %v2735
      %v2738 = vrot.slane %v2734, 4
      %v2740 = vshrl.u32 %v2376, 16
      %v2742 = vrot.slane %v2740, 7
      %v2743 = vshll.u32 %v2376, 16
      %v2745 = vor.u32 %v2742, %v2743
      %v2746 = vsel %vm2485, %v2738, %v2745
      %v2747 = vrot.slane %v2742, 4
      %v2749 = vshrl.u32 %v2377, 16
      %v2751 = vrot.slane %v2749, 7
      %v2752 = vshll.u32 %v2377, 16
      %v2754 = vor.u32 %v2751, %v2752
      %v2755 = vsel %vm2485, %v2747, %v2754
      %v2756 = vrot.slane %v2751, 4
      %v2758 = vshrl.u32 %v2378, 16
      %v2760 = vrot.slane %v2758, 7
      %v2761 = vshll.u32 %v2378, 16
      %v2763 = vor.u32 %v2760, %v2761
      %v2764 = vsel %vm2485, %v2756, %v2763
      %v2765 = vrot.slane %v2760, 4
      %v2767 = vshrl.u32 %v2479, 16
      %v2769 = vrot.slane %v2767, 7
      %v2770 = vshll.u32 %v2479, 16
      %v2772 = vor.u32 %v2769, %v2770
      %v2773 = vrot.slane %v2769, 4
      %v2775 = vshrl.u32 %v2480, 16
      %v2777 = vrot.slane %v2775, 7
      %v2778 = vshll.u32 %v2480, 16
      %v2780 = vor.u32 %v2777, %v2778
      %v2781 = vsel %vm2485, %v2773, %v2780
      %v2782 = vrot.slane %v2777, 4
      %v2784 = vshrl.u32 %v2481, 16
      %v2786 = vrot.slane %v2784, 7
      %v2787 = vshll.u32 %v2481, 16
      %v2789 = vor.u32 %v2786, %v2787
      %v2790 = vsel %vm2485, %v2782, %v2789
      %v2791 = vrot.slane %v2786, 4
      %v2793 = vshrl.u32 %v2482, 16
      %v2795 = vrot.slane %v2793, 7
      %v2796 = vshll.u32 %v2482, 16
      %v2798 = vor.u32 %v2795, %v2796
      %v2799 = vsel %vm2485, %v2791, %v2798
      %v2800 = vrot.slane %v2795, 4
      %v2802 = vshrl.u32 %v2379, 16
      %v2804 = vrot.slane %v2802, 7
      %v2805 = vshll.u32 %v2379, 16
      %v2807 = vor.u32 %v2804, %v2805
      %v2808 = vrot.slane %v2804, 4
      %v2810 = vshrl.u32 %v2380, 16
      %v2812 = vrot.slane %v2810, 7
      %v2813 = vshll.u32 %v2380, 16
      %v2815 = vor.u32 %v2812, %v2813
      %v2816 = vsel %vm2485, %v2808, %v2815
      %v2817 = vrot.slane %v2812, 4
      %v2819 = vshrl.u32 %v2381, 16
      %v2821 = vrot.slane %v2819, 7
      %v2822 = vshll.u32 %v2381, 16
      %v2824 = vor.u32 %v2821, %v2822
      %v2825 = vsel %vm2485, %v2817, %v2824
      %v2826 = vrot.slane %v2821, 4
      %v2828 = vshrl.u32 %v2382, 16
      %v2830 = vrot.slane %v2828, 7
      %v2831 = vshll.u32 %v2382, 16
      %v2833 = vor.u32 %v2830, %v2831
      %v2834 = vsel %vm2485, %v2826, %v2833
      %v2835 = vrot.slane %v2830, 4
      %vm2886 = vcmask 60416
      %vm2887 = vsmask.f32 7938
      %vm2888 = vmand %vm2886, %vm2887
      %v2889 = vld [vmem:[#allocation2] sm:$0xf]
      %v2890 = vsel %vm2888, %v2492, %v2889
      %2891 = vst [vmem:[#allocation2] sm:$0xf] %v2890
      %vm2892 = vcmask 60416
      %2893 = vst.msk [vmem:[#allocation2 + $0x4] sm:$0xf] %vm2892, %v2501
      %2894 = vst.msk [vmem:[#allocation2 + $0x8] sm:$0xf] %vm2892, %v2510
      %2895 = vst.msk [vmem:[#allocation2 + $0xc] sm:$0xf] %vm2892, %v2519
      %vm2896 = vcmask 57344
      %vm2897 = vmand %vm2896, %vm2483
      %v2898 = vld [vmem:[#allocation2 + $0x10] sm:$0x1]
      %v2899 = vsel %vm2897, %v2520, %v2898
      %2900 = vst [vmem:[#allocation2 + $0x10] sm:$0x1] %v2899
      %v2901 = vld [vmem:[#allocation2 + $0x14] sm:$0xf]
      %v2902 = vsel %vm2888, %v2527, %v2901
      %2903 = vst [vmem:[#allocation2 + $0x14] sm:$0xf] %v2902
      %2904 = vst.msk [vmem:[#allocation2 + $0x18] sm:$0xf] %vm2892, %v2536
      %2905 = vst.msk [vmem:[#allocation2 + $0x1c] sm:$0xf] %vm2892, %v2545
      %2906 = vst.msk [vmem:[#allocation2 + $0x20] sm:$0xf] %vm2892, %v2554
      %v2907 = vld [vmem:[#allocation2 + $0x24] sm:$0x1]
      %v2908 = vsel %vm2897, %v2555, %v2907
      %2909 = vst [vmem:[#allocation2 + $0x24] sm:$0x1] %v2908
      %v2910 = vld [vmem:[#allocation2 + $0x28] sm:$0xf]
      %v2911 = vsel %vm2888, %v2562, %v2910
      %2912 = vst [vmem:[#allocation2 + $0x28] sm:$0xf] %v2911
      %2913 = vst.msk [vmem:[#allocation2 + $0x2c] sm:$0xf] %vm2892, %v2571
      %2914 = vst.msk [vmem:[#allocation2 + $0x30] sm:$0xf] %vm2892, %v2580
      %2915 = vst.msk [vmem:[#allocation2 + $0x34] sm:$0xf] %vm2892, %v2589
      %v2916 = vld [vmem:[#allocation2 + $0x38] sm:$0x1]
      %v2917 = vsel %vm2897, %v2590, %v2916
      %2918 = vst [vmem:[#allocation2 + $0x38] sm:$0x1] %v2917
      %v2919 = vld [vmem:[#allocation2 + $0x3c] sm:$0xf]
      %v2920 = vsel %vm2888, %v2597, %v2919
      %2921 = vst [vmem:[#allocation2 + $0x3c] sm:$0xf] %v2920
      %2922 = vst.msk [vmem:[#allocation2 + $0x40] sm:$0xf] %vm2892, %v2606
      %2923 = vst.msk [vmem:[#allocation2 + $0x44] sm:$0xf] %vm2892, %v2615
      %2924 = vst.msk [vmem:[#allocation2 + $0x48] sm:$0xf] %vm2892, %v2624
      %v2925 = vld [vmem:[#allocation2 + $0x4c] sm:$0x1]
      %v2926 = vsel %vm2897, %v2625, %v2925
      %2927 = vst [vmem:[#allocation2 + $0x4c] sm:$0x1] %v2926
      %v2928 = vld [vmem:[#allocation2 + $0x50] sm:$0xf]
      %v2929 = vsel %vm2888, %v2632, %v2928
      %2930 = vst [vmem:[#allocation2 + $0x50] sm:$0xf] %v2929
      %2931 = vst.msk [vmem:[#allocation2 + $0x54] sm:$0xf] %vm2892, %v2641
      %2932 = vst.msk [vmem:[#allocation2 + $0x58] sm:$0xf] %vm2892, %v2650
      %2933 = vst.msk [vmem:[#allocation2 + $0x5c] sm:$0xf] %vm2892, %v2659
      %v2934 = vld [vmem:[#allocation2 + $0x60] sm:$0x1]
      %v2935 = vsel %vm2897, %v2660, %v2934
      %2936 = vst [vmem:[#allocation2 + $0x60] sm:$0x1] %v2935
      %v2937 = vld [vmem:[#allocation2 + $0x64] sm:$0xf]
      %v2938 = vsel %vm2888, %v2667, %v2937
      %2939 = vst [vmem:[#allocation2 + $0x64] sm:$0xf] %v2938
      %2940 = vst.msk [vmem:[#allocation2 + $0x68] sm:$0xf] %vm2892, %v2676
      %2941 = vst.msk [vmem:[#allocation2 + $0x6c] sm:$0xf] %vm2892, %v2685
      %2942 = vst.msk [vmem:[#allocation2 + $0x70] sm:$0xf] %vm2892, %v2694
      %v2943 = vld [vmem:[#allocation2 + $0x74] sm:$0x1]
      %v2944 = vsel %vm2897, %v2695, %v2943
      %2945 = vst [vmem:[#allocation2 + $0x74] sm:$0x1] %v2944
      %v2946 = vld [vmem:[#allocation2 + $0x78] sm:$0xf]
      %v2947 = vsel %vm2888, %v2702, %v2946
      %2948 = vst [vmem:[#allocation2 + $0x78] sm:$0xf] %v2947
      %2949 = vst.msk [vmem:[#allocation2 + $0x7c] sm:$0xf] %vm2892, %v2711
      %2950 = vst.msk [vmem:[#allocation2 + $0x80] sm:$0xf] %vm2892, %v2720
      %2951 = vst.msk [vmem:[#allocation2 + $0x84] sm:$0xf] %vm2892, %v2729
      %v2952 = vld [vmem:[#allocation2 + $0x88] sm:$0x1]
      %v2953 = vsel %vm2897, %v2730, %v2952
      %2954 = vst [vmem:[#allocation2 + $0x88] sm:$0x1] %v2953
      %v2955 = vld [vmem:[#allocation2 + $0x8c] sm:$0xf]
      %v2956 = vsel %vm2888, %v2737, %v2955
      %2957 = vst [vmem:[#allocation2 + $0x8c] sm:$0xf] %v2956
      %2958 = vst.msk [vmem:[#allocation2 + $0x90] sm:$0xf] %vm2892, %v2746
      %2959 = vst.msk [vmem:[#allocation2 + $0x94] sm:$0xf] %vm2892, %v2755
      %2960 = vst.msk [vmem:[#allocation2 + $0x98] sm:$0xf] %vm2892, %v2764
      %v2961 = vld [vmem:[#allocation2 + $0x9c] sm:$0x1]
      %v2962 = vsel %vm2897, %v2765, %v2961
      %2963 = vst [vmem:[#allocation2 + $0x9c] sm:$0x1] %v2962
      %v2964 = vld [vmem:[#allocation2 + $0xa0] sm:$0xf]
      %v2965 = vsel %vm2888, %v2772, %v2964
      %2966 = vst [vmem:[#allocation2 + $0xa0] sm:$0xf] %v2965
      %2967 = vst.msk [vmem:[#allocation2 + $0xa4] sm:$0xf] %vm2892, %v2781
      %2968 = vst.msk [vmem:[#allocation2 + $0xa8] sm:$0xf] %vm2892, %v2790
      %2969 = vst.msk [vmem:[#allocation2 + $0xac] sm:$0xf] %vm2892, %v2799
      %v2970 = vld [vmem:[#allocation2 + $0xb0] sm:$0x1]
      %v2971 = vsel %vm2897, %v2800, %v2970
      %2972 = vst [vmem:[#allocation2 + $0xb0] sm:$0x1] %v2971
      %v2973 = vld [vmem:[#allocation2 + $0xb4] sm:$0xf]
      %v2974 = vsel %vm2888, %v2807, %v2973
      %2975 = vst [vmem:[#allocation2 + $0xb4] sm:$0xf] %v2974
      %2976 = vst.msk [vmem:[#allocation2 + $0xb8] sm:$0xf] %vm2892, %v2816
      %2977 = vst.msk [vmem:[#allocation2 + $0xbc] sm:$0xf] %vm2892, %v2825
      %2978 = vst.msk [vmem:[#allocation2 + $0xc0] sm:$0xf] %vm2892, %v2834
      %v2979 = vld [vmem:[#allocation2 + $0xc4] sm:$0x1]
      %v2980 = vsel %vm2897, %v2835, %v2979
      %2981 = vst [vmem:[#allocation2 + $0xc4] sm:$0x1] %v2980
      %v2982 = vrot.slane %v2487, 4
      %v2983 = vrot.slane %v2982, 4
      %v2984 = vrot.slane %v2522, 4
      %v2985 = vrot.slane %v2984, 4
      %v2986 = vrot.slane %v2557, 4
      %v2987 = vrot.slane %v2986, 4
      %v2988 = vrot.slane %v2592, 4
      %v2989 = vrot.slane %v2988, 4
      %v2990 = vrot.slane %v2627, 4
      %v2991 = vrot.slane %v2990, 4
      %v2992 = vrot.slane %v2662, 4
      %v2993 = vrot.slane %v2992, 4
      %v2994 = vrot.slane %v2697, 4
      %v2995 = vrot.slane %v2994, 4
      %v2996 = vrot.slane %v2732, 4
      %v2997 = vrot.slane %v2996, 4
      %v2998 = vrot.slane %v2767, 4
      %v2999 = vrot.slane %v2998, 4
      %v3000 = vrot.slane %v2802, 4
      %v3001 = vrot.slane %v3000, 4
      %v3012 = vld [vmem:[#allocation2] sm:$0x1]
      %v3013 = vsel %vm2897, %v2983, %v3012
      %3014 = vst [vmem:[#allocation2] sm:$0x1] %v3013
      %v3015 = vld [vmem:[#allocation2 + $0x14] sm:$0x1]
      %v3016 = vsel %vm2897, %v2985, %v3015
      %3017 = vst [vmem:[#allocation2 + $0x14] sm:$0x1] %v3016
      %v3018 = vld [vmem:[#allocation2 + $0x28] sm:$0x1]
      %v3019 = vsel %vm2897, %v2987, %v3018
      %3020 = vst [vmem:[#allocation2 + $0x28] sm:$0x1] %v3019
      %v3021 = vld [vmem:[#allocation2 + $0x3c] sm:$0x1]
      %v3022 = vsel %vm2897, %v2989, %v3021
      %3023 = vst [vmem:[#allocation2 + $0x3c] sm:$0x1] %v3022
      %v3024 = vld [vmem:[#allocation2 + $0x50] sm:$0x1]
      %v3025 = vsel %vm2897, %v2991, %v3024
      %3026 = vst [vmem:[#allocation2 + $0x50] sm:$0x1] %v3025
      %v3027 = vld [vmem:[#allocation2 + $0x64] sm:$0x1]
      %v3028 = vsel %vm2897, %v2993, %v3027
      %3029 = vst [vmem:[#allocation2 + $0x64] sm:$0x1] %v3028
      %v3030 = vld [vmem:[#allocation2 + $0x78] sm:$0x1]
      %v3031 = vsel %vm2897, %v2995, %v3030
      %3032 = vst [vmem:[#allocation2 + $0x78] sm:$0x1] %v3031
      %v3033 = vld [vmem:[#allocation2 + $0x8c] sm:$0x1]
      %v3034 = vsel %vm2897, %v2997, %v3033
      %3035 = vst [vmem:[#allocation2 + $0x8c] sm:$0x1] %v3034
      %v3036 = vld [vmem:[#allocation2 + $0xa0] sm:$0x1]
      %v3037 = vsel %vm2897, %v2999, %v3036
      %3038 = vst [vmem:[#allocation2 + $0xa0] sm:$0x1] %v3037
      %v3039 = vld [vmem:[#allocation2 + $0xb4] sm:$0x1]
      %v3040 = vsel %vm2897, %v3001, %v3039
      %3041 = vst [vmem:[#allocation2 + $0xb4] sm:$0x1] %v3040
      %v3042 = vrot.slane %v2516, 7
      %v3043 = vrot.slane %v3042, 4
      %v3044 = vrot.slane %v2551, 7
      %v3045 = vrot.slane %v3044, 4
      %v3046 = vrot.slane %v2586, 7
      %v3047 = vrot.slane %v3046, 4
      %v3048 = vrot.slane %v2621, 7
      %v3049 = vrot.slane %v3048, 4
      %v3050 = vrot.slane %v2656, 7
      %v3051 = vrot.slane %v3050, 4
      %v3052 = vrot.slane %v2691, 7
      %v3053 = vrot.slane %v3052, 4
      %v3054 = vrot.slane %v2726, 7
      %v3055 = vrot.slane %v3054, 4
      %v3056 = vrot.slane %v2761, 7
      %v3057 = vrot.slane %v3056, 4
      %v3058 = vrot.slane %v2796, 7
      %v3059 = vrot.slane %v3058, 4
      %v3060 = vrot.slane %v2831, 7
      %v3061 = vrot.slane %v3060, 4
      %vm3072 = vmand %vm2896, %vm2887
      %v3073 = vld [vmem:[#allocation2 + $0x10] sm:$0x1]
      %v3074 = vsel %vm3072, %v3043, %v3073
      %3075 = vst [vmem:[#allocation2 + $0x10] sm:$0x1] %v3074
      %v3076 = vld [vmem:[#allocation2 + $0x24] sm:$0x1]
      %v3077 = vsel %vm3072, %v3045, %v3076
      %3078 = vst [vmem:[#allocation2 + $0x24] sm:$0x1] %v3077
      %v3079 = vld [vmem:[#allocation2 + $0x38] sm:$0x1]
      %v3080 = vsel %vm3072, %v3047, %v3079
      %3081 = vst [vmem:[#allocation2 + $0x38] sm:$0x1] %v3080
      %v3082 = vld [vmem:[#allocation2 + $0x4c] sm:$0x1]
      %v3083 = vsel %vm3072, %v3049, %v3082
      %3084 = vst [vmem:[#allocation2 + $0x4c] sm:$0x1] %v3083
      %v3085 = vld [vmem:[#allocation2 + $0x60] sm:$0x1]
      %v3086 = vsel %vm3072, %v3051, %v3085
      %3087 = vst [vmem:[#allocation2 + $0x60] sm:$0x1] %v3086
      %v3088 = vld [vmem:[#allocation2 + $0x74] sm:$0x1]
      %v3089 = vsel %vm3072, %v3053, %v3088
      %3090 = vst [vmem:[#allocation2 + $0x74] sm:$0x1] %v3089
      %v3091 = vld [vmem:[#allocation2 + $0x88] sm:$0x1]
      %v3092 = vsel %vm3072, %v3055, %v3091
      %3093 = vst [vmem:[#allocation2 + $0x88] sm:$0x1] %v3092
      %v3094 = vld [vmem:[#allocation2 + $0x9c] sm:$0x1]
      %v3095 = vsel %vm3072, %v3057, %v3094
      %3096 = vst [vmem:[#allocation2 + $0x9c] sm:$0x1] %v3095
      %v3097 = vld [vmem:[#allocation2 + $0xb0] sm:$0x1]
      %v3098 = vsel %vm3072, %v3059, %v3097
      %3099 = vst [vmem:[#allocation2 + $0xb0] sm:$0x1] %v3098
      %v3100 = vld [vmem:[#allocation2 + $0xc4] sm:$0x1]
      %v3101 = vsel %vm3072, %v3061, %v3100
      %3102 = vst [vmem:[#allocation2 + $0xc4] sm:$0x1] %v3101
      %p3103 = scmp.eq.s32.totalorder %s21, 0
      // Predicated region
      $region41: #{progan_generator_block.1} parent=39 // pred_check
        %p3104 = pneg %p3103
      $region42: #{progan_generator_block.1} parent=39 // pred_check_branch
        %3106 = sbr.rel (%p3104) target = $region44
      $region43: #{progan_generator_block.1} parent=39 // pred_region
        %s3107 = scalar_lea.vmem [#allocation2], 40
        %v3108 = vld [vmem:[%s3107] sm:$0xf]
        %v3109 = vld [vmem:[%s3107 + $0x4] sm:$0xf]
        %v3110 = vld [vmem:[%s3107 + $0x8] sm:$0xf]
        %v3111 = vld [vmem:[%s3107 + $0xc] sm:$0xf]
        %v3112 = vld [vmem:[%s3107 + $0x10] sm:$0x1]
        %3113 = vst.msk [vmem:[#allocation2] sm:$0xf] %vm2892, %v3108
        %3114 = vst.msk [vmem:[#allocation2 + $0x4] sm:$0xf] %vm2892, %v3109
        %3115 = vst.msk [vmem:[#allocation2 + $0x8] sm:$0xf] %vm2892, %v3110
        %3116 = vst.msk [vmem:[#allocation2 + $0xc] sm:$0xf] %vm2892, %v3111
        %vm3117 = vcmask 57344
        %3118 = vst.msk [vmem:[#allocation2 + $0x10] sm:$0x1] %vm3117, %v3112
      $region44: #{progan_generator_block.1} parent=39 // pred_fallthru
        _
      %p3119 = scmp.eq.s32.totalorder %s21, 3
      // Predicated region
      $region45: #{progan_generator_block.1} parent=39 // pred_check
        %p3120 = pneg %p3119
      $region46: #{progan_generator_block.1} parent=39 // pred_check_branch
        %3122 = sbr.rel (%p3120) target = $region48
      $region47: #{progan_generator_block.1} parent=39 // pred_region
        %s3123 = scalar_lea.vmem [#allocation2], 140
        %v3124 = vld [vmem:[%s3123] sm:$0xf]
        %v3125 = vld [vmem:[%s3123 + $0x4] sm:$0xf]
        %v3126 = vld [vmem:[%s3123 + $0x8] sm:$0xf]
        %v3127 = vld [vmem:[%s3123 + $0xc] sm:$0xf]
        %v3128 = vld [vmem:[%s3123 + $0x10] sm:$0x1]
        %s3129 = scalar_lea.vmem [#allocation2], 180
        %3130 = vst.msk [vmem:[%s3129] sm:$0xf] %vm2892, %v3124
        %3131 = vst.msk [vmem:[%s3129 + $0x4] sm:$0xf] %vm2892, %v3125
        %3132 = vst.msk [vmem:[%s3129 + $0x8] sm:$0xf] %vm2892, %v3126
        %3133 = vst.msk [vmem:[%s3129 + $0xc] sm:$0xf] %vm2892, %v3127
        %vm3134 = vcmask 57344
        %3135 = vst.msk [vmem:[%s3129 + $0x10] sm:$0x1] %vm3134, %v3128
      $region48: #{progan_generator_block.1} parent=39 // pred_fallthru
        _
      %v3136 = vld [vmem:[#allocation2] sm:$0xf]
      %v3137 = vld [vmem:[#allocation2 + $0x4] sm:$0xf]
      %v3138 = vld [vmem:[#allocation2 + $0x8] sm:$0xf]
      %v3139 = vld [vmem:[#allocation2 + $0xc] sm:$0xf]
      %v3140 = vld [vmem:[#allocation2 + $0x14] sm:$0xf]
      %v3141 = vld [vmem:[#allocation2 + $0x18] sm:$0xf]
      %v3142 = vld [vmem:[#allocation2 + $0x1c] sm:$0xf]
      %v3143 = vld [vmem:[#allocation2 + $0x20] sm:$0xf]
      %v3144 = vld [vmem:[#allocation2 + $0x28] sm:$0xf]
      %v3145 = vld [vmem:[#allocation2 + $0x2c] sm:$0xf]
      %v3146 = vld [vmem:[#allocation2 + $0x30] sm:$0xf]
      %v3147 = vld [vmem:[#allocation2 + $0x34] sm:$0xf]
      %v3148 = vld [vmem:[#allocation2 + $0x3c] sm:$0xf]
      %v3149 = vld [vmem:[#allocation2 + $0x40] sm:$0xf]
      %v3150 = vld [vmem:[#allocation2 + $0x44] sm:$0xf]
      %v3151 = vld [vmem:[#allocation2 + $0x48] sm:$0xf]
      %v3152 = vld [vmem:[#allocation2 + $0x50] sm:$0xf]
      %v3153 = vld [vmem:[#allocation2 + $0x54] sm:$0xf]
      %v3154 = vld [vmem:[#allocation2 + $0x58] sm:$0xf]
      %v3155 = vld [vmem:[#allocation2 + $0x5c] sm:$0xf]
      %v3156 = vld [vmem:[#allocation2 + $0x64] sm:$0xf]
      %v3157 = vld [vmem:[#allocation2 + $0x68] sm:$0xf]
      %v3158 = vld [vmem:[#allocation2 + $0x6c] sm:$0xf]
      %v3159 = vld [vmem:[#allocation2 + $0x70] sm:$0xf]
      %v3160 = vld [vmem:[#allocation2 + $0x78] sm:$0xf]
      %v3161 = vld [vmem:[#allocation2 + $0x7c] sm:$0xf]
      %v3162 = vld [vmem:[#allocation2 + $0x80] sm:$0xf]
      %v3163 = vld [vmem:[#allocation2 + $0x84] sm:$0xf]
      %v3164 = vld [vmem:[#allocation2 + $0x8c] sm:$0xf]
      %v3165 = vld [vmem:[#allocation2 + $0x90] sm:$0xf]
      %v3166 = vld [vmem:[#allocation2 + $0x94] sm:$0xf]
      %v3167 = vld [vmem:[#allocation2 + $0x98] sm:$0xf]
      %v3168 = vld [vmem:[%s3] sm:$0xf]
      %v3169 = vld [vmem:[#allocation2 + $0x10] sm:$0x1]
      %v3170 = vld [vmem:[#allocation2 + $0x24] sm:$0x1]
      %v3171 = vld [vmem:[#allocation2 + $0x38] sm:$0x1]
      %v3172 = vld [vmem:[#allocation2 + $0x4c] sm:$0x1]
      %v3173 = vld [vmem:[#allocation2 + $0x60] sm:$0x1]
      %v3174 = vld [vmem:[#allocation2 + $0x74] sm:$0x1]
      %v3175 = vld [vmem:[#allocation2 + $0x88] sm:$0x1]
      %v3176 = vld [vmem:[#allocation2 + $0x9c] sm:$0x1]
      %v3178 = vshrl.u32 %v3136, 16
      %v3180 = vrot.slane %v3178, 4
      %v3181 = vshll.u32 %v3136, 16
      %v3183 = vrot.slane %v3181, 5
      %v3184 = vor.u32 %v3180, %v3183
      %v3185 = vrot.slane %v3184, 4
      %v3187 = vshll.u32 %v3137, 16
      %v3189 = vrot.slane %v3187, 5
      %v3190 = vsel %vm285, %v3185, %v3189
      %v3191 = vshrl.u32 %v3137, 16
      %v3193 = vrot.slane %v3191, 4
      %v3194 = vor.u32 %v3193, %v3189
      %v3195 = vrot.slane %v3194, 4
      %v3197 = vshll.u32 %v3138, 16
      %v3199 = vrot.slane %v3197, 5
      %v3200 = vsel %vm285, %v3195, %v3199
      %v3201 = vshrl.u32 %v3138, 16
      %v3203 = vrot.slane %v3201, 4
      %v3204 = vor.u32 %v3203, %v3199
      %v3205 = vrot.slane %v3204, 4
      %v3207 = vshll.u32 %v3139, 16
      %v3209 = vrot.slane %v3207, 5
      %v3210 = vsel %vm285, %v3205, %v3209
      %v3211 = vshrl.u32 %v3139, 16
      %v3213 = vrot.slane %v3211, 4
      %v3214 = vor.u32 %v3213, %v3209
      %v3215 = vrot.slane %v3214, 4
      %v3217 = vshll.u32 %v3169, 16
      %v3219 = vrot.slane %v3217, 5
      %v3220 = vsel %vm285, %v3215, %v3219
      %v3222 = vshrl.u32 %v3140, 16
      %v3224 = vrot.slane %v3222, 4
      %v3225 = vshll.u32 %v3140, 16
      %v3227 = vrot.slane %v3225, 5
      %v3228 = vor.u32 %v3224, %v3227
      %v3229 = vrot.slane %v3228, 4
      %v3231 = vshll.u32 %v3141, 16
      %v3233 = vrot.slane %v3231, 5
      %v3234 = vsel %vm285, %v3229, %v3233
      %v3235 = vshrl.u32 %v3141, 16
      %v3237 = vrot.slane %v3235, 4
      %v3238 = vor.u32 %v3237, %v3233
      %v3239 = vrot.slane %v3238, 4
      %v3241 = vshll.u32 %v3142, 16
      %v3243 = vrot.slane %v3241, 5
      %v3244 = vsel %vm285, %v3239, %v3243
      %v3245 = vshrl.u32 %v3142, 16
      %v3247 = vrot.slane %v3245, 4
      %v3248 = vor.u32 %v3247, %v3243
      %v3249 = vrot.slane %v3248, 4
      %v3251 = vshll.u32 %v3143, 16
      %v3253 = vrot.slane %v3251, 5
      %v3254 = vsel %vm285, %v3249, %v3253
      %v3255 = vshrl.u32 %v3143, 16
      %v3257 = vrot.slane %v3255, 4
      %v3258 = vor.u32 %v3257, %v3253
      %v3259 = vrot.slane %v3258, 4
      %v3261 = vshll.u32 %v3170, 16
      %v3263 = vrot.slane %v3261, 5
      %v3264 = vsel %vm285, %v3259, %v3263
      %v3266 = vshrl.u32 %v3144, 16
      %v3268 = vrot.slane %v3266, 4
      %v3269 = vshll.u32 %v3144, 16
      %v3271 = vrot.slane %v3269, 5
      %v3272 = vor.u32 %v3268, %v3271
      %v3273 = vrot.slane %v3272, 4
      %v3275 = vshll.u32 %v3145, 16
      %v3277 = vrot.slane %v3275, 5
      %v3278 = vsel %vm285, %v3273, %v3277
      %v3279 = vshrl.u32 %v3145, 16
      %v3281 = vrot.slane %v3279, 4
      %v3282 = vor.u32 %v3281, %v3277
      %v3283 = vrot.slane %v3282, 4
      %v3285 = vshll.u32 %v3146, 16
      %v3287 = vrot.slane %v3285, 5
      %v3288 = vsel %vm285, %v3283, %v3287
      %v3289 = vshrl.u32 %v3146, 16
      %v3291 = vrot.slane %v3289, 4
      %v3292 = vor.u32 %v3291, %v3287
      %v3293 = vrot.slane %v3292, 4
      %v3295 = vshll.u32 %v3147, 16
      %v3297 = vrot.slane %v3295, 5
      %v3298 = vsel %vm285, %v3293, %v3297
      %v3299 = vshrl.u32 %v3147, 16
      %v3301 = vrot.slane %v3299, 4
      %v3302 = vor.u32 %v3301, %v3297
      %v3303 = vrot.slane %v3302, 4
      %v3305 = vshll.u32 %v3171, 16
      %v3307 = vrot.slane %v3305, 5
      %v3308 = vsel %vm285, %v3303, %v3307
      %v3310 = vshrl.u32 %v3148, 16
      %v3312 = vrot.slane %v3310, 4
      %v3313 = vshll.u32 %v3148, 16
      %v3315 = vrot.slane %v3313, 5
      %v3316 = vor.u32 %v3312, %v3315
      %v3317 = vrot.slane %v3316, 4
      %v3319 = vshll.u32 %v3149, 16
      %v3321 = vrot.slane %v3319, 5
      %v3322 = vsel %vm285, %v3317, %v3321
      %v3323 = vshrl.u32 %v3149, 16
      %v3325 = vrot.slane %v3323, 4
      %v3326 = vor.u32 %v3325, %v3321
      %v3327 = vrot.slane %v3326, 4
      %v3329 = vshll.u32 %v3150, 16
      %v3331 = vrot.slane %v3329, 5
      %v3332 = vsel %vm285, %v3327, %v3331
      %v3333 = vshrl.u32 %v3150, 16
      %v3335 = vrot.slane %v3333, 4
      %v3336 = vor.u32 %v3335, %v3331
      %v3337 = vrot.slane %v3336, 4
      %v3339 = vshll.u32 %v3151, 16
      %v3341 = vrot.slane %v3339, 5
      %v3342 = vsel %vm285, %v3337, %v3341
      %v3343 = vshrl.u32 %v3151, 16
      %v3345 = vrot.slane %v3343, 4
      %v3346 = vor.u32 %v3345, %v3341
      %v3347 = vrot.slane %v3346, 4
      %v3349 = vshll.u32 %v3172, 16
      %v3351 = vrot.slane %v3349, 5
      %v3352 = vsel %vm285, %v3347, %v3351
      %v3354 = vshrl.u32 %v3152, 16
      %v3356 = vrot.slane %v3354, 4
      %v3357 = vshll.u32 %v3152, 16
      %v3359 = vrot.slane %v3357, 5
      %v3360 = vor.u32 %v3356, %v3359
      %v3361 = vrot.slane %v3360, 4
      %v3363 = vshll.u32 %v3153, 16
      %v3365 = vrot.slane %v3363, 5
      %v3366 = vsel %vm285, %v3361, %v3365
      %v3367 = vshrl.u32 %v3153, 16
      %v3369 = vrot.slane %v3367, 4
      %v3370 = vor.u32 %v3369, %v3365
      %v3371 = vrot.slane %v3370, 4
      %v3373 = vshll.u32 %v3154, 16
      %v3375 = vrot.slane %v3373, 5
      %v3376 = vsel %vm285, %v3371, %v3375
      %v3377 = vshrl.u32 %v3154, 16
      %v3379 = vrot.slane %v3377, 4
      %v3380 = vor.u32 %v3379, %v3375
      %v3381 = vrot.slane %v3380, 4
      %v3383 = vshll.u32 %v3155, 16
      %v3385 = vrot.slane %v3383, 5
      %v3386 = vsel %vm285, %v3381, %v3385
      %v3387 = vshrl.u32 %v3155, 16
      %v3389 = vrot.slane %v3387, 4
      %v3390 = vor.u32 %v3389, %v3385
      %v3391 = vrot.slane %v3390, 4
      %v3393 = vshll.u32 %v3173, 16
      %v3395 = vrot.slane %v3393, 5
      %v3396 = vsel %vm285, %v3391, %v3395
      %v3398 = vshrl.u32 %v3156, 16
      %v3400 = vrot.slane %v3398, 4
      %v3401 = vshll.u32 %v3156, 16
      %v3403 = vrot.slane %v3401, 5
      %v3404 = vor.u32 %v3400, %v3403
      %v3405 = vrot.slane %v3404, 4
      %v3407 = vshll.u32 %v3157, 16
      %v3409 = vrot.slane %v3407, 5
      %v3410 = vsel %vm285, %v3405, %v3409
      %v3411 = vshrl.u32 %v3157, 16
      %v3413 = vrot.slane %v3411, 4
      %v3414 = vor.u32 %v3413, %v3409
      %v3415 = vrot.slane %v3414, 4
      %v3417 = vshll.u32 %v3158, 16
      %v3419 = vrot.slane %v3417, 5
      %v3420 = vsel %vm285, %v3415, %v3419
      %v3421 = vshrl.u32 %v3158, 16
      %v3423 = vrot.slane %v3421, 4
      %v3424 = vor.u32 %v3423, %v3419
      %v3425 = vrot.slane %v3424, 4
      %v3427 = vshll.u32 %v3159, 16
      %v3429 = vrot.slane %v3427, 5
      %v3430 = vsel %vm285, %v3425, %v3429
      %v3431 = vshrl.u32 %v3159, 16
      %v3433 = vrot.slane %v3431, 4
      %v3434 = vor.u32 %v3433, %v3429
      %v3435 = vrot.slane %v3434, 4
      %v3437 = vshll.u32 %v3174, 16
      %v3439 = vrot.slane %v3437, 5
      %v3440 = vsel %vm285, %v3435, %v3439
      %v3442 = vshrl.u32 %v3160, 16
      %v3444 = vrot.slane %v3442, 4
      %v3445 = vshll.u32 %v3160, 16
      %v3447 = vrot.slane %v3445, 5
      %v3448 = vor.u32 %v3444, %v3447
      %v3449 = vrot.slane %v3448, 4
      %v3451 = vshll.u32 %v3161, 16
      %v3453 = vrot.slane %v3451, 5
      %v3454 = vsel %vm285, %v3449, %v3453
      %v3455 = vshrl.u32 %v3161, 16
      %v3457 = vrot.slane %v3455, 4
      %v3458 = vor.u32 %v3457, %v3453
      %v3459 = vrot.slane %v3458, 4
      %v3461 = vshll.u32 %v3162, 16
      %v3463 = vrot.slane %v3461, 5
      %v3464 = vsel %vm285, %v3459, %v3463
      %v3465 = vshrl.u32 %v3162, 16
      %v3467 = vrot.slane %v3465, 4
      %v3468 = vor.u32 %v3467, %v3463
      %v3469 = vrot.slane %v3468, 4
      %v3471 = vshll.u32 %v3163, 16
      %v3473 = vrot.slane %v3471, 5
      %v3474 = vsel %vm285, %v3469, %v3473
      %v3475 = vshrl.u32 %v3163, 16
      %v3477 = vrot.slane %v3475, 4
      %v3478 = vor.u32 %v3477, %v3473
      %v3479 = vrot.slane %v3478, 4
      %v3481 = vshll.u32 %v3175, 16
      %v3483 = vrot.slane %v3481, 5
      %v3484 = vsel %vm285, %v3479, %v3483
      %v3486 = vshrl.u32 %v3164, 16
      %v3488 = vrot.slane %v3486, 4
      %v3489 = vshll.u32 %v3164, 16
      %v3491 = vrot.slane %v3489, 5
      %v3492 = vor.u32 %v3488, %v3491
      %v3493 = vrot.slane %v3492, 4
      %v3495 = vshll.u32 %v3165, 16
      %v3497 = vrot.slane %v3495, 5
      %v3498 = vsel %vm285, %v3493, %v3497
      %v3499 = vshrl.u32 %v3165, 16
      %v3501 = vrot.slane %v3499, 4
      %v3502 = vor.u32 %v3501, %v3497
      %v3503 = vrot.slane %v3502, 4
      %v3505 = vshll.u32 %v3166, 16
      %v3507 = vrot.slane %v3505, 5
      %v3508 = vsel %vm285, %v3503, %v3507
      %v3509 = vshrl.u32 %v3166, 16
      %v3511 = vrot.slane %v3509, 4
      %v3512 = vor.u32 %v3511, %v3507
      %v3513 = vrot.slane %v3512, 4
      %v3515 = vshll.u32 %v3167, 16
      %v3517 = vrot.slane %v3515, 5
      %v3518 = vsel %vm285, %v3513, %v3517
      %v3519 = vshrl.u32 %v3167, 16
      %v3521 = vrot.slane %v3519, 4
      %v3522 = vor.u32 %v3521, %v3517
      %v3523 = vrot.slane %v3522, 4
      %v3525 = vshll.u32 %v3176, 16
      %v3527 = vrot.slane %v3525, 5
      %v3528 = vsel %vm285, %v3523, %v3527
      %s3529 = scalar_lea.vmem %s3, 4
      %v3530 = vld [vmem:[%s3529] sm:$0xf]
      %v3531 = vunpack.c.l.b16 %v3190
      %v3532 = vunpack.c.l.b16 %v3200
      %v3533 = vunpack.c.l.b16 %v3210
      %v3534 = vunpack.c.l.b16 %v3220
      %v3535 = vunpack.c.l.b16 %v3234
      %v3536 = vunpack.c.l.b16 %v3244
      %v3537 = vunpack.c.l.b16 %v3254
      %v3538 = vunpack.c.l.b16 %v3264
      %v3539 = vunpack.c.l.b16 %v3278
      %v3540 = vunpack.c.l.b16 %v3288
      %v3541 = vunpack.c.l.b16 %v3298
      %v3542 = vunpack.c.l.b16 %v3308
      %v3543 = vunpack.c.l.b16 %v3322
      %v3544 = vunpack.c.l.b16 %v3332
      %v3545 = vunpack.c.l.b16 %v3342
      %v3546 = vunpack.c.l.b16 %v3352
      %v3547 = vunpack.c.l.b16 %v3366
      %v3548 = vunpack.c.l.b16 %v3376
      %v3549 = vunpack.c.l.b16 %v3386
      %v3550 = vunpack.c.l.b16 %v3396
      %v3551 = vunpack.c.l.b16 %v3410
      %v3552 = vunpack.c.l.b16 %v3420
      %v3553 = vunpack.c.l.b16 %v3430
      %v3554 = vunpack.c.l.b16 %v3440
      %v3555 = vunpack.c.l.b16 %v3454
      %v3556 = vunpack.c.l.b16 %v3464
      %v3557 = vunpack.c.l.b16 %v3474
      %v3558 = vunpack.c.l.b16 %v3484
      %v3559 = vunpack.c.l.b16 %v3498
      %v3560 = vunpack.c.l.b16 %v3508
      %v3561 = vunpack.c.l.b16 %v3518
      %v3562 = vunpack.c.l.b16 %v3528
      %v3563 = vpack.c.b16 %v3532, %v3531
      %v3564 = vpack.c.b16 %v3534, %v3533
      %v3565 = vpack.c.b16 %v3536, %v3535
      %v3566 = vpack.c.b16 %v3538, %v3537
      %v3567 = vpack.c.b16 %v3540, %v3539
      %v3568 = vpack.c.b16 %v3542, %v3541
      %v3569 = vpack.c.b16 %v3544, %v3543
      %v3570 = vpack.c.b16 %v3546, %v3545
      %v3571 = vpack.c.b16 %v3548, %v3547
      %v3572 = vpack.c.b16 %v3550, %v3549
      %v3573 = vpack.c.b16 %v3552, %v3551
      %v3574 = vpack.c.b16 %v3554, %v3553
      %v3575 = vpack.c.b16 %v3556, %v3555
      %v3576 = vpack.c.b16 %v3558, %v3557
      %v3577 = vpack.c.b16 %v3560, %v3559
      %v3578 = vpack.c.b16 %v3562, %v3561
      %vm3579 = vcmask 64512
      %v3581 = vsel %vm3579, %v3563, 0
      %v3584 = vsel %vm3579, %v3564, 0
      %v3587 = vsel %vm3579, %v3565, 0
      %v3590 = vsel %vm3579, %v3566, 0
      %v3593 = vsel %vm3579, %v3567, 0
      %v3596 = vsel %vm3579, %v3568, 0
      %v3599 = vsel %vm3579, %v3569, 0
      %v3602 = vsel %vm3579, %v3570, 0
      %v3605 = vsel %vm3579, %v3571, 0
      %v3608 = vsel %vm3579, %v3572, 0
      %v3611 = vsel %vm3579, %v3573, 0
      %v3614 = vsel %vm3579, %v3574, 0
      %v3617 = vsel %vm3579, %v3575, 0
      %v3620 = vsel %vm3579, %v3576, 0
      %v3623 = vsel %vm3579, %v3577, 0
      %v3626 = vsel %vm3579, %v3578, 0
      %vm3628 = vcmask 1043456
      %v3630 = vsel %vm3628, %v3530, 0
      %3632 = vmatpush.bf16.msra.mxu0 0
      %3633 = vmatpush.bf16.msra.mxu0 0
      %3634 = vmatpush.bf16.msra.mxu0 0
      %3635 = vmatpush.bf16.msra.mxu0 0
      %3636 = vmatpush.bf16.msra.mxu0 0
      %3637 = vmatpush.bf16.msra.mxu0 0
      %3638 = vmatpush.bf16.msra.mxu0 0
      %3639 = vmatpush.bf16.msra.mxu0 %v3630
      %3640 = vmatmul.bf16.gmra.mxu0 %v3581
      %v3641 = vpop.f32.mrf.mxu0
      %v3642 = vadd.f32 0.0, %v3641
      %v3643 = vpop.f32.mrf.mxu0
      %v3644 = vadd.f32 0.0, %v3643
      %3645 = vmatmul.bf16.gmra.mxu0 %v3584
      %v3646 = vpop.f32.mrf.mxu0
      %v3647 = vadd.f32 0.0, %v3646
      %v3648 = vpop.f32.mrf.mxu0
      %v3649 = vadd.f32 0.0, %v3648
      %3650 = vmatmul.bf16.gmra.mxu0 %v3587
      %v3651 = vpop.f32.mrf.mxu0
      %v3652 = vadd.f32 0.0, %v3651
      %v3653 = vpop.f32.mrf.mxu0
      %v3654 = vadd.f32 0.0, %v3653
      %3655 = vmatmul.bf16.gmra.mxu0 %v3590
      %v3656 = vpop.f32.mrf.mxu0
      %v3657 = vadd.f32 0.0, %v3656
      %v3658 = vpop.f32.mrf.mxu0
      %v3659 = vadd.f32 0.0, %v3658
      %3660 = vmatmul.bf16.gmra.mxu0 %v3593
      %v3661 = vpop.f32.mrf.mxu0
      %v3662 = vadd.f32 0.0, %v3661
      %v3663 = vpop.f32.mrf.mxu0
      %v3664 = vadd.f32 0.0, %v3663
      %3665 = vmatmul.bf16.gmra.mxu0 %v3596
      %v3666 = vpop.f32.mrf.mxu0
      %v3667 = vadd.f32 0.0, %v3666
      %v3668 = vpop.f32.mrf.mxu0
      %v3669 = vadd.f32 0.0, %v3668
      %3670 = vmatmul.bf16.gmra.mxu0 %v3599
      %v3671 = vpop.f32.mrf.mxu0
      %v3672 = vadd.f32 0.0, %v3671
      %v3673 = vpop.f32.mrf.mxu0
      %v3674 = vadd.f32 0.0, %v3673
      %3675 = vmatmul.bf16.gmra.mxu0 %v3602
      %v3676 = vpop.f32.mrf.mxu0
      %v3677 = vadd.f32 0.0, %v3676
      %v3678 = vpop.f32.mrf.mxu0
      %v3679 = vadd.f32 0.0, %v3678
      %3680 = vmatmul.bf16.gmra.mxu0 %v3605
      %v3681 = vpop.f32.mrf.mxu0
      %v3682 = vadd.f32 0.0, %v3681
      %v3683 = vpop.f32.mrf.mxu0
      %v3684 = vadd.f32 0.0, %v3683
      %3685 = vmatmul.bf16.gmra.mxu0 %v3608
      %v3686 = vpop.f32.mrf.mxu0
      %v3687 = vadd.f32 0.0, %v3686
      %v3688 = vpop.f32.mrf.mxu0
      %v3689 = vadd.f32 0.0, %v3688
      %3690 = vmatmul.bf16.gmra.mxu0 %v3611
      %v3691 = vpop.f32.mrf.mxu0
      %v3692 = vadd.f32 0.0, %v3691
      %v3693 = vpop.f32.mrf.mxu0
      %v3694 = vadd.f32 0.0, %v3693
      %3695 = vmatmul.bf16.gmra.mxu0 %v3614
      %v3696 = vpop.f32.mrf.mxu0
      %v3697 = vadd.f32 0.0, %v3696
      %v3698 = vpop.f32.mrf.mxu0
      %v3699 = vadd.f32 0.0, %v3698
      %3700 = vmatmul.bf16.gmra.mxu0 %v3617
      %v3701 = vpop.f32.mrf.mxu0
      %v3702 = vadd.f32 0.0, %v3701
      %v3703 = vpop.f32.mrf.mxu0
      %v3704 = vadd.f32 0.0, %v3703
      %3705 = vmatmul.bf16.gmra.mxu0 %v3620
      %v3706 = vpop.f32.mrf.mxu0
      %v3707 = vadd.f32 0.0, %v3706
      %v3708 = vpop.f32.mrf.mxu0
      %v3709 = vadd.f32 0.0, %v3708
      %3710 = vmatmul.bf16.gmra.mxu0 %v3623
      %v3711 = vpop.f32.mrf.mxu0
      %v3712 = vadd.f32 0.0, %v3711
      %v3713 = vpop.f32.mrf.mxu0
      %v3714 = vadd.f32 0.0, %v3713
      %3715 = vmatmul.bf16.gmra.mxu0 %v3626
      %v3716 = vpop.f32.mrf.mxu0
      %v3717 = vadd.f32 0.0, %v3716
      %v3718 = vpop.f32.mrf.mxu0
      %v3719 = vadd.f32 0.0, %v3718
      %3720 = vdwg.mxu0
      %v3753 = vunpack.c.l.b16 %v3136
      %v3754 = vunpack.c.l.b16 %v3137
      %v3755 = vunpack.c.l.b16 %v3138
      %v3756 = vunpack.c.l.b16 %v3139
      %v3757 = vunpack.c.l.b16 %v3140
      %v3758 = vunpack.c.l.b16 %v3141
      %v3759 = vunpack.c.l.b16 %v3142
      %v3760 = vunpack.c.l.b16 %v3143
      %v3761 = vunpack.c.l.b16 %v3144
      %v3762 = vunpack.c.l.b16 %v3145
      %v3763 = vunpack.c.l.b16 %v3146
      %v3764 = vunpack.c.l.b16 %v3147
      %v3765 = vunpack.c.l.b16 %v3148
      %v3766 = vunpack.c.l.b16 %v3149
      %v3767 = vunpack.c.l.b16 %v3150
      %v3768 = vunpack.c.l.b16 %v3151
      %v3769 = vunpack.c.l.b16 %v3152
      %v3770 = vunpack.c.l.b16 %v3153
      %v3771 = vunpack.c.l.b16 %v3154
      %v3772 = vunpack.c.l.b16 %v3155
      %v3773 = vunpack.c.l.b16 %v3156
      %v3774 = vunpack.c.l.b16 %v3157
      %v3775 = vunpack.c.l.b16 %v3158
      %v3776 = vunpack.c.l.b16 %v3159
      %v3777 = vunpack.c.l.b16 %v3160
      %v3778 = vunpack.c.l.b16 %v3161
      %v3779 = vunpack.c.l.b16 %v3162
      %v3780 = vunpack.c.l.b16 %v3163
      %v3781 = vunpack.c.l.b16 %v3164
      %v3782 = vunpack.c.l.b16 %v3165
      %v3783 = vunpack.c.l.b16 %v3166
      %v3784 = vunpack.c.l.b16 %v3167
      %v3785 = vpack.c.b16 %v3754, %v3753
      %v3786 = vpack.c.b16 %v3756, %v3755
      %v3787 = vpack.c.b16 %v3758, %v3757
      %v3788 = vpack.c.b16 %v3760, %v3759
      %v3789 = vpack.c.b16 %v3762, %v3761
      %v3790 = vpack.c.b16 %v3764, %v3763
      %v3791 = vpack.c.b16 %v3766, %v3765
      %v3792 = vpack.c.b16 %v3768, %v3767
      %v3793 = vpack.c.b16 %v3770, %v3769
      %v3794 = vpack.c.b16 %v3772, %v3771
      %v3795 = vpack.c.b16 %v3774, %v3773
      %v3796 = vpack.c.b16 %v3776, %v3775
      %v3797 = vpack.c.b16 %v3778, %v3777
      %v3798 = vpack.c.b16 %v3780, %v3779
      %v3799 = vpack.c.b16 %v3782, %v3781
      %v3800 = vpack.c.b16 %v3784, %v3783
      %v3802 = vsel %vm3579, %v3785, 0
      %v3805 = vsel %vm3579, %v3786, 0
      %v3808 = vsel %vm3579, %v3787, 0
      %v3811 = vsel %vm3579, %v3788, 0
      %v3814 = vsel %vm3579, %v3789, 0
      %v3817 = vsel %vm3579, %v3790, 0
      %v3820 = vsel %vm3579, %v3791, 0
      %v3823 = vsel %vm3579, %v3792, 0
      %v3826 = vsel %vm3579, %v3793, 0
      %v3829 = vsel %vm3579, %v3794, 0
      %v3832 = vsel %vm3579, %v3795, 0
      %v3835 = vsel %vm3579, %v3796, 0
      %v3838 = vsel %vm3579, %v3797, 0
      %v3841 = vsel %vm3579, %v3798, 0
      %v3844 = vsel %vm3579, %v3799, 0
      %v3847 = vsel %vm3579, %v3800, 0
      %v3850 = vsel %vm3628, %v3168, 0
      %3852 = vmatpush.bf16.msra.mxu0 0
      %3853 = vmatpush.bf16.msra.mxu0 0
      %3854 = vmatpush.bf16.msra.mxu0 0
      %3855 = vmatpush.bf16.msra.mxu0 0
      %3856 = vmatpush.bf16.msra.mxu0 0
      %3857 = vmatpush.bf16.msra.mxu0 0
      %3858 = vmatpush.bf16.msra.mxu0 0
      %3859 = vmatpush.bf16.msra.mxu0 %v3850
      %3860 = vmatmul.bf16.gmra.mxu0 %v3802
      %v3861 = vpop.f32.mrf.mxu0
      %v3862 = vadd.f32 %v3642, %v3861
      %v3863 = vpop.f32.mrf.mxu0
      %v3864 = vadd.f32 %v3644, %v3863
      %3865 = vmatmul.bf16.gmra.mxu0 %v3805
      %v3866 = vpop.f32.mrf.mxu0
      %v3867 = vadd.f32 %v3647, %v3866
      %v3868 = vpop.f32.mrf.mxu0
      %v3869 = vadd.f32 %v3649, %v3868
      %3870 = vmatmul.bf16.gmra.mxu0 %v3808
      %v3871 = vpop.f32.mrf.mxu0
      %v3872 = vadd.f32 %v3652, %v3871
      %v3873 = vpop.f32.mrf.mxu0
      %v3874 = vadd.f32 %v3654, %v3873
      %3875 = vmatmul.bf16.gmra.mxu0 %v3811
      %v3876 = vpop.f32.mrf.mxu0
      %v3877 = vadd.f32 %v3657, %v3876
      %v3878 = vpop.f32.mrf.mxu0
      %v3879 = vadd.f32 %v3659, %v3878
      %3880 = vmatmul.bf16.gmra.mxu0 %v3814
      %v3881 = vpop.f32.mrf.mxu0
      %v3882 = vadd.f32 %v3662, %v3881
      %v3883 = vpop.f32.mrf.mxu0
      %v3884 = vadd.f32 %v3664, %v3883
      %3885 = vmatmul.bf16.gmra.mxu0 %v3817
      %v3886 = vpop.f32.mrf.mxu0
      %v3887 = vadd.f32 %v3667, %v3886
      %v3888 = vpop.f32.mrf.mxu0
      %v3889 = vadd.f32 %v3669, %v3888
      %3890 = vmatmul.bf16.gmra.mxu0 %v3820
      %v3891 = vpop.f32.mrf.mxu0
      %v3892 = vadd.f32 %v3672, %v3891
      %v3893 = vpop.f32.mrf.mxu0
      %v3894 = vadd.f32 %v3674, %v3893
      %3895 = vmatmul.bf16.gmra.mxu0 %v3823
      %v3896 = vpop.f32.mrf.mxu0
      %v3897 = vadd.f32 %v3677, %v3896
      %v3898 = vpop.f32.mrf.mxu0
      %v3899 = vadd.f32 %v3679, %v3898
      %3900 = vmatmul.bf16.gmra.mxu0 %v3826
      %v3901 = vpop.f32.mrf.mxu0
      %v3902 = vadd.f32 %v3682, %v3901
      %v3903 = vpop.f32.mrf.mxu0
      %v3904 = vadd.f32 %v3684, %v3903
      %3905 = vmatmul.bf16.gmra.mxu0 %v3829
      %v3906 = vpop.f32.mrf.mxu0
      %v3907 = vadd.f32 %v3687, %v3906
      %v3908 = vpop.f32.mrf.mxu0
      %v3909 = vadd.f32 %v3689, %v3908
      %3910 = vmatmul.bf16.gmra.mxu0 %v3832
      %v3911 = vpop.f32.mrf.mxu0
      %v3912 = vadd.f32 %v3692, %v3911
      %v3913 = vpop.f32.mrf.mxu0
      %v3914 = vadd.f32 %v3694, %v3913
      %3915 = vmatmul.bf16.gmra.mxu0 %v3835
      %v3916 = vpop.f32.mrf.mxu0
      %v3917 = vadd.f32 %v3697, %v3916
      %v3918 = vpop.f32.mrf.mxu0
      %v3919 = vadd.f32 %v3699, %v3918
      %3920 = vmatmul.bf16.gmra.mxu0 %v3838
      %v3921 = vpop.f32.mrf.mxu0
      %v3922 = vadd.f32 %v3702, %v3921
      %v3923 = vpop.f32.mrf.mxu0
      %v3924 = vadd.f32 %v3704, %v3923
      %3925 = vmatmul.bf16.gmra.mxu0 %v3841
      %v3926 = vpop.f32.mrf.mxu0
      %v3927 = vadd.f32 %v3707, %v3926
      %v3928 = vpop.f32.mrf.mxu0
      %v3929 = vadd.f32 %v3709, %v3928
      %3930 = vmatmul.bf16.gmra.mxu0 %v3844
      %v3931 = vpop.f32.mrf.mxu0
      %v3932 = vadd.f32 %v3712, %v3931
      %v3933 = vpop.f32.mrf.mxu0
      %v3934 = vadd.f32 %v3714, %v3933
      %3935 = vmatmul.bf16.gmra.mxu0 %v3847
      %v3936 = vpop.f32.mrf.mxu0
      %v3937 = vadd.f32 %v3717, %v3936
      %v3938 = vpop.f32.mrf.mxu0
      %v3939 = vadd.f32 %v3719, %v3938
      %3940 = vdwg.mxu0
      %v3941 = vld [vmem:[#allocation2] sm:$0xe]
      %v3942 = vld [vmem:[#allocation2 + $0x14] sm:$0xe]
      %v3943 = vld [vmem:[#allocation2 + $0x28] sm:$0xe]
      %v3944 = vld [vmem:[#allocation2 + $0x3c] sm:$0xe]
      %v3945 = vld [vmem:[#allocation2 + $0x50] sm:$0xe]
      %v3946 = vld [vmem:[#allocation2 + $0x64] sm:$0xe]
      %v3947 = vld [vmem:[#allocation2 + $0x78] sm:$0xe]
      %v3948 = vld [vmem:[#allocation2 + $0x8c] sm:$0xe]
      %v3965 = vrot.slane %v3941, 5
      %v3966 = vrot.slane %v3965, 4
      %v3967 = vrot.slane %v3137, 5
      %v3968 = vsel %vm917, %v3966, %v3967
      %v3969 = vrot.slane %v3967, 4
      %v3970 = vrot.slane %v3138, 5
      %v3971 = vsel %vm917, %v3969, %v3970
      %v3972 = vrot.slane %v3970, 4
      %v3973 = vrot.slane %v3139, 5
      %v3974 = vsel %vm917, %v3972, %v3973
      %v3975 = vrot.slane %v3973, 4
      %v3976 = vrot.slane %v3169, 5
      %v3977 = vsel %vm917, %v3975, %v3976
      %v3978 = vrot.slane %v3942, 5
      %v3979 = vrot.slane %v3978, 4
      %v3980 = vrot.slane %v3141, 5
      %v3981 = vsel %vm917, %v3979, %v3980
      %v3982 = vrot.slane %v3980, 4
      %v3983 = vrot.slane %v3142, 5
      %v3984 = vsel %vm917, %v3982, %v3983
      %v3985 = vrot.slane %v3983, 4
      %v3986 = vrot.slane %v3143, 5
      %v3987 = vsel %vm917, %v3985, %v3986
      %v3988 = vrot.slane %v3986, 4
      %v3989 = vrot.slane %v3170, 5
      %v3990 = vsel %vm917, %v3988, %v3989
      %v3991 = vrot.slane %v3943, 5
      %v3992 = vrot.slane %v3991, 4
      %v3993 = vrot.slane %v3145, 5
      %v3994 = vsel %vm917, %v3992, %v3993
      %v3995 = vrot.slane %v3993, 4
      %v3996 = vrot.slane %v3146, 5
      %v3997 = vsel %vm917, %v3995, %v3996
      %v3998 = vrot.slane %v3996, 4
      %v3999 = vrot.slane %v3147, 5
      %v4000 = vsel %vm917, %v3998, %v3999
      %v4001 = vrot.slane %v3999, 4
      %v4002 = vrot.slane %v3171, 5
      %v4003 = vsel %vm917, %v4001, %v4002
      %v4004 = vrot.slane %v3944, 5
      %v4005 = vrot.slane %v4004, 4
      %v4006 = vrot.slane %v3149, 5
      %v4007 = vsel %vm917, %v4005, %v4006
      %v4008 = vrot.slane %v4006, 4
      %v4009 = vrot.slane %v3150, 5
      %v4010 = vsel %vm917, %v4008, %v4009
      %v4011 = vrot.slane %v4009, 4
      %v4012 = vrot.slane %v3151, 5
      %v4013 = vsel %vm917, %v4011, %v4012
      %v4014 = vrot.slane %v4012, 4
      %v4015 = vrot.slane %v3172, 5
      %v4016 = vsel %vm917, %v4014, %v4015
      %v4017 = vrot.slane %v3945, 5
      %v4018 = vrot.slane %v4017, 4
      %v4019 = vrot.slane %v3153, 5
      %v4020 = vsel %vm917, %v4018, %v4019
      %v4021 = vrot.slane %v4019, 4
      %v4022 = vrot.slane %v3154, 5
      %v4023 = vsel %vm917, %v4021, %v4022
      %v4024 = vrot.slane %v4022, 4
      %v4025 = vrot.slane %v3155, 5
      %v4026 = vsel %vm917, %v4024, %v4025
      %v4027 = vrot.slane %v4025, 4
      %v4028 = vrot.slane %v3173, 5
      %v4029 = vsel %vm917, %v4027, %v4028
      %v4030 = vrot.slane %v3946, 5
      %v4031 = vrot.slane %v4030, 4
      %v4032 = vrot.slane %v3157, 5
      %v4033 = vsel %vm917, %v4031, %v4032
      %v4034 = vrot.slane %v4032, 4
      %v4035 = vrot.slane %v3158, 5
      %v4036 = vsel %vm917, %v4034, %v4035
      %v4037 = vrot.slane %v4035, 4
      %v4038 = vrot.slane %v3159, 5
      %v4039 = vsel %vm917, %v4037, %v4038
      %v4040 = vrot.slane %v4038, 4
      %v4041 = vrot.slane %v3174, 5
      %v4042 = vsel %vm917, %v4040, %v4041
      %v4043 = vrot.slane %v3947, 5
      %v4044 = vrot.slane %v4043, 4
      %v4045 = vrot.slane %v3161, 5
      %v4046 = vsel %vm917, %v4044, %v4045
      %v4047 = vrot.slane %v4045, 4
      %v4048 = vrot.slane %v3162, 5
      %v4049 = vsel %vm917, %v4047, %v4048
      %v4050 = vrot.slane %v4048, 4
      %v4051 = vrot.slane %v3163, 5
      %v4052 = vsel %vm917, %v4050, %v4051
      %v4053 = vrot.slane %v4051, 4
      %v4054 = vrot.slane %v3175, 5
      %v4055 = vsel %vm917, %v4053, %v4054
      %v4056 = vrot.slane %v3948, 5
      %v4057 = vrot.slane %v4056, 4
      %v4058 = vrot.slane %v3165, 5
      %v4059 = vsel %vm917, %v4057, %v4058
      %v4060 = vrot.slane %v4058, 4
      %v4061 = vrot.slane %v3166, 5
      %v4062 = vsel %vm917, %v4060, %v4061
      %v4063 = vrot.slane %v4061, 4
      %v4064 = vrot.slane %v3167, 5
      %v4065 = vsel %vm917, %v4063, %v4064
      %v4066 = vrot.slane %v4064, 4
      %v4067 = vrot.slane %v3176, 5
      %v4068 = vsel %vm917, %v4066, %v4067
      %s4069 = scalar_lea.vmem %s3, 8
      %v4070 = vld [vmem:[%s4069] sm:$0xf]
      %v4071 = vunpack.c.l.b16 %v3968
      %v4072 = vunpack.c.l.b16 %v3971
      %v4073 = vunpack.c.l.b16 %v3974
      %v4074 = vunpack.c.l.b16 %v3977
      %v4075 = vunpack.c.l.b16 %v3981
      %v4076 = vunpack.c.l.b16 %v3984
      %v4077 = vunpack.c.l.b16 %v3987
      %v4078 = vunpack.c.l.b16 %v3990
      %v4079 = vunpack.c.l.b16 %v3994
      %v4080 = vunpack.c.l.b16 %v3997
      %v4081 = vunpack.c.l.b16 %v4000
      %v4082 = vunpack.c.l.b16 %v4003
      %v4083 = vunpack.c.l.b16 %v4007
      %v4084 = vunpack.c.l.b16 %v4010
      %v4085 = vunpack.c.l.b16 %v4013
      %v4086 = vunpack.c.l.b16 %v4016
      %v4087 = vunpack.c.l.b16 %v4020
      %v4088 = vunpack.c.l.b16 %v4023
      %v4089 = vunpack.c.l.b16 %v4026
      %v4090 = vunpack.c.l.b16 %v4029
      %v4091 = vunpack.c.l.b16 %v4033
      %v4092 = vunpack.c.l.b16 %v4036
      %v4093 = vunpack.c.l.b16 %v4039
      %v4094 = vunpack.c.l.b16 %v4042
      %v4095 = vunpack.c.l.b16 %v4046
      %v4096 = vunpack.c.l.b16 %v4049
      %v4097 = vunpack.c.l.b16 %v4052
      %v4098 = vunpack.c.l.b16 %v4055
      %v4099 = vunpack.c.l.b16 %v4059
      %v4100 = vunpack.c.l.b16 %v4062
      %v4101 = vunpack.c.l.b16 %v4065
      %v4102 = vunpack.c.l.b16 %v4068
      %v4103 = vpack.c.b16 %v4072, %v4071
      %v4104 = vpack.c.b16 %v4074, %v4073
      %v4105 = vpack.c.b16 %v4076, %v4075
      %v4106 = vpack.c.b16 %v4078, %v4077
      %v4107 = vpack.c.b16 %v4080, %v4079
      %v4108 = vpack.c.b16 %v4082, %v4081
      %v4109 = vpack.c.b16 %v4084, %v4083
      %v4110 = vpack.c.b16 %v4086, %v4085
      %v4111 = vpack.c.b16 %v4088, %v4087
      %v4112 = vpack.c.b16 %v4090, %v4089
      %v4113 = vpack.c.b16 %v4092, %v4091
      %v4114 = vpack.c.b16 %v4094, %v4093
      %v4115 = vpack.c.b16 %v4096, %v4095
      %v4116 = vpack.c.b16 %v4098, %v4097
      %v4117 = vpack.c.b16 %v4100, %v4099
      %v4118 = vpack.c.b16 %v4102, %v4101
      %v4120 = vsel %vm3579, %v4103, 0
      %v4123 = vsel %vm3579, %v4104, 0
      %v4126 = vsel %vm3579, %v4105, 0
      %v4129 = vsel %vm3579, %v4106, 0
      %v4132 = vsel %vm3579, %v4107, 0
      %v4135 = vsel %vm3579, %v4108, 0
      %v4138 = vsel %vm3579, %v4109, 0
      %v4141 = vsel %vm3579, %v4110, 0
      %v4144 = vsel %vm3579, %v4111, 0
      %v4147 = vsel %vm3579, %v4112, 0
      %v4150 = vsel %vm3579, %v4113, 0
      %v4153 = vsel %vm3579, %v4114, 0
      %v4156 = vsel %vm3579, %v4115, 0
      %v4159 = vsel %vm3579, %v4116, 0
      %v4162 = vsel %vm3579, %v4117, 0
      %v4165 = vsel %vm3579, %v4118, 0
      %v4168 = vsel %vm3628, %v4070, 0
      %4170 = vmatpush.bf16.msra.mxu0 0
      %4171 = vmatpush.bf16.msra.mxu0 0
      %4172 = vmatpush.bf16.msra.mxu0 0
      %4173 = vmatpush.bf16.msra.mxu0 0
      %4174 = vmatpush.bf16.msra.mxu0 0
      %4175 = vmatpush.bf16.msra.mxu0 0
      %4176 = vmatpush.bf16.msra.mxu0 0
      %4177 = vmatpush.bf16.msra.mxu0 %v4168
      %4178 = vmatmul.bf16.gmra.mxu0 %v4120
      %v4179 = vpop.f32.mrf.mxu0
      %v4180 = vadd.f32 0.0, %v4179
      %v4181 = vpop.f32.mrf.mxu0
      %v4182 = vadd.f32 0.0, %v4181
      %4183 = vmatmul.bf16.gmra.mxu0 %v4123
      %v4184 = vpop.f32.mrf.mxu0
      %v4185 = vadd.f32 0.0, %v4184
      %v4186 = vpop.f32.mrf.mxu0
      %v4187 = vadd.f32 0.0, %v4186
      %4188 = vmatmul.bf16.gmra.mxu0 %v4126
      %v4189 = vpop.f32.mrf.mxu0
      %v4190 = vadd.f32 0.0, %v4189
      %v4191 = vpop.f32.mrf.mxu0
      %v4192 = vadd.f32 0.0, %v4191
      %4193 = vmatmul.bf16.gmra.mxu0 %v4129
      %v4194 = vpop.f32.mrf.mxu0
      %v4195 = vadd.f32 0.0, %v4194
      %v4196 = vpop.f32.mrf.mxu0
      %v4197 = vadd.f32 0.0, %v4196
      %4198 = vmatmul.bf16.gmra.mxu0 %v4132
      %v4199 = vpop.f32.mrf.mxu0
      %v4200 = vadd.f32 0.0, %v4199
      %v4201 = vpop.f32.mrf.mxu0
      %v4202 = vadd.f32 0.0, %v4201
      %4203 = vmatmul.bf16.gmra.mxu0 %v4135
      %v4204 = vpop.f32.mrf.mxu0
      %v4205 = vadd.f32 0.0, %v4204
      %v4206 = vpop.f32.mrf.mxu0
      %v4207 = vadd.f32 0.0, %v4206
      %4208 = vmatmul.bf16.gmra.mxu0 %v4138
      %v4209 = vpop.f32.mrf.mxu0
      %v4210 = vadd.f32 0.0, %v4209
      %v4211 = vpop.f32.mrf.mxu0
      %v4212 = vadd.f32 0.0, %v4211
      %4213 = vmatmul.bf16.gmra.mxu0 %v4141
      %v4214 = vpop.f32.mrf.mxu0
      %v4215 = vadd.f32 0.0, %v4214
      %v4216 = vpop.f32.mrf.mxu0
      %v4217 = vadd.f32 0.0, %v4216
      %4218 = vmatmul.bf16.gmra.mxu0 %v4144
      %v4219 = vpop.f32.mrf.mxu0
      %v4220 = vadd.f32 0.0, %v4219
      %v4221 = vpop.f32.mrf.mxu0
      %v4222 = vadd.f32 0.0, %v4221
      %4223 = vmatmul.bf16.gmra.mxu0 %v4147
      %v4224 = vpop.f32.mrf.mxu0
      %v4225 = vadd.f32 0.0, %v4224
      %v4226 = vpop.f32.mrf.mxu0
      %v4227 = vadd.f32 0.0, %v4226
      %4228 = vmatmul.bf16.gmra.mxu0 %v4150
      %v4229 = vpop.f32.mrf.mxu0
      %v4230 = vadd.f32 0.0, %v4229
      %v4231 = vpop.f32.mrf.mxu0
      %v4232 = vadd.f32 0.0, %v4231
      %4233 = vmatmul.bf16.gmra.mxu0 %v4153
      %v4234 = vpop.f32.mrf.mxu0
      %v4235 = vadd.f32 0.0, %v4234
      %v4236 = vpop.f32.mrf.mxu0
      %v4237 = vadd.f32 0.0, %v4236
      %4238 = vmatmul.bf16.gmra.mxu0 %v4156
      %v4239 = vpop.f32.mrf.mxu0
      %v4240 = vadd.f32 0.0, %v4239
      %v4241 = vpop.f32.mrf.mxu0
      %v4242 = vadd.f32 0.0, %v4241
      %4243 = vmatmul.bf16.gmra.mxu0 %v4159
      %v4244 = vpop.f32.mrf.mxu0
      %v4245 = vadd.f32 0.0, %v4244
      %v4246 = vpop.f32.mrf.mxu0
      %v4247 = vadd.f32 0.0, %v4246
      %4248 = vmatmul.bf16.gmra.mxu0 %v4162
      %v4249 = vpop.f32.mrf.mxu0
      %v4250 = vadd.f32 0.0, %v4249
      %v4251 = vpop.f32.mrf.mxu0
      %v4252 = vadd.f32 0.0, %v4251
      %4253 = vmatmul.bf16.gmra.mxu0 %v4165
      %v4254 = vpop.f32.mrf.mxu0
      %v4255 = vadd.f32 0.0, %v4254
      %v4256 = vpop.f32.mrf.mxu0
      %v4257 = vadd.f32 0.0, %v4256
      %4258 = vdwg.mxu0
      %v4259 = vadd.f32 %v3862, %v4180
      %v4260 = vadd.f32 %v3864, %v4182
      %v4261 = vadd.f32 %v3867, %v4185
      %v4262 = vadd.f32 %v3869, %v4187
      %v4263 = vadd.f32 %v3872, %v4190
      %v4264 = vadd.f32 %v3874, %v4192
      %v4265 = vadd.f32 %v3877, %v4195
      %v4266 = vadd.f32 %v3879, %v4197
      %v4267 = vadd.f32 %v3882, %v4200
      %v4268 = vadd.f32 %v3884, %v4202
      %v4269 = vadd.f32 %v3887, %v4205
      %v4270 = vadd.f32 %v3889, %v4207
      %v4271 = vadd.f32 %v3892, %v4210
      %v4272 = vadd.f32 %v3894, %v4212
      %v4273 = vadd.f32 %v3897, %v4215
      %v4274 = vadd.f32 %v3899, %v4217
      %v4275 = vadd.f32 %v3902, %v4220
      %v4276 = vadd.f32 %v3904, %v4222
      %v4277 = vadd.f32 %v3907, %v4225
      %v4278 = vadd.f32 %v3909, %v4227
      %v4279 = vadd.f32 %v3912, %v4230
      %v4280 = vadd.f32 %v3914, %v4232
      %v4281 = vadd.f32 %v3917, %v4235
      %v4282 = vadd.f32 %v3919, %v4237
      %v4283 = vadd.f32 %v3922, %v4240
      %v4284 = vadd.f32 %v3924, %v4242
      %v4285 = vadd.f32 %v3927, %v4245
      %v4286 = vadd.f32 %v3929, %v4247
      %v4287 = vadd.f32 %v3932, %v4250
      %v4288 = vadd.f32 %v3934, %v4252
      %v4289 = vadd.f32 %v3937, %v4255
      %v4290 = vadd.f32 %v3939, %v4257
      %s4291 = scalar_lea.vmem [#allocation2], 20
      %v4292 = vld [vmem:[%s4291] sm:$0xf]
      %v4293 = vld [vmem:[%s4291 + $0x4] sm:$0xf]
      %v4294 = vld [vmem:[%s4291 + $0x8] sm:$0xf]
      %v4295 = vld [vmem:[%s4291 + $0xc] sm:$0xf]
      %v4296 = vld [vmem:[%s4291 + $0x14] sm:$0xf]
      %v4297 = vld [vmem:[%s4291 + $0x18] sm:$0xf]
      %v4298 = vld [vmem:[%s4291 + $0x1c] sm:$0xf]
      %v4299 = vld [vmem:[%s4291 + $0x20] sm:$0xf]
      %v4300 = vld [vmem:[%s4291 + $0x28] sm:$0xf]
      %v4301 = vld [vmem:[%s4291 + $0x2c] sm:$0xf]
      %v4302 = vld [vmem:[%s4291 + $0x30] sm:$0xf]
      %v4303 = vld [vmem:[%s4291 + $0x34] sm:$0xf]
      %v4304 = vld [vmem:[%s4291 + $0x3c] sm:$0xf]
      %v4305 = vld [vmem:[%s4291 + $0x40] sm:$0xf]
      %v4306 = vld [vmem:[%s4291 + $0x44] sm:$0xf]
      %v4307 = vld [vmem:[%s4291 + $0x48] sm:$0xf]
      %v4308 = vld [vmem:[%s4291 + $0x50] sm:$0xf]
      %v4309 = vld [vmem:[%s4291 + $0x54] sm:$0xf]
      %v4310 = vld [vmem:[%s4291 + $0x58] sm:$0xf]
      %v4311 = vld [vmem:[%s4291 + $0x5c] sm:$0xf]
      %v4312 = vld [vmem:[%s4291 + $0x64] sm:$0xf]
      %v4313 = vld [vmem:[%s4291 + $0x68] sm:$0xf]
      %v4314 = vld [vmem:[%s4291 + $0x6c] sm:$0xf]
      %v4315 = vld [vmem:[%s4291 + $0x70] sm:$0xf]
      %v4316 = vld [vmem:[%s4291 + $0x78] sm:$0xf]
      %v4317 = vld [vmem:[%s4291 + $0x7c] sm:$0xf]
      %v4318 = vld [vmem:[%s4291 + $0x80] sm:$0xf]
      %v4319 = vld [vmem:[%s4291 + $0x84] sm:$0xf]
      %v4320 = vld [vmem:[%s4291 + $0x8c] sm:$0xf]
      %v4321 = vld [vmem:[%s4291 + $0x90] sm:$0xf]
      %v4322 = vld [vmem:[%s4291 + $0x94] sm:$0xf]
      %v4323 = vld [vmem:[%s4291 + $0x98] sm:$0xf]
      %s4324 = scalar_lea.vmem %s3, 12
      %v4325 = vld [vmem:[%s4324] sm:$0xf]
      %v4358 = vunpack.c.l.b16 %v4292
      %v4359 = vunpack.c.l.b16 %v4293
      %v4360 = vunpack.c.l.b16 %v4294
      %v4361 = vunpack.c.l.b16 %v4295
      %v4362 = vunpack.c.l.b16 %v4296
      %v4363 = vunpack.c.l.b16 %v4297
      %v4364 = vunpack.c.l.b16 %v4298
      %v4365 = vunpack.c.l.b16 %v4299
      %v4366 = vunpack.c.l.b16 %v4300
      %v4367 = vunpack.c.l.b16 %v4301
      %v4368 = vunpack.c.l.b16 %v4302
      %v4369 = vunpack.c.l.b16 %v4303
      %v4370 = vunpack.c.l.b16 %v4304
      %v4371 = vunpack.c.l.b16 %v4305
      %v4372 = vunpack.c.l.b16 %v4306
      %v4373 = vunpack.c.l.b16 %v4307
      %v4374 = vunpack.c.l.b16 %v4308
      %v4375 = vunpack.c.l.b16 %v4309
      %v4376 = vunpack.c.l.b16 %v4310
      %v4377 = vunpack.c.l.b16 %v4311
      %v4378 = vunpack.c.l.b16 %v4312
      %v4379 = vunpack.c.l.b16 %v4313
      %v4380 = vunpack.c.l.b16 %v4314
      %v4381 = vunpack.c.l.b16 %v4315
      %v4382 = vunpack.c.l.b16 %v4316
      %v4383 = vunpack.c.l.b16 %v4317
      %v4384 = vunpack.c.l.b16 %v4318
      %v4385 = vunpack.c.l.b16 %v4319
      %v4386 = vunpack.c.l.b16 %v4320
      %v4387 = vunpack.c.l.b16 %v4321
      %v4388 = vunpack.c.l.b16 %v4322
      %v4389 = vunpack.c.l.b16 %v4323
      %v4390 = vpack.c.b16 %v4359, %v4358
      %v4391 = vpack.c.b16 %v4361, %v4360
      %v4392 = vpack.c.b16 %v4363, %v4362
      %v4393 = vpack.c.b16 %v4365, %v4364
      %v4394 = vpack.c.b16 %v4367, %v4366
      %v4395 = vpack.c.b16 %v4369, %v4368
      %v4396 = vpack.c.b16 %v4371, %v4370
      %v4397 = vpack.c.b16 %v4373, %v4372
      %v4398 = vpack.c.b16 %v4375, %v4374
      %v4399 = vpack.c.b16 %v4377, %v4376
      %v4400 = vpack.c.b16 %v4379, %v4378
      %v4401 = vpack.c.b16 %v4381, %v4380
      %v4402 = vpack.c.b16 %v4383, %v4382
      %v4403 = vpack.c.b16 %v4385, %v4384
      %v4404 = vpack.c.b16 %v4387, %v4386
      %v4405 = vpack.c.b16 %v4389, %v4388
      %v4407 = vsel %vm3579, %v4390, 0
      %v4410 = vsel %vm3579, %v4391, 0
      %v4413 = vsel %vm3579, %v4392, 0
      %v4416 = vsel %vm3579, %v4393, 0
      %v4419 = vsel %vm3579, %v4394, 0
      %v4422 = vsel %vm3579, %v4395, 0
      %v4425 = vsel %vm3579, %v4396, 0
      %v4428 = vsel %vm3579, %v4397, 0
      %v4431 = vsel %vm3579, %v4398, 0
      %v4434 = vsel %vm3579, %v4399, 0
      %v4437 = vsel %vm3579, %v4400, 0
      %v4440 = vsel %vm3579, %v4401, 0
      %v4443 = vsel %vm3579, %v4402, 0
      %v4446 = vsel %vm3579, %v4403, 0
      %v4449 = vsel %vm3579, %v4404, 0
      %v4452 = vsel %vm3579, %v4405, 0
      %v4455 = vsel %vm3628, %v4325, 0
      %4457 = vmatpush.bf16.msra.mxu0 0
      %4458 = vmatpush.bf16.msra.mxu0 0
      %4459 = vmatpush.bf16.msra.mxu0 0
      %4460 = vmatpush.bf16.msra.mxu0 0
      %4461 = vmatpush.bf16.msra.mxu0 0
      %4462 = vmatpush.bf16.msra.mxu0 0
      %4463 = vmatpush.bf16.msra.mxu0 0
      %4464 = vmatpush.bf16.msra.mxu0 %v4455
      %4465 = vmatmul.bf16.gmra.mxu0 %v4407
      %v4466 = vpop.f32.mrf.mxu0
      %v4467 = vadd.f32 0.0, %v4466
      %v4468 = vpop.f32.mrf.mxu0
      %v4469 = vadd.f32 0.0, %v4468
      %4470 = vmatmul.bf16.gmra.mxu0 %v4410
      %v4471 = vpop.f32.mrf.mxu0
      %v4472 = vadd.f32 0.0, %v4471
      %v4473 = vpop.f32.mrf.mxu0
      %v4474 = vadd.f32 0.0, %v4473
      %4475 = vmatmul.bf16.gmra.mxu0 %v4413
      %v4476 = vpop.f32.mrf.mxu0
      %v4477 = vadd.f32 0.0, %v4476
      %v4478 = vpop.f32.mrf.mxu0
      %v4479 = vadd.f32 0.0, %v4478
      %4480 = vmatmul.bf16.gmra.mxu0 %v4416
      %v4481 = vpop.f32.mrf.mxu0
      %v4482 = vadd.f32 0.0, %v4481
      %v4483 = vpop.f32.mrf.mxu0
      %v4484 = vadd.f32 0.0, %v4483
      %4485 = vmatmul.bf16.gmra.mxu0 %v4419
      %v4486 = vpop.f32.mrf.mxu0
      %v4487 = vadd.f32 0.0, %v4486
      %v4488 = vpop.f32.mrf.mxu0
      %v4489 = vadd.f32 0.0, %v4488
      %4490 = vmatmul.bf16.gmra.mxu0 %v4422
      %v4491 = vpop.f32.mrf.mxu0
      %v4492 = vadd.f32 0.0, %v4491
      %v4493 = vpop.f32.mrf.mxu0
      %v4494 = vadd.f32 0.0, %v4493
      %4495 = vmatmul.bf16.gmra.mxu0 %v4425
      %v4496 = vpop.f32.mrf.mxu0
      %v4497 = vadd.f32 0.0, %v4496
      %v4498 = vpop.f32.mrf.mxu0
      %v4499 = vadd.f32 0.0, %v4498
      %4500 = vmatmul.bf16.gmra.mxu0 %v4428
      %v4501 = vpop.f32.mrf.mxu0
      %v4502 = vadd.f32 0.0, %v4501
      %v4503 = vpop.f32.mrf.mxu0
      %v4504 = vadd.f32 0.0, %v4503
      %4505 = vmatmul.bf16.gmra.mxu0 %v4431
      %v4506 = vpop.f32.mrf.mxu0
      %v4507 = vadd.f32 0.0, %v4506
      %v4508 = vpop.f32.mrf.mxu0
      %v4509 = vadd.f32 0.0, %v4508
      %4510 = vmatmul.bf16.gmra.mxu0 %v4434
      %v4511 = vpop.f32.mrf.mxu0
      %v4512 = vadd.f32 0.0, %v4511
      %v4513 = vpop.f32.mrf.mxu0
      %v4514 = vadd.f32 0.0, %v4513
      %4515 = vmatmul.bf16.gmra.mxu0 %v4437
      %v4516 = vpop.f32.mrf.mxu0
      %v4517 = vadd.f32 0.0, %v4516
      %v4518 = vpop.f32.mrf.mxu0
      %v4519 = vadd.f32 0.0, %v4518
      %4520 = vmatmul.bf16.gmra.mxu0 %v4440
      %v4521 = vpop.f32.mrf.mxu0
      %v4522 = vadd.f32 0.0, %v4521
      %v4523 = vpop.f32.mrf.mxu0
      %v4524 = vadd.f32 0.0, %v4523
      %4525 = vmatmul.bf16.gmra.mxu0 %v4443
      %v4526 = vpop.f32.mrf.mxu0
      %v4527 = vadd.f32 0.0, %v4526
      %v4528 = vpop.f32.mrf.mxu0
      %v4529 = vadd.f32 0.0, %v4528
      %4530 = vmatmul.bf16.gmra.mxu0 %v4446
      %v4531 = vpop.f32.mrf.mxu0
      %v4532 = vadd.f32 0.0, %v4531
      %v4533 = vpop.f32.mrf.mxu0
      %v4534 = vadd.f32 0.0, %v4533
      %4535 = vmatmul.bf16.gmra.mxu0 %v4449
      %v4536 = vpop.f32.mrf.mxu0
      %v4537 = vadd.f32 0.0, %v4536
      %v4538 = vpop.f32.mrf.mxu0
      %v4539 = vadd.f32 0.0, %v4538
      %4540 = vmatmul.bf16.gmra.mxu0 %v4452
      %v4541 = vpop.f32.mrf.mxu0
      %v4542 = vadd.f32 0.0, %v4541
      %v4543 = vpop.f32.mrf.mxu0
      %v4544 = vadd.f32 0.0, %v4543
      %4545 = vdwg.mxu0
      %v4546 = vadd.f32 %v4259, %v4467
      %v4547 = vadd.f32 %v4260, %v4469
      %v4548 = vadd.f32 %v4261, %v4472
      %v4549 = vadd.f32 %v4262, %v4474
      %v4550 = vadd.f32 %v4263, %v4477
      %v4551 = vadd.f32 %v4264, %v4479
      %v4552 = vadd.f32 %v4265, %v4482
      %v4553 = vadd.f32 %v4266, %v4484
      %v4554 = vadd.f32 %v4267, %v4487
      %v4555 = vadd.f32 %v4268, %v4489
      %v4556 = vadd.f32 %v4269, %v4492
      %v4557 = vadd.f32 %v4270, %v4494
      %v4558 = vadd.f32 %v4271, %v4497
      %v4559 = vadd.f32 %v4272, %v4499
      %v4560 = vadd.f32 %v4273, %v4502
      %v4561 = vadd.f32 %v4274, %v4504
      %v4562 = vadd.f32 %v4275, %v4507
      %v4563 = vadd.f32 %v4276, %v4509
      %v4564 = vadd.f32 %v4277, %v4512
      %v4565 = vadd.f32 %v4278, %v4514
      %v4566 = vadd.f32 %v4279, %v4517
      %v4567 = vadd.f32 %v4280, %v4519
      %v4568 = vadd.f32 %v4281, %v4522
      %v4569 = vadd.f32 %v4282, %v4524
      %v4570 = vadd.f32 %v4283, %v4527
      %v4571 = vadd.f32 %v4284, %v4529
      %v4572 = vadd.f32 %v4285, %v4532
      %v4573 = vadd.f32 %v4286, %v4534
      %v4574 = vadd.f32 %v4287, %v4537
      %v4575 = vadd.f32 %v4288, %v4539
      %v4576 = vadd.f32 %v4289, %v4542
      %v4577 = vadd.f32 %v4290, %v4544
      %v4578 = vld [vmem:[%s4291] sm:$0xf]
      %v4579 = vld [vmem:[%s4291 + $0x4] sm:$0xf]
      %v4580 = vld [vmem:[%s4291 + $0x8] sm:$0xf]
      %v4581 = vld [vmem:[%s4291 + $0xc] sm:$0xf]
      %v4582 = vld [vmem:[%s4291 + $0x10] sm:$0x1]
      %v4583 = vld [vmem:[%s4291 + $0x14] sm:$0xf]
      %v4584 = vld [vmem:[%s4291 + $0x18] sm:$0xf]
      %v4585 = vld [vmem:[%s4291 + $0x1c] sm:$0xf]
      %v4586 = vld [vmem:[%s4291 + $0x20] sm:$0xf]
      %v4587 = vld [vmem:[%s4291 + $0x24] sm:$0x1]
      %v4588 = vld [vmem:[%s4291 + $0x28] sm:$0xf]
      %v4589 = vld [vmem:[%s4291 + $0x2c] sm:$0xf]
      %v4590 = vld [vmem:[%s4291 + $0x30] sm:$0xf]
      %v4591 = vld [vmem:[%s4291 + $0x34] sm:$0xf]
      %v4592 = vld [vmem:[%s4291 + $0x38] sm:$0x1]
      %v4593 = vld [vmem:[%s4291 + $0x3c] sm:$0xf]
      %v4594 = vld [vmem:[%s4291 + $0x40] sm:$0xf]
      %v4595 = vld [vmem:[%s4291 + $0x44] sm:$0xf]
      %v4596 = vld [vmem:[%s4291 + $0x48] sm:$0xf]
      %v4597 = vld [vmem:[%s4291 + $0x4c] sm:$0x1]
      %v4598 = vld [vmem:[%s4291 + $0x50] sm:$0xf]
      %v4599 = vld [vmem:[%s4291 + $0x54] sm:$0xf]
      %v4600 = vld [vmem:[%s4291 + $0x58] sm:$0xf]
      %v4601 = vld [vmem:[%s4291 + $0x5c] sm:$0xf]
      %v4602 = vld [vmem:[%s4291 + $0x60] sm:$0x1]
      %v4603 = vld [vmem:[%s4291 + $0x64] sm:$0xf]
      %v4604 = vld [vmem:[%s4291 + $0x68] sm:$0xf]
      %v4605 = vld [vmem:[%s4291 + $0x6c] sm:$0xf]
      %v4606 = vld [vmem:[%s4291 + $0x70] sm:$0xf]
      %v4607 = vld [vmem:[%s4291 + $0x74] sm:$0x1]
      %v4608 = vld [vmem:[%s4291 + $0x78] sm:$0xf]
      %v4609 = vld [vmem:[%s4291 + $0x7c] sm:$0xf]
      %v4610 = vld [vmem:[%s4291 + $0x80] sm:$0xf]
      %v4611 = vld [vmem:[%s4291 + $0x84] sm:$0xf]
      %v4612 = vld [vmem:[%s4291 + $0x88] sm:$0x1]
      %v4613 = vld [vmem:[%s4291 + $0x8c] sm:$0xf]
      %v4614 = vld [vmem:[%s4291 + $0x90] sm:$0xf]
      %v4615 = vld [vmem:[%s4291 + $0x94] sm:$0xf]
      %v4616 = vld [vmem:[%s4291 + $0x98] sm:$0xf]
      %v4617 = vld [vmem:[%s4291 + $0x9c] sm:$0x1]
      %v4619 = vshrl.u32 %v4578, 16
      %v4621 = vrot.slane %v4619, 4
      %v4622 = vshll.u32 %v4578, 16
      %v4624 = vrot.slane %v4622, 5
      %v4625 = vor.u32 %v4621, %v4624
      %v4626 = vrot.slane %v4625, 4
      %v4628 = vshll.u32 %v4579, 16
      %v4630 = vrot.slane %v4628, 5
      %v4631 = vsel %vm285, %v4626, %v4630
      %v4632 = vshrl.u32 %v4579, 16
      %v4634 = vrot.slane %v4632, 4
      %v4635 = vor.u32 %v4634, %v4630
      %v4636 = vrot.slane %v4635, 4
      %v4638 = vshll.u32 %v4580, 16
      %v4640 = vrot.slane %v4638, 5
      %v4641 = vsel %vm285, %v4636, %v4640
      %v4642 = vshrl.u32 %v4580, 16
      %v4644 = vrot.slane %v4642, 4
      %v4645 = vor.u32 %v4644, %v4640
      %v4646 = vrot.slane %v4645, 4
      %v4648 = vshll.u32 %v4581, 16
      %v4650 = vrot.slane %v4648, 5
      %v4651 = vsel %vm285, %v4646, %v4650
      %v4652 = vshrl.u32 %v4581, 16
      %v4654 = vrot.slane %v4652, 4
      %v4655 = vor.u32 %v4654, %v4650
      %v4656 = vrot.slane %v4655, 4
      %v4658 = vshll.u32 %v4582, 16
      %v4660 = vrot.slane %v4658, 5
      %v4661 = vsel %vm285, %v4656, %v4660
      %v4663 = vshrl.u32 %v4583, 16
      %v4665 = vrot.slane %v4663, 4
      %v4666 = vshll.u32 %v4583, 16
      %v4668 = vrot.slane %v4666, 5
      %v4669 = vor.u32 %v4665, %v4668
      %v4670 = vrot.slane %v4669, 4
      %v4672 = vshll.u32 %v4584, 16
      %v4674 = vrot.slane %v4672, 5
      %v4675 = vsel %vm285, %v4670, %v4674
      %v4676 = vshrl.u32 %v4584, 16
      %v4678 = vrot.slane %v4676, 4
      %v4679 = vor.u32 %v4678, %v4674
      %v4680 = vrot.slane %v4679, 4
      %v4682 = vshll.u32 %v4585, 16
      %v4684 = vrot.slane %v4682, 5
      %v4685 = vsel %vm285, %v4680, %v4684
      %v4686 = vshrl.u32 %v4585, 16
      %v4688 = vrot.slane %v4686, 4
      %v4689 = vor.u32 %v4688, %v4684
      %v4690 = vrot.slane %v4689, 4
      %v4692 = vshll.u32 %v4586, 16
      %v4694 = vrot.slane %v4692, 5
      %v4695 = vsel %vm285, %v4690, %v4694
      %v4696 = vshrl.u32 %v4586, 16
      %v4698 = vrot.slane %v4696, 4
      %v4699 = vor.u32 %v4698, %v4694
      %v4700 = vrot.slane %v4699, 4
      %v4702 = vshll.u32 %v4587, 16
      %v4704 = vrot.slane %v4702, 5
      %v4705 = vsel %vm285, %v4700, %v4704
      %v4707 = vshrl.u32 %v4588, 16
      %v4709 = vrot.slane %v4707, 4
      %v4710 = vshll.u32 %v4588, 16
      %v4712 = vrot.slane %v4710, 5
      %v4713 = vor.u32 %v4709, %v4712
      %v4714 = vrot.slane %v4713, 4
      %v4716 = vshll.u32 %v4589, 16
      %v4718 = vrot.slane %v4716, 5
      %v4719 = vsel %vm285, %v4714, %v4718
      %v4720 = vshrl.u32 %v4589, 16
      %v4722 = vrot.slane %v4720, 4
      %v4723 = vor.u32 %v4722, %v4718
      %v4724 = vrot.slane %v4723, 4
      %v4726 = vshll.u32 %v4590, 16
      %v4728 = vrot.slane %v4726, 5
      %v4729 = vsel %vm285, %v4724, %v4728
      %v4730 = vshrl.u32 %v4590, 16
      %v4732 = vrot.slane %v4730, 4
      %v4733 = vor.u32 %v4732, %v4728
      %v4734 = vrot.slane %v4733, 4
      %v4736 = vshll.u32 %v4591, 16
      %v4738 = vrot.slane %v4736, 5
      %v4739 = vsel %vm285, %v4734, %v4738
      %v4740 = vshrl.u32 %v4591, 16
      %v4742 = vrot.slane %v4740, 4
      %v4743 = vor.u32 %v4742, %v4738
      %v4744 = vrot.slane %v4743, 4
      %v4746 = vshll.u32 %v4592, 16
      %v4748 = vrot.slane %v4746, 5
      %v4749 = vsel %vm285, %v4744, %v4748
      %v4751 = vshrl.u32 %v4593, 16
      %v4753 = vrot.slane %v4751, 4
      %v4754 = vshll.u32 %v4593, 16
      %v4756 = vrot.slane %v4754, 5
      %v4757 = vor.u32 %v4753, %v4756
      %v4758 = vrot.slane %v4757, 4
      %v4760 = vshll.u32 %v4594, 16
      %v4762 = vrot.slane %v4760, 5
      %v4763 = vsel %vm285, %v4758, %v4762
      %v4764 = vshrl.u32 %v4594, 16
      %v4766 = vrot.slane %v4764, 4
      %v4767 = vor.u32 %v4766, %v4762
      %v4768 = vrot.slane %v4767, 4
      %v4770 = vshll.u32 %v4595, 16
      %v4772 = vrot.slane %v4770, 5
      %v4773 = vsel %vm285, %v4768, %v4772
      %v4774 = vshrl.u32 %v4595, 16
      %v4776 = vrot.slane %v4774, 4
      %v4777 = vor.u32 %v4776, %v4772
      %v4778 = vrot.slane %v4777, 4
      %v4780 = vshll.u32 %v4596, 16
      %v4782 = vrot.slane %v4780, 5
      %v4783 = vsel %vm285, %v4778, %v4782
      %v4784 = vshrl.u32 %v4596, 16
      %v4786 = vrot.slane %v4784, 4
      %v4787 = vor.u32 %v4786, %v4782
      %v4788 = vrot.slane %v4787, 4
      %v4790 = vshll.u32 %v4597, 16
      %v4792 = vrot.slane %v4790, 5
      %v4793 = vsel %vm285, %v4788, %v4792
      %v4795 = vshrl.u32 %v4598, 16
      %v4797 = vrot.slane %v4795, 4
      %v4798 = vshll.u32 %v4598, 16
      %v4800 = vrot.slane %v4798, 5
      %v4801 = vor.u32 %v4797, %v4800
      %v4802 = vrot.slane %v4801, 4
      %v4804 = vshll.u32 %v4599, 16
      %v4806 = vrot.slane %v4804, 5
      %v4807 = vsel %vm285, %v4802, %v4806
      %v4808 = vshrl.u32 %v4599, 16
      %v4810 = vrot.slane %v4808, 4
      %v4811 = vor.u32 %v4810, %v4806
      %v4812 = vrot.slane %v4811, 4
      %v4814 = vshll.u32 %v4600, 16
      %v4816 = vrot.slane %v4814, 5
      %v4817 = vsel %vm285, %v4812, %v4816
      %v4818 = vshrl.u32 %v4600, 16
      %v4820 = vrot.slane %v4818, 4
      %v4821 = vor.u32 %v4820, %v4816
      %v4822 = vrot.slane %v4821, 4
      %v4824 = vshll.u32 %v4601, 16
      %v4826 = vrot.slane %v4824, 5
      %v4827 = vsel %vm285, %v4822, %v4826
      %v4828 = vshrl.u32 %v4601, 16
      %v4830 = vrot.slane %v4828, 4
      %v4831 = vor.u32 %v4830, %v4826
      %v4832 = vrot.slane %v4831, 4
      %v4834 = vshll.u32 %v4602, 16
      %v4836 = vrot.slane %v4834, 5
      %v4837 = vsel %vm285, %v4832, %v4836
      %v4839 = vshrl.u32 %v4603, 16
      %v4841 = vrot.slane %v4839, 4
      %v4842 = vshll.u32 %v4603, 16
      %v4844 = vrot.slane %v4842, 5
      %v4845 = vor.u32 %v4841, %v4844
      %v4846 = vrot.slane %v4845, 4
      %v4848 = vshll.u32 %v4604, 16
      %v4850 = vrot.slane %v4848, 5
      %v4851 = vsel %vm285, %v4846, %v4850
      %v4852 = vshrl.u32 %v4604, 16
      %v4854 = vrot.slane %v4852, 4
      %v4855 = vor.u32 %v4854, %v4850
      %v4856 = vrot.slane %v4855, 4
      %v4858 = vshll.u32 %v4605, 16
      %v4860 = vrot.slane %v4858, 5
      %v4861 = vsel %vm285, %v4856, %v4860
      %v4862 = vshrl.u32 %v4605, 16
      %v4864 = vrot.slane %v4862, 4
      %v4865 = vor.u32 %v4864, %v4860
      %v4866 = vrot.slane %v4865, 4
      %v4868 = vshll.u32 %v4606, 16
      %v4870 = vrot.slane %v4868, 5
      %v4871 = vsel %vm285, %v4866, %v4870
      %v4872 = vshrl.u32 %v4606, 16
      %v4874 = vrot.slane %v4872, 4
      %v4875 = vor.u32 %v4874, %v4870
      %v4876 = vrot.slane %v4875, 4
      %v4878 = vshll.u32 %v4607, 16
      %v4880 = vrot.slane %v4878, 5
      %v4881 = vsel %vm285, %v4876, %v4880
      %v4883 = vshrl.u32 %v4608, 16
      %v4885 = vrot.slane %v4883, 4
      %v4886 = vshll.u32 %v4608, 16
      %v4888 = vrot.slane %v4886, 5
      %v4889 = vor.u32 %v4885, %v4888
      %v4890 = vrot.slane %v4889, 4
      %v4892 = vshll.u32 %v4609, 16
      %v4894 = vrot.slane %v4892, 5
      %v4895 = vsel %vm285, %v4890, %v4894
      %v4896 = vshrl.u32 %v4609, 16
      %v4898 = vrot.slane %v4896, 4
      %v4899 = vor.u32 %v4898, %v4894
      %v4900 = vrot.slane %v4899, 4
      %v4902 = vshll.u32 %v4610, 16
      %v4904 = vrot.slane %v4902, 5
      %v4905 = vsel %vm285, %v4900, %v4904
      %v4906 = vshrl.u32 %v4610, 16
      %v4908 = vrot.slane %v4906, 4
      %v4909 = vor.u32 %v4908, %v4904
      %v4910 = vrot.slane %v4909, 4
      %v4912 = vshll.u32 %v4611, 16
      %v4914 = vrot.slane %v4912, 5
      %v4915 = vsel %vm285, %v4910, %v4914
      %v4916 = vshrl.u32 %v4611, 16
      %v4918 = vrot.slane %v4916, 4
      %v4919 = vor.u32 %v4918, %v4914
      %v4920 = vrot.slane %v4919, 4
      %v4922 = vshll.u32 %v4612, 16
      %v4924 = vrot.slane %v4922, 5
      %v4925 = vsel %vm285, %v4920, %v4924
      %v4927 = vshrl.u32 %v4613, 16
      %v4929 = vrot.slane %v4927, 4
      %v4930 = vshll.u32 %v4613, 16
      %v4932 = vrot.slane %v4930, 5
      %v4933 = vor.u32 %v4929, %v4932
      %v4934 = vrot.slane %v4933, 4
      %v4936 = vshll.u32 %v4614, 16
      %v4938 = vrot.slane %v4936, 5
      %v4939 = vsel %vm285, %v4934, %v4938
      %v4940 = vshrl.u32 %v4614, 16
      %v4942 = vrot.slane %v4940, 4
      %v4943 = vor.u32 %v4942, %v4938
      %v4944 = vrot.slane %v4943, 4
      %v4946 = vshll.u32 %v4615, 16
      %v4948 = vrot.slane %v4946, 5
      %v4949 = vsel %vm285, %v4944, %v4948
      %v4950 = vshrl.u32 %v4615, 16
      %v4952 = vrot.slane %v4950, 4
      %v4953 = vor.u32 %v4952, %v4948
      %v4954 = vrot.slane %v4953, 4
      %v4956 = vshll.u32 %v4616, 16
      %v4958 = vrot.slane %v4956, 5
      %v4959 = vsel %vm285, %v4954, %v4958
      %v4960 = vshrl.u32 %v4616, 16
      %v4962 = vrot.slane %v4960, 4
      %v4963 = vor.u32 %v4962, %v4958
      %v4964 = vrot.slane %v4963, 4
      %v4966 = vshll.u32 %v4617, 16
      %v4968 = vrot.slane %v4966, 5
      %v4969 = vsel %vm285, %v4964, %v4968
      %s4970 = scalar_lea.vmem %s3, 16
      %v4971 = vld [vmem:[%s4970] sm:$0xf]
      %v4972 = vunpack.c.l.b16 %v4631
      %v4973 = vunpack.c.l.b16 %v4641
      %v4974 = vunpack.c.l.b16 %v4651
      %v4975 = vunpack.c.l.b16 %v4661
      %v4976 = vunpack.c.l.b16 %v4675
      %v4977 = vunpack.c.l.b16 %v4685
      %v4978 = vunpack.c.l.b16 %v4695
      %v4979 = vunpack.c.l.b16 %v4705
      %v4980 = vunpack.c.l.b16 %v4719
      %v4981 = vunpack.c.l.b16 %v4729
      %v4982 = vunpack.c.l.b16 %v4739
      %v4983 = vunpack.c.l.b16 %v4749
      %v4984 = vunpack.c.l.b16 %v4763
      %v4985 = vunpack.c.l.b16 %v4773
      %v4986 = vunpack.c.l.b16 %v4783
      %v4987 = vunpack.c.l.b16 %v4793
      %v4988 = vunpack.c.l.b16 %v4807
      %v4989 = vunpack.c.l.b16 %v4817
      %v4990 = vunpack.c.l.b16 %v4827
      %v4991 = vunpack.c.l.b16 %v4837
      %v4992 = vunpack.c.l.b16 %v4851
      %v4993 = vunpack.c.l.b16 %v4861
      %v4994 = vunpack.c.l.b16 %v4871
      %v4995 = vunpack.c.l.b16 %v4881
      %v4996 = vunpack.c.l.b16 %v4895
      %v4997 = vunpack.c.l.b16 %v4905
      %v4998 = vunpack.c.l.b16 %v4915
      %v4999 = vunpack.c.l.b16 %v4925
      %v5000 = vunpack.c.l.b16 %v4939
      %v5001 = vunpack.c.l.b16 %v4949
      %v5002 = vunpack.c.l.b16 %v4959
      %v5003 = vunpack.c.l.b16 %v4969
      %v5004 = vpack.c.b16 %v4973, %v4972
      %v5005 = vpack.c.b16 %v4975, %v4974
      %v5006 = vpack.c.b16 %v4977, %v4976
      %v5007 = vpack.c.b16 %v4979, %v4978
      %v5008 = vpack.c.b16 %v4981, %v4980
      %v5009 = vpack.c.b16 %v4983, %v4982
      %v5010 = vpack.c.b16 %v4985, %v4984
      %v5011 = vpack.c.b16 %v4987, %v4986
      %v5012 = vpack.c.b16 %v4989, %v4988
      %v5013 = vpack.c.b16 %v4991, %v4990
      %v5014 = vpack.c.b16 %v4993, %v4992
      %v5015 = vpack.c.b16 %v4995, %v4994
      %v5016 = vpack.c.b16 %v4997, %v4996
      %v5017 = vpack.c.b16 %v4999, %v4998
      %v5018 = vpack.c.b16 %v5001, %v5000
      %v5019 = vpack.c.b16 %v5003, %v5002
      %v5021 = vsel %vm3579, %v5004, 0
      %v5024 = vsel %vm3579, %v5005, 0
      %v5027 = vsel %vm3579, %v5006, 0
      %v5030 = vsel %vm3579, %v5007, 0
      %v5033 = vsel %vm3579, %v5008, 0
      %v5036 = vsel %vm3579, %v5009, 0
      %v5039 = vsel %vm3579, %v5010, 0
      %v5042 = vsel %vm3579, %v5011, 0
      %v5045 = vsel %vm3579, %v5012, 0
      %v5048 = vsel %vm3579, %v5013, 0
      %v5051 = vsel %vm3579, %v5014, 0
      %v5054 = vsel %vm3579, %v5015, 0
      %v5057 = vsel %vm3579, %v5016, 0
      %v5060 = vsel %vm3579, %v5017, 0
      %v5063 = vsel %vm3579, %v5018, 0
      %v5066 = vsel %vm3579, %v5019, 0
      %v5069 = vsel %vm3628, %v4971, 0
      %5071 = vmatpush.bf16.msra.mxu0 0
      %5072 = vmatpush.bf16.msra.mxu0 0
      %5073 = vmatpush.bf16.msra.mxu0 0
      %5074 = vmatpush.bf16.msra.mxu0 0
      %5075 = vmatpush.bf16.msra.mxu0 0
      %5076 = vmatpush.bf16.msra.mxu0 0
      %5077 = vmatpush.bf16.msra.mxu0 0
      %5078 = vmatpush.bf16.msra.mxu0 %v5069
      %5079 = vmatmul.bf16.gmra.mxu0 %v5021
      %v5080 = vpop.f32.mrf.mxu0
      %v5081 = vadd.f32 0.0, %v5080
      %v5082 = vpop.f32.mrf.mxu0
      %v5083 = vadd.f32 0.0, %v5082
      %5084 = vmatmul.bf16.gmra.mxu0 %v5024
      %v5085 = vpop.f32.mrf.mxu0
      %v5086 = vadd.f32 0.0, %v5085
      %v5087 = vpop.f32.mrf.mxu0
      %v5088 = vadd.f32 0.0, %v5087
      %5089 = vmatmul.bf16.gmra.mxu0 %v5027
      %v5090 = vpop.f32.mrf.mxu0
      %v5091 = vadd.f32 0.0, %v5090
      %v5092 = vpop.f32.mrf.mxu0
      %v5093 = vadd.f32 0.0, %v5092
      %5094 = vmatmul.bf16.gmra.mxu0 %v5030
      %v5095 = vpop.f32.mrf.mxu0
      %v5096 = vadd.f32 0.0, %v5095
      %v5097 = vpop.f32.mrf.mxu0
      %v5098 = vadd.f32 0.0, %v5097
      %5099 = vmatmul.bf16.gmra.mxu0 %v5033
      %v5100 = vpop.f32.mrf.mxu0
      %v5101 = vadd.f32 0.0, %v5100
      %v5102 = vpop.f32.mrf.mxu0
      %v5103 = vadd.f32 0.0, %v5102
      %5104 = vmatmul.bf16.gmra.mxu0 %v5036
      %v5105 = vpop.f32.mrf.mxu0
      %v5106 = vadd.f32 0.0, %v5105
      %v5107 = vpop.f32.mrf.mxu0
      %v5108 = vadd.f32 0.0, %v5107
      %5109 = vmatmul.bf16.gmra.mxu0 %v5039
      %v5110 = vpop.f32.mrf.mxu0
      %v5111 = vadd.f32 0.0, %v5110
      %v5112 = vpop.f32.mrf.mxu0
      %v5113 = vadd.f32 0.0, %v5112
      %5114 = vmatmul.bf16.gmra.mxu0 %v5042
      %v5115 = vpop.f32.mrf.mxu0
      %v5116 = vadd.f32 0.0, %v5115
      %v5117 = vpop.f32.mrf.mxu0
      %v5118 = vadd.f32 0.0, %v5117
      %5119 = vmatmul.bf16.gmra.mxu0 %v5045
      %v5120 = vpop.f32.mrf.mxu0
      %v5121 = vadd.f32 0.0, %v5120
      %v5122 = vpop.f32.mrf.mxu0
      %v5123 = vadd.f32 0.0, %v5122
      %5124 = vmatmul.bf16.gmra.mxu0 %v5048
      %v5125 = vpop.f32.mrf.mxu0
      %v5126 = vadd.f32 0.0, %v5125
      %v5127 = vpop.f32.mrf.mxu0
      %v5128 = vadd.f32 0.0, %v5127
      %5129 = vmatmul.bf16.gmra.mxu0 %v5051
      %v5130 = vpop.f32.mrf.mxu0
      %v5131 = vadd.f32 0.0, %v5130
      %v5132 = vpop.f32.mrf.mxu0
      %v5133 = vadd.f32 0.0, %v5132
      %5134 = vmatmul.bf16.gmra.mxu0 %v5054
      %v5135 = vpop.f32.mrf.mxu0
      %v5136 = vadd.f32 0.0, %v5135
      %v5137 = vpop.f32.mrf.mxu0
      %v5138 = vadd.f32 0.0, %v5137
      %5139 = vmatmul.bf16.gmra.mxu0 %v5057
      %v5140 = vpop.f32.mrf.mxu0
      %v5141 = vadd.f32 0.0, %v5140
      %v5142 = vpop.f32.mrf.mxu0
      %v5143 = vadd.f32 0.0, %v5142
      %5144 = vmatmul.bf16.gmra.mxu0 %v5060
      %v5145 = vpop.f32.mrf.mxu0
      %v5146 = vadd.f32 0.0, %v5145
      %v5147 = vpop.f32.mrf.mxu0
      %v5148 = vadd.f32 0.0, %v5147
      %5149 = vmatmul.bf16.gmra.mxu0 %v5063
      %v5150 = vpop.f32.mrf.mxu0
      %v5151 = vadd.f32 0.0, %v5150
      %v5152 = vpop.f32.mrf.mxu0
      %v5153 = vadd.f32 0.0, %v5152
      %5154 = vmatmul.bf16.gmra.mxu0 %v5066
      %v5155 = vpop.f32.mrf.mxu0
      %v5156 = vadd.f32 0.0, %v5155
      %v5157 = vpop.f32.mrf.mxu0
      %v5158 = vadd.f32 0.0, %v5157
      %5159 = vdwg.mxu0
      %v5160 = vadd.f32 %v4546, %v5081
      %v5161 = vadd.f32 %v4547, %v5083
      %v5162 = vadd.f32 %v4548, %v5086
      %v5163 = vadd.f32 %v4549, %v5088
      %v5164 = vadd.f32 %v4550, %v5091
      %v5165 = vadd.f32 %v4551, %v5093
      %v5166 = vadd.f32 %v4552, %v5096
      %v5167 = vadd.f32 %v4553, %v5098
      %v5168 = vadd.f32 %v4554, %v5101
      %v5169 = vadd.f32 %v4555, %v5103
      %v5170 = vadd.f32 %v4556, %v5106
      %v5171 = vadd.f32 %v4557, %v5108
      %v5172 = vadd.f32 %v4558, %v5111
      %v5173 = vadd.f32 %v4559, %v5113
      %v5174 = vadd.f32 %v4560, %v5116
      %v5175 = vadd.f32 %v4561, %v5118
      %v5176 = vadd.f32 %v4562, %v5121
      %v5177 = vadd.f32 %v4563, %v5123
      %v5178 = vadd.f32 %v4564, %v5126
      %v5179 = vadd.f32 %v4565, %v5128
      %v5180 = vadd.f32 %v4566, %v5131
      %v5181 = vadd.f32 %v4567, %v5133
      %v5182 = vadd.f32 %v4568, %v5136
      %v5183 = vadd.f32 %v4569, %v5138
      %v5184 = vadd.f32 %v4570, %v5141
      %v5185 = vadd.f32 %v4571, %v5143
      %v5186 = vadd.f32 %v4572, %v5146
      %v5187 = vadd.f32 %v4573, %v5148
      %v5188 = vadd.f32 %v4574, %v5151
      %v5189 = vadd.f32 %v4575, %v5153
      %v5190 = vadd.f32 %v4576, %v5156
      %v5191 = vadd.f32 %v4577, %v5158
      %v5192 = vld [vmem:[%s4291] sm:$0xe]
      %v5193 = vld [vmem:[%s4291 + $0x14] sm:$0xe]
      %v5194 = vld [vmem:[%s4291 + $0x28] sm:$0xe]
      %v5195 = vld [vmem:[%s4291 + $0x3c] sm:$0xe]
      %v5196 = vld [vmem:[%s4291 + $0x50] sm:$0xe]
      %v5197 = vld [vmem:[%s4291 + $0x64] sm:$0xe]
      %v5198 = vld [vmem:[%s4291 + $0x78] sm:$0xe]
      %v5199 = vld [vmem:[%s4291 + $0x8c] sm:$0xe]
      %v5240 = vrot.slane %v5192, 5
      %v5241 = vrot.slane %v5240, 4
      %v5242 = vrot.slane %v4579, 5
      %v5243 = vsel %vm917, %v5241, %v5242
      %v5244 = vrot.slane %v5242, 4
      %v5245 = vrot.slane %v4580, 5
      %v5246 = vsel %vm917, %v5244, %v5245
      %v5247 = vrot.slane %v5245, 4
      %v5248 = vrot.slane %v4581, 5
      %v5249 = vsel %vm917, %v5247, %v5248
      %v5250 = vrot.slane %v5248, 4
      %v5251 = vrot.slane %v4582, 5
      %v5252 = vsel %vm917, %v5250, %v5251
      %v5253 = vrot.slane %v5193, 5
      %v5254 = vrot.slane %v5253, 4
      %v5255 = vrot.slane %v4584, 5
      %v5256 = vsel %vm917, %v5254, %v5255
      %v5257 = vrot.slane %v5255, 4
      %v5258 = vrot.slane %v4585, 5
      %v5259 = vsel %vm917, %v5257, %v5258
      %v5260 = vrot.slane %v5258, 4
      %v5261 = vrot.slane %v4586, 5
      %v5262 = vsel %vm917, %v5260, %v5261
      %v5263 = vrot.slane %v5261, 4
      %v5264 = vrot.slane %v4587, 5
      %v5265 = vsel %vm917, %v5263, %v5264
      %v5266 = vrot.slane %v5194, 5
      %v5267 = vrot.slane %v5266, 4
      %v5268 = vrot.slane %v4589, 5
      %v5269 = vsel %vm917, %v5267, %v5268
      %v5270 = vrot.slane %v5268, 4
      %v5271 = vrot.slane %v4590, 5
      %v5272 = vsel %vm917, %v5270, %v5271
      %v5273 = vrot.slane %v5271, 4
      %v5274 = vrot.slane %v4591, 5
      %v5275 = vsel %vm917, %v5273, %v5274
      %v5276 = vrot.slane %v5274, 4
      %v5277 = vrot.slane %v4592, 5
      %v5278 = vsel %vm917, %v5276, %v5277
      %v5279 = vrot.slane %v5195, 5
      %v5280 = vrot.slane %v5279, 4
      %v5281 = vrot.slane %v4594, 5
      %v5282 = vsel %vm917, %v5280, %v5281
      %v5283 = vrot.slane %v5281, 4
      %v5284 = vrot.slane %v4595, 5
      %v5285 = vsel %vm917, %v5283, %v5284
      %v5286 = vrot.slane %v5284, 4
      %v5287 = vrot.slane %v4596, 5
      %v5288 = vsel %vm917, %v5286, %v5287
      %v5289 = vrot.slane %v5287, 4
      %v5290 = vrot.slane %v4597, 5
      %v5291 = vsel %vm917, %v5289, %v5290
      %v5292 = vrot.slane %v5196, 5
      %v5293 = vrot.slane %v5292, 4
      %v5294 = vrot.slane %v4599, 5
      %v5295 = vsel %vm917, %v5293, %v5294
      %v5296 = vrot.slane %v5294, 4
      %v5297 = vrot.slane %v4600, 5
      %v5298 = vsel %vm917, %v5296, %v5297
      %v5299 = vrot.slane %v5297, 4
      %v5300 = vrot.slane %v4601, 5
      %v5301 = vsel %vm917, %v5299, %v5300
      %v5302 = vrot.slane %v5300, 4
      %v5303 = vrot.slane %v4602, 5
      %v5304 = vsel %vm917, %v5302, %v5303
      %v5305 = vrot.slane %v5197, 5
      %v5306 = vrot.slane %v5305, 4
      %v5307 = vrot.slane %v4604, 5
      %v5308 = vsel %vm917, %v5306, %v5307
      %v5309 = vrot.slane %v5307, 4
      %v5310 = vrot.slane %v4605, 5
      %v5311 = vsel %vm917, %v5309, %v5310
      %v5312 = vrot.slane %v5310, 4
      %v5313 = vrot.slane %v4606, 5
      %v5314 = vsel %vm917, %v5312, %v5313
      %v5315 = vrot.slane %v5313, 4
      %v5316 = vrot.slane %v4607, 5
      %v5317 = vsel %vm917, %v5315, %v5316
      %v5318 = vrot.slane %v5198, 5
      %v5319 = vrot.slane %v5318, 4
      %v5320 = vrot.slane %v4609, 5
      %v5321 = vsel %vm917, %v5319, %v5320
      %v5322 = vrot.slane %v5320, 4
      %v5323 = vrot.slane %v4610, 5
      %v5324 = vsel %vm917, %v5322, %v5323
      %v5325 = vrot.slane %v5323, 4
      %v5326 = vrot.slane %v4611, 5
      %v5327 = vsel %vm917, %v5325, %v5326
      %v5328 = vrot.slane %v5326, 4
      %v5329 = vrot.slane %v4612, 5
      %v5330 = vsel %vm917, %v5328, %v5329
      %v5331 = vrot.slane %v5199, 5
      %v5332 = vrot.slane %v5331, 4
      %v5333 = vrot.slane %v4614, 5
      %v5334 = vsel %vm917, %v5332, %v5333
      %v5335 = vrot.slane %v5333, 4
      %v5336 = vrot.slane %v4615, 5
      %v5337 = vsel %vm917, %v5335, %v5336
      %v5338 = vrot.slane %v5336, 4
      %v5339 = vrot.slane %v4616, 5
      %v5340 = vsel %vm917, %v5338, %v5339
      %v5341 = vrot.slane %v5339, 4
      %v5342 = vrot.slane %v4617, 5
      %v5343 = vsel %vm917, %v5341, %v5342
      %s5344 = scalar_lea.vmem %s3, 20
      %v5345 = vld [vmem:[%s5344] sm:$0xf]
      %v5346 = vunpack.c.l.b16 %v5243
      %v5347 = vunpack.c.l.b16 %v5246
      %v5348 = vunpack.c.l.b16 %v5249
      %v5349 = vunpack.c.l.b16 %v5252
      %v5350 = vunpack.c.l.b16 %v5256
      %v5351 = vunpack.c.l.b16 %v5259
      %v5352 = vunpack.c.l.b16 %v5262
      %v5353 = vunpack.c.l.b16 %v5265
      %v5354 = vunpack.c.l.b16 %v5269
      %v5355 = vunpack.c.l.b16 %v5272
      %v5356 = vunpack.c.l.b16 %v5275
      %v5357 = vunpack.c.l.b16 %v5278
      %v5358 = vunpack.c.l.b16 %v5282
      %v5359 = vunpack.c.l.b16 %v5285
      %v5360 = vunpack.c.l.b16 %v5288
      %v5361 = vunpack.c.l.b16 %v5291
      %v5362 = vunpack.c.l.b16 %v5295
      %v5363 = vunpack.c.l.b16 %v5298
      %v5364 = vunpack.c.l.b16 %v5301
      %v5365 = vunpack.c.l.b16 %v5304
      %v5366 = vunpack.c.l.b16 %v5308
      %v5367 = vunpack.c.l.b16 %v5311
      %v5368 = vunpack.c.l.b16 %v5314
      %v5369 = vunpack.c.l.b16 %v5317
      %v5370 = vunpack.c.l.b16 %v5321
      %v5371 = vunpack.c.l.b16 %v5324
      %v5372 = vunpack.c.l.b16 %v5327
      %v5373 = vunpack.c.l.b16 %v5330
      %v5374 = vunpack.c.l.b16 %v5334
      %v5375 = vunpack.c.l.b16 %v5337
      %v5376 = vunpack.c.l.b16 %v5340
      %v5377 = vunpack.c.l.b16 %v5343
      %v5378 = vpack.c.b16 %v5347, %v5346
      %v5379 = vpack.c.b16 %v5349, %v5348
      %v5380 = vpack.c.b16 %v5351, %v5350
      %v5381 = vpack.c.b16 %v5353, %v5352
      %v5382 = vpack.c.b16 %v5355, %v5354
      %v5383 = vpack.c.b16 %v5357, %v5356
      %v5384 = vpack.c.b16 %v5359, %v5358
      %v5385 = vpack.c.b16 %v5361, %v5360
      %v5386 = vpack.c.b16 %v5363, %v5362
      %v5387 = vpack.c.b16 %v5365, %v5364
      %v5388 = vpack.c.b16 %v5367, %v5366
      %v5389 = vpack.c.b16 %v5369, %v5368
      %v5390 = vpack.c.b16 %v5371, %v5370
      %v5391 = vpack.c.b16 %v5373, %v5372
      %v5392 = vpack.c.b16 %v5375, %v5374
      %v5393 = vpack.c.b16 %v5377, %v5376
      %v5395 = vsel %vm3579, %v5378, 0
      %v5398 = vsel %vm3579, %v5379, 0
      %v5401 = vsel %vm3579, %v5380, 0
      %v5404 = vsel %vm3579, %v5381, 0
      %v5407 = vsel %vm3579, %v5382, 0
      %v5410 = vsel %vm3579, %v5383, 0
      %v5413 = vsel %vm3579, %v5384, 0
      %v5416 = vsel %vm3579, %v5385, 0
      %v5419 = vsel %vm3579, %v5386, 0
      %v5422 = vsel %vm3579, %v5387, 0
      %v5425 = vsel %vm3579, %v5388, 0
      %v5428 = vsel %vm3579, %v5389, 0
      %v5431 = vsel %vm3579, %v5390, 0
      %v5434 = vsel %vm3579, %v5391, 0
      %v5437 = vsel %vm3579, %v5392, 0
      %v5440 = vsel %vm3579, %v5393, 0
      %v5443 = vsel %vm3628, %v5345, 0
      %5445 = vmatpush.bf16.msra.mxu0 0
      %5446 = vmatpush.bf16.msra.mxu0 0
      %5447 = vmatpush.bf16.msra.mxu0 0
      %5448 = vmatpush.bf16.msra.mxu0 0
      %5449 = vmatpush.bf16.msra.mxu0 0
      %5450 = vmatpush.bf16.msra.mxu0 0
      %5451 = vmatpush.bf16.msra.mxu0 0
      %5452 = vmatpush.bf16.msra.mxu0 %v5443
      %5453 = vmatmul.bf16.gmra.mxu0 %v5395
      %v5454 = vpop.f32.mrf.mxu0
      %v5455 = vadd.f32 0.0, %v5454
      %v5456 = vpop.f32.mrf.mxu0
      %v5457 = vadd.f32 0.0, %v5456
      %5458 = vmatmul.bf16.gmra.mxu0 %v5398
      %v5459 = vpop.f32.mrf.mxu0
      %v5460 = vadd.f32 0.0, %v5459
      %v5461 = vpop.f32.mrf.mxu0
      %v5462 = vadd.f32 0.0, %v5461
      %5463 = vmatmul.bf16.gmra.mxu0 %v5401
      %v5464 = vpop.f32.mrf.mxu0
      %v5465 = vadd.f32 0.0, %v5464
      %v5466 = vpop.f32.mrf.mxu0
      %v5467 = vadd.f32 0.0, %v5466
      %5468 = vmatmul.bf16.gmra.mxu0 %v5404
      %v5469 = vpop.f32.mrf.mxu0
      %v5470 = vadd.f32 0.0, %v5469
      %v5471 = vpop.f32.mrf.mxu0
      %v5472 = vadd.f32 0.0, %v5471
      %5473 = vmatmul.bf16.gmra.mxu0 %v5407
      %v5474 = vpop.f32.mrf.mxu0
      %v5475 = vadd.f32 0.0, %v5474
      %v5476 = vpop.f32.mrf.mxu0
      %v5477 = vadd.f32 0.0, %v5476
      %5478 = vmatmul.bf16.gmra.mxu0 %v5410
      %v5479 = vpop.f32.mrf.mxu0
      %v5480 = vadd.f32 0.0, %v5479
      %v5481 = vpop.f32.mrf.mxu0
      %v5482 = vadd.f32 0.0, %v5481
      %5483 = vmatmul.bf16.gmra.mxu0 %v5413
      %v5484 = vpop.f32.mrf.mxu0
      %v5485 = vadd.f32 0.0, %v5484
      %v5486 = vpop.f32.mrf.mxu0
      %v5487 = vadd.f32 0.0, %v5486
      %5488 = vmatmul.bf16.gmra.mxu0 %v5416
      %v5489 = vpop.f32.mrf.mxu0
      %v5490 = vadd.f32 0.0, %v5489
      %v5491 = vpop.f32.mrf.mxu0
      %v5492 = vadd.f32 0.0, %v5491
      %5493 = vmatmul.bf16.gmra.mxu0 %v5419
      %v5494 = vpop.f32.mrf.mxu0
      %v5495 = vadd.f32 0.0, %v5494
      %v5496 = vpop.f32.mrf.mxu0
      %v5497 = vadd.f32 0.0, %v5496
      %5498 = vmatmul.bf16.gmra.mxu0 %v5422
      %v5499 = vpop.f32.mrf.mxu0
      %v5500 = vadd.f32 0.0, %v5499
      %v5501 = vpop.f32.mrf.mxu0
      %v5502 = vadd.f32 0.0, %v5501
      %5503 = vmatmul.bf16.gmra.mxu0 %v5425
      %v5504 = vpop.f32.mrf.mxu0
      %v5505 = vadd.f32 0.0, %v5504
      %v5506 = vpop.f32.mrf.mxu0
      %v5507 = vadd.f32 0.0, %v5506
      %5508 = vmatmul.bf16.gmra.mxu0 %v5428
      %v5509 = vpop.f32.mrf.mxu0
      %v5510 = vadd.f32 0.0, %v5509
      %v5511 = vpop.f32.mrf.mxu0
      %v5512 = vadd.f32 0.0, %v5511
      %5513 = vmatmul.bf16.gmra.mxu0 %v5431
      %v5514 = vpop.f32.mrf.mxu0
      %v5515 = vadd.f32 0.0, %v5514
      %v5516 = vpop.f32.mrf.mxu0
      %v5517 = vadd.f32 0.0, %v5516
      %5518 = vmatmul.bf16.gmra.mxu0 %v5434
      %v5519 = vpop.f32.mrf.mxu0
      %v5520 = vadd.f32 0.0, %v5519
      %v5521 = vpop.f32.mrf.mxu0
      %v5522 = vadd.f32 0.0, %v5521
      %5523 = vmatmul.bf16.gmra.mxu0 %v5437
      %v5524 = vpop.f32.mrf.mxu0
      %v5525 = vadd.f32 0.0, %v5524
      %v5526 = vpop.f32.mrf.mxu0
      %v5527 = vadd.f32 0.0, %v5526
      %5528 = vmatmul.bf16.gmra.mxu0 %v5440
      %v5529 = vpop.f32.mrf.mxu0
      %v5530 = vadd.f32 0.0, %v5529
      %v5531 = vpop.f32.mrf.mxu0
      %v5532 = vadd.f32 0.0, %v5531
      %5533 = vdwg.mxu0
      %v5534 = vadd.f32 %v5160, %v5455
      %v5535 = vadd.f32 %v5161, %v5457
      %v5536 = vadd.f32 %v5162, %v5460
      %v5537 = vadd.f32 %v5163, %v5462
      %v5538 = vadd.f32 %v5164, %v5465
      %v5539 = vadd.f32 %v5165, %v5467
      %v5540 = vadd.f32 %v5166, %v5470
      %v5541 = vadd.f32 %v5167, %v5472
      %v5542 = vadd.f32 %v5168, %v5475
      %v5543 = vadd.f32 %v5169, %v5477
      %v5544 = vadd.f32 %v5170, %v5480
      %v5545 = vadd.f32 %v5171, %v5482
      %v5546 = vadd.f32 %v5172, %v5485
      %v5547 = vadd.f32 %v5173, %v5487
      %v5548 = vadd.f32 %v5174, %v5490
      %v5549 = vadd.f32 %v5175, %v5492
      %v5550 = vadd.f32 %v5176, %v5495
      %v5551 = vadd.f32 %v5177, %v5497
      %v5552 = vadd.f32 %v5178, %v5500
      %v5553 = vadd.f32 %v5179, %v5502
      %v5554 = vadd.f32 %v5180, %v5505
      %v5555 = vadd.f32 %v5181, %v5507
      %v5556 = vadd.f32 %v5182, %v5510
      %v5557 = vadd.f32 %v5183, %v5512
      %v5558 = vadd.f32 %v5184, %v5515
      %v5559 = vadd.f32 %v5185, %v5517
      %v5560 = vadd.f32 %v5186, %v5520
      %v5561 = vadd.f32 %v5187, %v5522
      %v5562 = vadd.f32 %v5188, %v5525
      %v5563 = vadd.f32 %v5189, %v5527
      %v5564 = vadd.f32 %v5190, %v5530
      %v5565 = vadd.f32 %v5191, %v5532
      %s5566 = scalar_lea.vmem [#allocation2], 40
      %v5567 = vld [vmem:[%s5566] sm:$0xf]
      %v5568 = vld [vmem:[%s5566 + $0x4] sm:$0xf]
      %v5569 = vld [vmem:[%s5566 + $0x8] sm:$0xf]
      %v5570 = vld [vmem:[%s5566 + $0xc] sm:$0xf]
      %v5571 = vld [vmem:[%s5566 + $0x14] sm:$0xf]
      %v5572 = vld [vmem:[%s5566 + $0x18] sm:$0xf]
      %v5573 = vld [vmem:[%s5566 + $0x1c] sm:$0xf]
      %v5574 = vld [vmem:[%s5566 + $0x20] sm:$0xf]
      %v5575 = vld [vmem:[%s5566 + $0x28] sm:$0xf]
      %v5576 = vld [vmem:[%s5566 + $0x2c] sm:$0xf]
      %v5577 = vld [vmem:[%s5566 + $0x30] sm:$0xf]
      %v5578 = vld [vmem:[%s5566 + $0x34] sm:$0xf]
      %v5579 = vld [vmem:[%s5566 + $0x3c] sm:$0xf]
      %v5580 = vld [vmem:[%s5566 + $0x40] sm:$0xf]
      %v5581 = vld [vmem:[%s5566 + $0x44] sm:$0xf]
      %v5582 = vld [vmem:[%s5566 + $0x48] sm:$0xf]
      %v5583 = vld [vmem:[%s5566 + $0x50] sm:$0xf]
      %v5584 = vld [vmem:[%s5566 + $0x54] sm:$0xf]
      %v5585 = vld [vmem:[%s5566 + $0x58] sm:$0xf]
      %v5586 = vld [vmem:[%s5566 + $0x5c] sm:$0xf]
      %v5587 = vld [vmem:[%s5566 + $0x64] sm:$0xf]
      %v5588 = vld [vmem:[%s5566 + $0x68] sm:$0xf]
      %v5589 = vld [vmem:[%s5566 + $0x6c] sm:$0xf]
      %v5590 = vld [vmem:[%s5566 + $0x70] sm:$0xf]
      %v5591 = vld [vmem:[%s5566 + $0x78] sm:$0xf]
      %v5592 = vld [vmem:[%s5566 + $0x7c] sm:$0xf]
      %v5593 = vld [vmem:[%s5566 + $0x80] sm:$0xf]
      %v5594 = vld [vmem:[%s5566 + $0x84] sm:$0xf]
      %v5595 = vld [vmem:[%s5566 + $0x8c] sm:$0xf]
      %v5596 = vld [vmem:[%s5566 + $0x90] sm:$0xf]
      %v5597 = vld [vmem:[%s5566 + $0x94] sm:$0xf]
      %v5598 = vld [vmem:[%s5566 + $0x98] sm:$0xf]
      %s5599 = scalar_lea.vmem %s3, 24
      %v5600 = vld [vmem:[%s5599] sm:$0xf]
      %v5633 = vunpack.c.l.b16 %v5567
      %v5634 = vunpack.c.l.b16 %v5568
      %v5635 = vunpack.c.l.b16 %v5569
      %v5636 = vunpack.c.l.b16 %v5570
      %v5637 = vunpack.c.l.b16 %v5571
      %v5638 = vunpack.c.l.b16 %v5572
      %v5639 = vunpack.c.l.b16 %v5573
      %v5640 = vunpack.c.l.b16 %v5574
      %v5641 = vunpack.c.l.b16 %v5575
      %v5642 = vunpack.c.l.b16 %v5576
      %v5643 = vunpack.c.l.b16 %v5577
      %v5644 = vunpack.c.l.b16 %v5578
      %v5645 = vunpack.c.l.b16 %v5579
      %v5646 = vunpack.c.l.b16 %v5580
      %v5647 = vunpack.c.l.b16 %v5581
      %v5648 = vunpack.c.l.b16 %v5582
      %v5649 = vunpack.c.l.b16 %v5583
      %v5650 = vunpack.c.l.b16 %v5584
      %v5651 = vunpack.c.l.b16 %v5585
      %v5652 = vunpack.c.l.b16 %v5586
      %v5653 = vunpack.c.l.b16 %v5587
      %v5654 = vunpack.c.l.b16 %v5588
      %v5655 = vunpack.c.l.b16 %v5589
      %v5656 = vunpack.c.l.b16 %v5590
      %v5657 = vunpack.c.l.b16 %v5591
      %v5658 = vunpack.c.l.b16 %v5592
      %v5659 = vunpack.c.l.b16 %v5593
      %v5660 = vunpack.c.l.b16 %v5594
      %v5661 = vunpack.c.l.b16 %v5595
      %v5662 = vunpack.c.l.b16 %v5596
      %v5663 = vunpack.c.l.b16 %v5597
      %v5664 = vunpack.c.l.b16 %v5598
      %v5665 = vpack.c.b16 %v5634, %v5633
      %v5666 = vpack.c.b16 %v5636, %v5635
      %v5667 = vpack.c.b16 %v5638, %v5637
      %v5668 = vpack.c.b16 %v5640, %v5639
      %v5669 = vpack.c.b16 %v5642, %v5641
      %v5670 = vpack.c.b16 %v5644, %v5643
      %v5671 = vpack.c.b16 %v5646, %v5645
      %v5672 = vpack.c.b16 %v5648, %v5647
      %v5673 = vpack.c.b16 %v5650, %v5649
      %v5674 = vpack.c.b16 %v5652, %v5651
      %v5675 = vpack.c.b16 %v5654, %v5653
      %v5676 = vpack.c.b16 %v5656, %v5655
      %v5677 = vpack.c.b16 %v5658, %v5657
      %v5678 = vpack.c.b16 %v5660, %v5659
      %v5679 = vpack.c.b16 %v5662, %v5661
      %v5680 = vpack.c.b16 %v5664, %v5663
      %v5682 = vsel %vm3579, %v5665, 0
      %v5685 = vsel %vm3579, %v5666, 0
      %v5688 = vsel %vm3579, %v5667, 0
      %v5691 = vsel %vm3579, %v5668, 0
      %v5694 = vsel %vm3579, %v5669, 0
      %v5697 = vsel %vm3579, %v5670, 0
      %v5700 = vsel %vm3579, %v5671, 0
      %v5703 = vsel %vm3579, %v5672, 0
      %v5706 = vsel %vm3579, %v5673, 0
      %v5709 = vsel %vm3579, %v5674, 0
      %v5712 = vsel %vm3579, %v5675, 0
      %v5715 = vsel %vm3579, %v5676, 0
      %v5718 = vsel %vm3579, %v5677, 0
      %v5721 = vsel %vm3579, %v5678, 0
      %v5724 = vsel %vm3579, %v5679, 0
      %v5727 = vsel %vm3579, %v5680, 0
      %v5730 = vsel %vm3628, %v5600, 0
      %5732 = vmatpush.bf16.msra.mxu0 0
      %5733 = vmatpush.bf16.msra.mxu0 0
      %5734 = vmatpush.bf16.msra.mxu0 0
      %5735 = vmatpush.bf16.msra.mxu0 0
      %5736 = vmatpush.bf16.msra.mxu0 0
      %5737 = vmatpush.bf16.msra.mxu0 0
      %5738 = vmatpush.bf16.msra.mxu0 0
      %5739 = vmatpush.bf16.msra.mxu0 %v5730
      %5740 = vmatmul.bf16.gmra.mxu0 %v5682
      %v5741 = vpop.f32.mrf.mxu0
      %v5742 = vadd.f32 0.0, %v5741
      %v5743 = vpop.f32.mrf.mxu0
      %v5744 = vadd.f32 0.0, %v5743
      %5745 = vmatmul.bf16.gmra.mxu0 %v5685
      %v5746 = vpop.f32.mrf.mxu0
      %v5747 = vadd.f32 0.0, %v5746
      %v5748 = vpop.f32.mrf.mxu0
      %v5749 = vadd.f32 0.0, %v5748
      %5750 = vmatmul.bf16.gmra.mxu0 %v5688
      %v5751 = vpop.f32.mrf.mxu0
      %v5752 = vadd.f32 0.0, %v5751
      %v5753 = vpop.f32.mrf.mxu0
      %v5754 = vadd.f32 0.0, %v5753
      %5755 = vmatmul.bf16.gmra.mxu0 %v5691
      %v5756 = vpop.f32.mrf.mxu0
      %v5757 = vadd.f32 0.0, %v5756
      %v5758 = vpop.f32.mrf.mxu0
      %v5759 = vadd.f32 0.0, %v5758
      %5760 = vmatmul.bf16.gmra.mxu0 %v5694
      %v5761 = vpop.f32.mrf.mxu0
      %v5762 = vadd.f32 0.0, %v5761
      %v5763 = vpop.f32.mrf.mxu0
      %v5764 = vadd.f32 0.0, %v5763
      %5765 = vmatmul.bf16.gmra.mxu0 %v5697
      %v5766 = vpop.f32.mrf.mxu0
      %v5767 = vadd.f32 0.0, %v5766
      %v5768 = vpop.f32.mrf.mxu0
      %v5769 = vadd.f32 0.0, %v5768
      %5770 = vmatmul.bf16.gmra.mxu0 %v5700
      %v5771 = vpop.f32.mrf.mxu0
      %v5772 = vadd.f32 0.0, %v5771
      %v5773 = vpop.f32.mrf.mxu0
      %v5774 = vadd.f32 0.0, %v5773
      %5775 = vmatmul.bf16.gmra.mxu0 %v5703
      %v5776 = vpop.f32.mrf.mxu0
      %v5777 = vadd.f32 0.0, %v5776
      %v5778 = vpop.f32.mrf.mxu0
      %v5779 = vadd.f32 0.0, %v5778
      %5780 = vmatmul.bf16.gmra.mxu0 %v5706
      %v5781 = vpop.f32.mrf.mxu0
      %v5782 = vadd.f32 0.0, %v5781
      %v5783 = vpop.f32.mrf.mxu0
      %v5784 = vadd.f32 0.0, %v5783
      %5785 = vmatmul.bf16.gmra.mxu0 %v5709
      %v5786 = vpop.f32.mrf.mxu0
      %v5787 = vadd.f32 0.0, %v5786
      %v5788 = vpop.f32.mrf.mxu0
      %v5789 = vadd.f32 0.0, %v5788
      %5790 = vmatmul.bf16.gmra.mxu0 %v5712
      %v5791 = vpop.f32.mrf.mxu0
      %v5792 = vadd.f32 0.0, %v5791
      %v5793 = vpop.f32.mrf.mxu0
      %v5794 = vadd.f32 0.0, %v5793
      %5795 = vmatmul.bf16.gmra.mxu0 %v5715
      %v5796 = vpop.f32.mrf.mxu0
      %v5797 = vadd.f32 0.0, %v5796
      %v5798 = vpop.f32.mrf.mxu0
      %v5799 = vadd.f32 0.0, %v5798
      %5800 = vmatmul.bf16.gmra.mxu0 %v5718
      %v5801 = vpop.f32.mrf.mxu0
      %v5802 = vadd.f32 0.0, %v5801
      %v5803 = vpop.f32.mrf.mxu0
      %v5804 = vadd.f32 0.0, %v5803
      %5805 = vmatmul.bf16.gmra.mxu0 %v5721
      %v5806 = vpop.f32.mrf.mxu0
      %v5807 = vadd.f32 0.0, %v5806
      %v5808 = vpop.f32.mrf.mxu0
      %v5809 = vadd.f32 0.0, %v5808
      %5810 = vmatmul.bf16.gmra.mxu0 %v5724
      %v5811 = vpop.f32.mrf.mxu0
      %v5812 = vadd.f32 0.0, %v5811
      %v5813 = vpop.f32.mrf.mxu0
      %v5814 = vadd.f32 0.0, %v5813
      %5815 = vmatmul.bf16.gmra.mxu0 %v5727
      %v5816 = vpop.f32.mrf.mxu0
      %v5817 = vadd.f32 0.0, %v5816
      %v5818 = vpop.f32.mrf.mxu0
      %v5819 = vadd.f32 0.0, %v5818
      %5820 = vdwg.mxu0
      %v5821 = vadd.f32 %v5534, %v5742
      %v5822 = vadd.f32 %v5535, %v5744
      %v5823 = vadd.f32 %v5536, %v5747
      %v5824 = vadd.f32 %v5537, %v5749
      %v5825 = vadd.f32 %v5538, %v5752
      %v5826 = vadd.f32 %v5539, %v5754
      %v5827 = vadd.f32 %v5540, %v5757
      %v5828 = vadd.f32 %v5541, %v5759
      %v5829 = vadd.f32 %v5542, %v5762
      %v5830 = vadd.f32 %v5543, %v5764
      %v5831 = vadd.f32 %v5544, %v5767
      %v5832 = vadd.f32 %v5545, %v5769
      %v5833 = vadd.f32 %v5546, %v5772
      %v5834 = vadd.f32 %v5547, %v5774
      %v5835 = vadd.f32 %v5548, %v5777
      %v5836 = vadd.f32 %v5549, %v5779
      %v5837 = vadd.f32 %v5550, %v5782
      %v5838 = vadd.f32 %v5551, %v5784
      %v5839 = vadd.f32 %v5552, %v5787
      %v5840 = vadd.f32 %v5553, %v5789
      %v5841 = vadd.f32 %v5554, %v5792
      %v5842 = vadd.f32 %v5555, %v5794
      %v5843 = vadd.f32 %v5556, %v5797
      %v5844 = vadd.f32 %v5557, %v5799
      %v5845 = vadd.f32 %v5558, %v5802
      %v5846 = vadd.f32 %v5559, %v5804
      %v5847 = vadd.f32 %v5560, %v5807
      %v5848 = vadd.f32 %v5561, %v5809
      %v5849 = vadd.f32 %v5562, %v5812
      %v5850 = vadd.f32 %v5563, %v5814
      %v5851 = vadd.f32 %v5564, %v5817
      %v5852 = vadd.f32 %v5565, %v5819
      %v5853 = vld [vmem:[%s5566] sm:$0xf]
      %v5854 = vld [vmem:[%s5566 + $0x4] sm:$0xf]
      %v5855 = vld [vmem:[%s5566 + $0x8] sm:$0xf]
      %v5856 = vld [vmem:[%s5566 + $0xc] sm:$0xf]
      %v5857 = vld [vmem:[%s5566 + $0x10] sm:$0x1]
      %v5858 = vld [vmem:[%s5566 + $0x14] sm:$0xf]
      %v5859 = vld [vmem:[%s5566 + $0x18] sm:$0xf]
      %v5860 = vld [vmem:[%s5566 + $0x1c] sm:$0xf]
      %v5861 = vld [vmem:[%s5566 + $0x20] sm:$0xf]
      %v5862 = vld [vmem:[%s5566 + $0x24] sm:$0x1]
      %v5863 = vld [vmem:[%s5566 + $0x28] sm:$0xf]
      %v5864 = vld [vmem:[%s5566 + $0x2c] sm:$0xf]
      %v5865 = vld [vmem:[%s5566 + $0x30] sm:$0xf]
      %v5866 = vld [vmem:[%s5566 + $0x34] sm:$0xf]
      %v5867 = vld [vmem:[%s5566 + $0x38] sm:$0x1]
      %v5868 = vld [vmem:[%s5566 + $0x3c] sm:$0xf]
      %v5869 = vld [vmem:[%s5566 + $0x40] sm:$0xf]
      %v5870 = vld [vmem:[%s5566 + $0x44] sm:$0xf]
      %v5871 = vld [vmem:[%s5566 + $0x48] sm:$0xf]
      %v5872 = vld [vmem:[%s5566 + $0x4c] sm:$0x1]
      %v5873 = vld [vmem:[%s5566 + $0x50] sm:$0xf]
      %v5874 = vld [vmem:[%s5566 + $0x54] sm:$0xf]
      %v5875 = vld [vmem:[%s5566 + $0x58] sm:$0xf]
      %v5876 = vld [vmem:[%s5566 + $0x5c] sm:$0xf]
      %v5877 = vld [vmem:[%s5566 + $0x60] sm:$0x1]
      %v5878 = vld [vmem:[%s5566 + $0x64] sm:$0xf]
      %v5879 = vld [vmem:[%s5566 + $0x68] sm:$0xf]
      %v5880 = vld [vmem:[%s5566 + $0x6c] sm:$0xf]
      %v5881 = vld [vmem:[%s5566 + $0x70] sm:$0xf]
      %v5882 = vld [vmem:[%s5566 + $0x74] sm:$0x1]
      %v5883 = vld [vmem:[%s5566 + $0x78] sm:$0xf]
      %v5884 = vld [vmem:[%s5566 + $0x7c] sm:$0xf]
      %v5885 = vld [vmem:[%s5566 + $0x80] sm:$0xf]
      %v5886 = vld [vmem:[%s5566 + $0x84] sm:$0xf]
      %v5887 = vld [vmem:[%s5566 + $0x88] sm:$0x1]
      %v5888 = vld [vmem:[%s5566 + $0x8c] sm:$0xf]
      %v5889 = vld [vmem:[%s5566 + $0x90] sm:$0xf]
      %v5890 = vld [vmem:[%s5566 + $0x94] sm:$0xf]
      %v5891 = vld [vmem:[%s5566 + $0x98] sm:$0xf]
      %v5892 = vld [vmem:[%s5566 + $0x9c] sm:$0x1]
      %v5894 = vshrl.u32 %v5853, 16
      %v5896 = vrot.slane %v5894, 4
      %v5897 = vshll.u32 %v5853, 16
      %v5899 = vrot.slane %v5897, 5
      %v5900 = vor.u32 %v5896, %v5899
      %v5901 = vrot.slane %v5900, 4
      %v5903 = vshll.u32 %v5854, 16
      %v5905 = vrot.slane %v5903, 5
      %v5906 = vsel %vm285, %v5901, %v5905
      %v5907 = vshrl.u32 %v5854, 16
      %v5909 = vrot.slane %v5907, 4
      %v5910 = vor.u32 %v5909, %v5905
      %v5911 = vrot.slane %v5910, 4
      %v5913 = vshll.u32 %v5855, 16
      %v5915 = vrot.slane %v5913, 5
      %v5916 = vsel %vm285, %v5911, %v5915
      %v5917 = vshrl.u32 %v5855, 16
      %v5919 = vrot.slane %v5917, 4
      %v5920 = vor.u32 %v5919, %v5915
      %v5921 = vrot.slane %v5920, 4
      %v5923 = vshll.u32 %v5856, 16
      %v5925 = vrot.slane %v5923, 5
      %v5926 = vsel %vm285, %v5921, %v5925
      %v5927 = vshrl.u32 %v5856, 16
      %v5929 = vrot.slane %v5927, 4
      %v5930 = vor.u32 %v5929, %v5925
      %v5931 = vrot.slane %v5930, 4
      %v5933 = vshll.u32 %v5857, 16
      %v5935 = vrot.slane %v5933, 5
      %v5936 = vsel %vm285, %v5931, %v5935
      %v5938 = vshrl.u32 %v5858, 16
      %v5940 = vrot.slane %v5938, 4
      %v5941 = vshll.u32 %v5858, 16
      %v5943 = vrot.slane %v5941, 5
      %v5944 = vor.u32 %v5940, %v5943
      %v5945 = vrot.slane %v5944, 4
      %v5947 = vshll.u32 %v5859, 16
      %v5949 = vrot.slane %v5947, 5
      %v5950 = vsel %vm285, %v5945, %v5949
      %v5951 = vshrl.u32 %v5859, 16
      %v5953 = vrot.slane %v5951, 4
      %v5954 = vor.u32 %v5953, %v5949
      %v5955 = vrot.slane %v5954, 4
      %v5957 = vshll.u32 %v5860, 16
      %v5959 = vrot.slane %v5957, 5
      %v5960 = vsel %vm285, %v5955, %v5959
      %v5961 = vshrl.u32 %v5860, 16
      %v5963 = vrot.slane %v5961, 4
      %v5964 = vor.u32 %v5963, %v5959
      %v5965 = vrot.slane %v5964, 4
      %v5967 = vshll.u32 %v5861, 16
      %v5969 = vrot.slane %v5967, 5
      %v5970 = vsel %vm285, %v5965, %v5969
      %v5971 = vshrl.u32 %v5861, 16
      %v5973 = vrot.slane %v5971, 4
      %v5974 = vor.u32 %v5973, %v5969
      %v5975 = vrot.slane %v5974, 4
      %v5977 = vshll.u32 %v5862, 16
      %v5979 = vrot.slane %v5977, 5
      %v5980 = vsel %vm285, %v5975, %v5979
      %v5982 = vshrl.u32 %v5863, 16
      %v5984 = vrot.slane %v5982, 4
      %v5985 = vshll.u32 %v5863, 16
      %v5987 = vrot.slane %v5985, 5
      %v5988 = vor.u32 %v5984, %v5987
      %v5989 = vrot.slane %v5988, 4
      %v5991 = vshll.u32 %v5864, 16
      %v5993 = vrot.slane %v5991, 5
      %v5994 = vsel %vm285, %v5989, %v5993
      %v5995 = vshrl.u32 %v5864, 16
      %v5997 = vrot.slane %v5995, 4
      %v5998 = vor.u32 %v5997, %v5993
      %v5999 = vrot.slane %v5998, 4
      %v6001 = vshll.u32 %v5865, 16
      %v6003 = vrot.slane %v6001, 5
      %v6004 = vsel %vm285, %v5999, %v6003
      %v6005 = vshrl.u32 %v5865, 16
      %v6007 = vrot.slane %v6005, 4
      %v6008 = vor.u32 %v6007, %v6003
      %v6009 = vrot.slane %v6008, 4
      %v6011 = vshll.u32 %v5866, 16
      %v6013 = vrot.slane %v6011, 5
      %v6014 = vsel %vm285, %v6009, %v6013
      %v6015 = vshrl.u32 %v5866, 16
      %v6017 = vrot.slane %v6015, 4
      %v6018 = vor.u32 %v6017, %v6013
      %v6019 = vrot.slane %v6018, 4
      %v6021 = vshll.u32 %v5867, 16
      %v6023 = vrot.slane %v6021, 5
      %v6024 = vsel %vm285, %v6019, %v6023
      %v6026 = vshrl.u32 %v5868, 16
      %v6028 = vrot.slane %v6026, 4
      %v6029 = vshll.u32 %v5868, 16
      %v6031 = vrot.slane %v6029, 5
      %v6032 = vor.u32 %v6028, %v6031
      %v6033 = vrot.slane %v6032, 4
      %v6035 = vshll.u32 %v5869, 16
      %v6037 = vrot.slane %v6035, 5
      %v6038 = vsel %vm285, %v6033, %v6037
      %v6039 = vshrl.u32 %v5869, 16
      %v6041 = vrot.slane %v6039, 4
      %v6042 = vor.u32 %v6041, %v6037
      %v6043 = vrot.slane %v6042, 4
      %v6045 = vshll.u32 %v5870, 16
      %v6047 = vrot.slane %v6045, 5
      %v6048 = vsel %vm285, %v6043, %v6047
      %v6049 = vshrl.u32 %v5870, 16
      %v6051 = vrot.slane %v6049, 4
      %v6052 = vor.u32 %v6051, %v6047
      %v6053 = vrot.slane %v6052, 4
      %v6055 = vshll.u32 %v5871, 16
      %v6057 = vrot.slane %v6055, 5
      %v6058 = vsel %vm285, %v6053, %v6057
      %v6059 = vshrl.u32 %v5871, 16
      %v6061 = vrot.slane %v6059, 4
      %v6062 = vor.u32 %v6061, %v6057
      %v6063 = vrot.slane %v6062, 4
      %v6065 = vshll.u32 %v5872, 16
      %v6067 = vrot.slane %v6065, 5
      %v6068 = vsel %vm285, %v6063, %v6067
      %v6070 = vshrl.u32 %v5873, 16
      %v6072 = vrot.slane %v6070, 4
      %v6073 = vshll.u32 %v5873, 16
      %v6075 = vrot.slane %v6073, 5
      %v6076 = vor.u32 %v6072, %v6075
      %v6077 = vrot.slane %v6076, 4
      %v6079 = vshll.u32 %v5874, 16
      %v6081 = vrot.slane %v6079, 5
      %v6082 = vsel %vm285, %v6077, %v6081
      %v6083 = vshrl.u32 %v5874, 16
      %v6085 = vrot.slane %v6083, 4
      %v6086 = vor.u32 %v6085, %v6081
      %v6087 = vrot.slane %v6086, 4
      %v6089 = vshll.u32 %v5875, 16
      %v6091 = vrot.slane %v6089, 5
      %v6092 = vsel %vm285, %v6087, %v6091
      %v6093 = vshrl.u32 %v5875, 16
      %v6095 = vrot.slane %v6093, 4
      %v6096 = vor.u32 %v6095, %v6091
      %v6097 = vrot.slane %v6096, 4
      %v6099 = vshll.u32 %v5876, 16
      %v6101 = vrot.slane %v6099, 5
      %v6102 = vsel %vm285, %v6097, %v6101
      %v6103 = vshrl.u32 %v5876, 16
      %v6105 = vrot.slane %v6103, 4
      %v6106 = vor.u32 %v6105, %v6101
      %v6107 = vrot.slane %v6106, 4
      %v6109 = vshll.u32 %v5877, 16
      %v6111 = vrot.slane %v6109, 5
      %v6112 = vsel %vm285, %v6107, %v6111
      %v6114 = vshrl.u32 %v5878, 16
      %v6116 = vrot.slane %v6114, 4
      %v6117 = vshll.u32 %v5878, 16
      %v6119 = vrot.slane %v6117, 5
      %v6120 = vor.u32 %v6116, %v6119
      %v6121 = vrot.slane %v6120, 4
      %v6123 = vshll.u32 %v5879, 16
      %v6125 = vrot.slane %v6123, 5
      %v6126 = vsel %vm285, %v6121, %v6125
      %v6127 = vshrl.u32 %v5879, 16
      %v6129 = vrot.slane %v6127, 4
      %v6130 = vor.u32 %v6129, %v6125
      %v6131 = vrot.slane %v6130, 4
      %v6133 = vshll.u32 %v5880, 16
      %v6135 = vrot.slane %v6133, 5
      %v6136 = vsel %vm285, %v6131, %v6135
      %v6137 = vshrl.u32 %v5880, 16
      %v6139 = vrot.slane %v6137, 4
      %v6140 = vor.u32 %v6139, %v6135
      %v6141 = vrot.slane %v6140, 4
      %v6143 = vshll.u32 %v5881, 16
      %v6145 = vrot.slane %v6143, 5
      %v6146 = vsel %vm285, %v6141, %v6145
      %v6147 = vshrl.u32 %v5881, 16
      %v6149 = vrot.slane %v6147, 4
      %v6150 = vor.u32 %v6149, %v6145
      %v6151 = vrot.slane %v6150, 4
      %v6153 = vshll.u32 %v5882, 16
      %v6155 = vrot.slane %v6153, 5
      %v6156 = vsel %vm285, %v6151, %v6155
      %v6158 = vshrl.u32 %v5883, 16
      %v6160 = vrot.slane %v6158, 4
      %v6161 = vshll.u32 %v5883, 16
      %v6163 = vrot.slane %v6161, 5
      %v6164 = vor.u32 %v6160, %v6163
      %v6165 = vrot.slane %v6164, 4
      %v6167 = vshll.u32 %v5884, 16
      %v6169 = vrot.slane %v6167, 5
      %v6170 = vsel %vm285, %v6165, %v6169
      %v6171 = vshrl.u32 %v5884, 16
      %v6173 = vrot.slane %v6171, 4
      %v6174 = vor.u32 %v6173, %v6169
      %v6175 = vrot.slane %v6174, 4
      %v6177 = vshll.u32 %v5885, 16
      %v6179 = vrot.slane %v6177, 5
      %v6180 = vsel %vm285, %v6175, %v6179
      %v6181 = vshrl.u32 %v5885, 16
      %v6183 = vrot.slane %v6181, 4
      %v6184 = vor.u32 %v6183, %v6179
      %v6185 = vrot.slane %v6184, 4
      %v6187 = vshll.u32 %v5886, 16
      %v6189 = vrot.slane %v6187, 5
      %v6190 = vsel %vm285, %v6185, %v6189
      %v6191 = vshrl.u32 %v5886, 16
      %v6193 = vrot.slane %v6191, 4
      %v6194 = vor.u32 %v6193, %v6189
      %v6195 = vrot.slane %v6194, 4
      %v6197 = vshll.u32 %v5887, 16
      %v6199 = vrot.slane %v6197, 5
      %v6200 = vsel %vm285, %v6195, %v6199
      %v6202 = vshrl.u32 %v5888, 16
      %v6204 = vrot.slane %v6202, 4
      %v6205 = vshll.u32 %v5888, 16
      %v6207 = vrot.slane %v6205, 5
      %v6208 = vor.u32 %v6204, %v6207
      %v6209 = vrot.slane %v6208, 4
      %v6211 = vshll.u32 %v5889, 16
      %v6213 = vrot.slane %v6211, 5
      %v6214 = vsel %vm285, %v6209, %v6213
      %v6215 = vshrl.u32 %v5889, 16
      %v6217 = vrot.slane %v6215, 4
      %v6218 = vor.u32 %v6217, %v6213
      %v6219 = vrot.slane %v6218, 4
      %v6221 = vshll.u32 %v5890, 16
      %v6223 = vrot.slane %v6221, 5
      %v6224 = vsel %vm285, %v6219, %v6223
      %v6225 = vshrl.u32 %v5890, 16
      %v6227 = vrot.slane %v6225, 4
      %v6228 = vor.u32 %v6227, %v6223
      %v6229 = vrot.slane %v6228, 4
      %v6231 = vshll.u32 %v5891, 16
      %v6233 = vrot.slane %v6231, 5
      %v6234 = vsel %vm285, %v6229, %v6233
      %v6235 = vshrl.u32 %v5891, 16
      %v6237 = vrot.slane %v6235, 4
      %v6238 = vor.u32 %v6237, %v6233
      %v6239 = vrot.slane %v6238, 4
      %v6241 = vshll.u32 %v5892, 16
      %v6243 = vrot.slane %v6241, 5
      %v6244 = vsel %vm285, %v6239, %v6243
      %s6245 = scalar_lea.vmem %s3, 28
      %v6246 = vld [vmem:[%s6245] sm:$0xf]
      %v6247 = vunpack.c.l.b16 %v5906
      %v6248 = vunpack.c.l.b16 %v5916
      %v6249 = vunpack.c.l.b16 %v5926
      %v6250 = vunpack.c.l.b16 %v5936
      %v6251 = vunpack.c.l.b16 %v5950
      %v6252 = vunpack.c.l.b16 %v5960
      %v6253 = vunpack.c.l.b16 %v5970
      %v6254 = vunpack.c.l.b16 %v5980
      %v6255 = vunpack.c.l.b16 %v5994
      %v6256 = vunpack.c.l.b16 %v6004
      %v6257 = vunpack.c.l.b16 %v6014
      %v6258 = vunpack.c.l.b16 %v6024
      %v6259 = vunpack.c.l.b16 %v6038
      %v6260 = vunpack.c.l.b16 %v6048
      %v6261 = vunpack.c.l.b16 %v6058
      %v6262 = vunpack.c.l.b16 %v6068
      %v6263 = vunpack.c.l.b16 %v6082
      %v6264 = vunpack.c.l.b16 %v6092
      %v6265 = vunpack.c.l.b16 %v6102
      %v6266 = vunpack.c.l.b16 %v6112
      %v6267 = vunpack.c.l.b16 %v6126
      %v6268 = vunpack.c.l.b16 %v6136
      %v6269 = vunpack.c.l.b16 %v6146
      %v6270 = vunpack.c.l.b16 %v6156
      %v6271 = vunpack.c.l.b16 %v6170
      %v6272 = vunpack.c.l.b16 %v6180
      %v6273 = vunpack.c.l.b16 %v6190
      %v6274 = vunpack.c.l.b16 %v6200
      %v6275 = vunpack.c.l.b16 %v6214
      %v6276 = vunpack.c.l.b16 %v6224
      %v6277 = vunpack.c.l.b16 %v6234
      %v6278 = vunpack.c.l.b16 %v6244
      %v6279 = vpack.c.b16 %v6248, %v6247
      %v6280 = vpack.c.b16 %v6250, %v6249
      %v6281 = vpack.c.b16 %v6252, %v6251
      %v6282 = vpack.c.b16 %v6254, %v6253
      %v6283 = vpack.c.b16 %v6256, %v6255
      %v6284 = vpack.c.b16 %v6258, %v6257
      %v6285 = vpack.c.b16 %v6260, %v6259
      %v6286 = vpack.c.b16 %v6262, %v6261
      %v6287 = vpack.c.b16 %v6264, %v6263
      %v6288 = vpack.c.b16 %v6266, %v6265
      %v6289 = vpack.c.b16 %v6268, %v6267
      %v6290 = vpack.c.b16 %v6270, %v6269
      %v6291 = vpack.c.b16 %v6272, %v6271
      %v6292 = vpack.c.b16 %v6274, %v6273
      %v6293 = vpack.c.b16 %v6276, %v6275
      %v6294 = vpack.c.b16 %v6278, %v6277
      %v6296 = vsel %vm3579, %v6279, 0
      %v6299 = vsel %vm3579, %v6280, 0
      %v6302 = vsel %vm3579, %v6281, 0
      %v6305 = vsel %vm3579, %v6282, 0
      %v6308 = vsel %vm3579, %v6283, 0
      %v6311 = vsel %vm3579, %v6284, 0
      %v6314 = vsel %vm3579, %v6285, 0
      %v6317 = vsel %vm3579, %v6286, 0
      %v6320 = vsel %vm3579, %v6287, 0
      %v6323 = vsel %vm3579, %v6288, 0
      %v6326 = vsel %vm3579, %v6289, 0
      %v6329 = vsel %vm3579, %v6290, 0
      %v6332 = vsel %vm3579, %v6291, 0
      %v6335 = vsel %vm3579, %v6292, 0
      %v6338 = vsel %vm3579, %v6293, 0
      %v6341 = vsel %vm3579, %v6294, 0
      %v6344 = vsel %vm3628, %v6246, 0
      %6346 = vmatpush.bf16.msra.mxu0 0
      %6347 = vmatpush.bf16.msra.mxu0 0
      %6348 = vmatpush.bf16.msra.mxu0 0
      %6349 = vmatpush.bf16.msra.mxu0 0
      %6350 = vmatpush.bf16.msra.mxu0 0
      %6351 = vmatpush.bf16.msra.mxu0 0
      %6352 = vmatpush.bf16.msra.mxu0 0
      %6353 = vmatpush.bf16.msra.mxu0 %v6344
      %6354 = vmatmul.bf16.gmra.mxu0 %v6296
      %v6355 = vpop.f32.mrf.mxu0
      %v6356 = vadd.f32 0.0, %v6355
      %v6357 = vpop.f32.mrf.mxu0
      %v6358 = vadd.f32 0.0, %v6357
      %6359 = vmatmul.bf16.gmra.mxu0 %v6299
      %v6360 = vpop.f32.mrf.mxu0
      %v6361 = vadd.f32 0.0, %v6360
      %v6362 = vpop.f32.mrf.mxu0
      %v6363 = vadd.f32 0.0, %v6362
      %6364 = vmatmul.bf16.gmra.mxu0 %v6302
      %v6365 = vpop.f32.mrf.mxu0
      %v6366 = vadd.f32 0.0, %v6365
      %v6367 = vpop.f32.mrf.mxu0
      %v6368 = vadd.f32 0.0, %v6367
      %6369 = vmatmul.bf16.gmra.mxu0 %v6305
      %v6370 = vpop.f32.mrf.mxu0
      %v6371 = vadd.f32 0.0, %v6370
      %v6372 = vpop.f32.mrf.mxu0
      %v6373 = vadd.f32 0.0, %v6372
      %6374 = vmatmul.bf16.gmra.mxu0 %v6308
      %v6375 = vpop.f32.mrf.mxu0
      %v6376 = vadd.f32 0.0, %v6375
      %v6377 = vpop.f32.mrf.mxu0
      %v6378 = vadd.f32 0.0, %v6377
      %6379 = vmatmul.bf16.gmra.mxu0 %v6311
      %v6380 = vpop.f32.mrf.mxu0
      %v6381 = vadd.f32 0.0, %v6380
      %v6382 = vpop.f32.mrf.mxu0
      %v6383 = vadd.f32 0.0, %v6382
      %6384 = vmatmul.bf16.gmra.mxu0 %v6314
      %v6385 = vpop.f32.mrf.mxu0
      %v6386 = vadd.f32 0.0, %v6385
      %v6387 = vpop.f32.mrf.mxu0
      %v6388 = vadd.f32 0.0, %v6387
      %6389 = vmatmul.bf16.gmra.mxu0 %v6317
      %v6390 = vpop.f32.mrf.mxu0
      %v6391 = vadd.f32 0.0, %v6390
      %v6392 = vpop.f32.mrf.mxu0
      %v6393 = vadd.f32 0.0, %v6392
      %6394 = vmatmul.bf16.gmra.mxu0 %v6320
      %v6395 = vpop.f32.mrf.mxu0
      %v6396 = vadd.f32 0.0, %v6395
      %v6397 = vpop.f32.mrf.mxu0
      %v6398 = vadd.f32 0.0, %v6397
      %6399 = vmatmul.bf16.gmra.mxu0 %v6323
      %v6400 = vpop.f32.mrf.mxu0
      %v6401 = vadd.f32 0.0, %v6400
      %v6402 = vpop.f32.mrf.mxu0
      %v6403 = vadd.f32 0.0, %v6402
      %6404 = vmatmul.bf16.gmra.mxu0 %v6326
      %v6405 = vpop.f32.mrf.mxu0
      %v6406 = vadd.f32 0.0, %v6405
      %v6407 = vpop.f32.mrf.mxu0
      %v6408 = vadd.f32 0.0, %v6407
      %6409 = vmatmul.bf16.gmra.mxu0 %v6329
      %v6410 = vpop.f32.mrf.mxu0
      %v6411 = vadd.f32 0.0, %v6410
      %v6412 = vpop.f32.mrf.mxu0
      %v6413 = vadd.f32 0.0, %v6412
      %6414 = vmatmul.bf16.gmra.mxu0 %v6332
      %v6415 = vpop.f32.mrf.mxu0
      %v6416 = vadd.f32 0.0, %v6415
      %v6417 = vpop.f32.mrf.mxu0
      %v6418 = vadd.f32 0.0, %v6417
      %6419 = vmatmul.bf16.gmra.mxu0 %v6335
      %v6420 = vpop.f32.mrf.mxu0
      %v6421 = vadd.f32 0.0, %v6420
      %v6422 = vpop.f32.mrf.mxu0
      %v6423 = vadd.f32 0.0, %v6422
      %6424 = vmatmul.bf16.gmra.mxu0 %v6338
      %v6425 = vpop.f32.mrf.mxu0
      %v6426 = vadd.f32 0.0, %v6425
      %v6427 = vpop.f32.mrf.mxu0
      %v6428 = vadd.f32 0.0, %v6427
      %6429 = vmatmul.bf16.gmra.mxu0 %v6341
      %v6430 = vpop.f32.mrf.mxu0
      %v6431 = vadd.f32 0.0, %v6430
      %v6432 = vpop.f32.mrf.mxu0
      %v6433 = vadd.f32 0.0, %v6432
      %6434 = vdwg.mxu0
      %v6435 = vadd.f32 %v5821, %v6356
      %v6436 = vadd.f32 %v5822, %v6358
      %v6437 = vadd.f32 %v5823, %v6361
      %v6438 = vadd.f32 %v5824, %v6363
      %v6439 = vadd.f32 %v5825, %v6366
      %v6440 = vadd.f32 %v5826, %v6368
      %v6441 = vadd.f32 %v5827, %v6371
      %v6442 = vadd.f32 %v5828, %v6373
      %v6443 = vadd.f32 %v5829, %v6376
      %v6444 = vadd.f32 %v5830, %v6378
      %v6445 = vadd.f32 %v5831, %v6381
      %v6446 = vadd.f32 %v5832, %v6383
      %v6447 = vadd.f32 %v5833, %v6386
      %v6448 = vadd.f32 %v5834, %v6388
      %v6449 = vadd.f32 %v5835, %v6391
      %v6450 = vadd.f32 %v5836, %v6393
      %v6451 = vadd.f32 %v5837, %v6396
      %v6452 = vadd.f32 %v5838, %v6398
      %v6453 = vadd.f32 %v5839, %v6401
      %v6454 = vadd.f32 %v5840, %v6403
      %v6455 = vadd.f32 %v5841, %v6406
      %v6456 = vadd.f32 %v5842, %v6408
      %v6457 = vadd.f32 %v5843, %v6411
      %v6458 = vadd.f32 %v5844, %v6413
      %v6459 = vadd.f32 %v5845, %v6416
      %v6460 = vadd.f32 %v5846, %v6418
      %v6461 = vadd.f32 %v5847, %v6421
      %v6462 = vadd.f32 %v5848, %v6423
      %v6463 = vadd.f32 %v5849, %v6426
      %v6464 = vadd.f32 %v5850, %v6428
      %v6465 = vadd.f32 %v5851, %v6431
      %v6466 = vadd.f32 %v5852, %v6433
      %v6467 = vld [vmem:[%s5566] sm:$0xe]
      %v6468 = vld [vmem:[%s5566 + $0x14] sm:$0xe]
      %v6469 = vld [vmem:[%s5566 + $0x28] sm:$0xe]
      %v6470 = vld [vmem:[%s5566 + $0x3c] sm:$0xe]
      %v6471 = vld [vmem:[%s5566 + $0x50] sm:$0xe]
      %v6472 = vld [vmem:[%s5566 + $0x64] sm:$0xe]
      %v6473 = vld [vmem:[%s5566 + $0x78] sm:$0xe]
      %v6474 = vld [vmem:[%s5566 + $0x8c] sm:$0xe]
      %v6515 = vrot.slane %v6467, 5
      %v6516 = vrot.slane %v6515, 4
      %v6517 = vrot.slane %v5854, 5
      %v6518 = vsel %vm917, %v6516, %v6517
      %v6519 = vrot.slane %v6517, 4
      %v6520 = vrot.slane %v5855, 5
      %v6521 = vsel %vm917, %v6519, %v6520
      %v6522 = vrot.slane %v6520, 4
      %v6523 = vrot.slane %v5856, 5
      %v6524 = vsel %vm917, %v6522, %v6523
      %v6525 = vrot.slane %v6523, 4
      %v6526 = vrot.slane %v5857, 5
      %v6527 = vsel %vm917, %v6525, %v6526
      %v6528 = vrot.slane %v6468, 5
      %v6529 = vrot.slane %v6528, 4
      %v6530 = vrot.slane %v5859, 5
      %v6531 = vsel %vm917, %v6529, %v6530
      %v6532 = vrot.slane %v6530, 4
      %v6533 = vrot.slane %v5860, 5
      %v6534 = vsel %vm917, %v6532, %v6533
      %v6535 = vrot.slane %v6533, 4
      %v6536 = vrot.slane %v5861, 5
      %v6537 = vsel %vm917, %v6535, %v6536
      %v6538 = vrot.slane %v6536, 4
      %v6539 = vrot.slane %v5862, 5
      %v6540 = vsel %vm917, %v6538, %v6539
      %v6541 = vrot.slane %v6469, 5
      %v6542 = vrot.slane %v6541, 4
      %v6543 = vrot.slane %v5864, 5
      %v6544 = vsel %vm917, %v6542, %v6543
      %v6545 = vrot.slane %v6543, 4
      %v6546 = vrot.slane %v5865, 5
      %v6547 = vsel %vm917, %v6545, %v6546
      %v6548 = vrot.slane %v6546, 4
      %v6549 = vrot.slane %v5866, 5
      %v6550 = vsel %vm917, %v6548, %v6549
      %v6551 = vrot.slane %v6549, 4
      %v6552 = vrot.slane %v5867, 5
      %v6553 = vsel %vm917, %v6551, %v6552
      %v6554 = vrot.slane %v6470, 5
      %v6555 = vrot.slane %v6554, 4
      %v6556 = vrot.slane %v5869, 5
      %v6557 = vsel %vm917, %v6555, %v6556
      %v6558 = vrot.slane %v6556, 4
      %v6559 = vrot.slane %v5870, 5
      %v6560 = vsel %vm917, %v6558, %v6559
      %v6561 = vrot.slane %v6559, 4
      %v6562 = vrot.slane %v5871, 5
      %v6563 = vsel %vm917, %v6561, %v6562
      %v6564 = vrot.slane %v6562, 4
      %v6565 = vrot.slane %v5872, 5
      %v6566 = vsel %vm917, %v6564, %v6565
      %v6567 = vrot.slane %v6471, 5
      %v6568 = vrot.slane %v6567, 4
      %v6569 = vrot.slane %v5874, 5
      %v6570 = vsel %vm917, %v6568, %v6569
      %v6571 = vrot.slane %v6569, 4
      %v6572 = vrot.slane %v5875, 5
      %v6573 = vsel %vm917, %v6571, %v6572
      %v6574 = vrot.slane %v6572, 4
      %v6575 = vrot.slane %v5876, 5
      %v6576 = vsel %vm917, %v6574, %v6575
      %v6577 = vrot.slane %v6575, 4
      %v6578 = vrot.slane %v5877, 5
      %v6579 = vsel %vm917, %v6577, %v6578
      %v6580 = vrot.slane %v6472, 5
      %v6581 = vrot.slane %v6580, 4
      %v6582 = vrot.slane %v5879, 5
      %v6583 = vsel %vm917, %v6581, %v6582
      %v6584 = vrot.slane %v6582, 4
      %v6585 = vrot.slane %v5880, 5
      %v6586 = vsel %vm917, %v6584, %v6585
      %v6587 = vrot.slane %v6585, 4
      %v6588 = vrot.slane %v5881, 5
      %v6589 = vsel %vm917, %v6587, %v6588
      %v6590 = vrot.slane %v6588, 4
      %v6591 = vrot.slane %v5882, 5
      %v6592 = vsel %vm917, %v6590, %v6591
      %v6593 = vrot.slane %v6473, 5
      %v6594 = vrot.slane %v6593, 4
      %v6595 = vrot.slane %v5884, 5
      %v6596 = vsel %vm917, %v6594, %v6595
      %v6597 = vrot.slane %v6595, 4
      %v6598 = vrot.slane %v5885, 5
      %v6599 = vsel %vm917, %v6597, %v6598
      %v6600 = vrot.slane %v6598, 4
      %v6601 = vrot.slane %v5886, 5
      %v6602 = vsel %vm917, %v6600, %v6601
      %v6603 = vrot.slane %v6601, 4
      %v6604 = vrot.slane %v5887, 5
      %v6605 = vsel %vm917, %v6603, %v6604
      %v6606 = vrot.slane %v6474, 5
      %v6607 = vrot.slane %v6606, 4
      %v6608 = vrot.slane %v5889, 5
      %v6609 = vsel %vm917, %v6607, %v6608
      %v6610 = vrot.slane %v6608, 4
      %v6611 = vrot.slane %v5890, 5
      %v6612 = vsel %vm917, %v6610, %v6611
      %v6613 = vrot.slane %v6611, 4
      %v6614 = vrot.slane %v5891, 5
      %v6615 = vsel %vm917, %v6613, %v6614
      %v6616 = vrot.slane %v6614, 4
      %v6617 = vrot.slane %v5892, 5
      %v6618 = vsel %vm917, %v6616, %v6617
      %s6619 = scalar_lea.vmem %s3, 32
      %v6620 = vld [vmem:[%s6619] sm:$0xf]
      %v6621 = vunpack.c.l.b16 %v6518
      %v6622 = vunpack.c.l.b16 %v6521
      %v6623 = vunpack.c.l.b16 %v6524
      %v6624 = vunpack.c.l.b16 %v6527
      %v6625 = vunpack.c.l.b16 %v6531
      %v6626 = vunpack.c.l.b16 %v6534
      %v6627 = vunpack.c.l.b16 %v6537
      %v6628 = vunpack.c.l.b16 %v6540
      %v6629 = vunpack.c.l.b16 %v6544
      %v6630 = vunpack.c.l.b16 %v6547
      %v6631 = vunpack.c.l.b16 %v6550
      %v6632 = vunpack.c.l.b16 %v6553
      %v6633 = vunpack.c.l.b16 %v6557
      %v6634 = vunpack.c.l.b16 %v6560
      %v6635 = vunpack.c.l.b16 %v6563
      %v6636 = vunpack.c.l.b16 %v6566
      %v6637 = vunpack.c.l.b16 %v6570
      %v6638 = vunpack.c.l.b16 %v6573
      %v6639 = vunpack.c.l.b16 %v6576
      %v6640 = vunpack.c.l.b16 %v6579
      %v6641 = vunpack.c.l.b16 %v6583
      %v6642 = vunpack.c.l.b16 %v6586
      %v6643 = vunpack.c.l.b16 %v6589
      %v6644 = vunpack.c.l.b16 %v6592
      %v6645 = vunpack.c.l.b16 %v6596
      %v6646 = vunpack.c.l.b16 %v6599
      %v6647 = vunpack.c.l.b16 %v6602
      %v6648 = vunpack.c.l.b16 %v6605
      %v6649 = vunpack.c.l.b16 %v6609
      %v6650 = vunpack.c.l.b16 %v6612
      %v6651 = vunpack.c.l.b16 %v6615
      %v6652 = vunpack.c.l.b16 %v6618
      %v6653 = vpack.c.b16 %v6622, %v6621
      %v6654 = vpack.c.b16 %v6624, %v6623
      %v6655 = vpack.c.b16 %v6626, %v6625
      %v6656 = vpack.c.b16 %v6628, %v6627
      %v6657 = vpack.c.b16 %v6630, %v6629
      %v6658 = vpack.c.b16 %v6632, %v6631
      %v6659 = vpack.c.b16 %v6634, %v6633
      %v6660 = vpack.c.b16 %v6636, %v6635
      %v6661 = vpack.c.b16 %v6638, %v6637
      %v6662 = vpack.c.b16 %v6640, %v6639
      %v6663 = vpack.c.b16 %v6642, %v6641
      %v6664 = vpack.c.b16 %v6644, %v6643
      %v6665 = vpack.c.b16 %v6646, %v6645
      %v6666 = vpack.c.b16 %v6648, %v6647
      %v6667 = vpack.c.b16 %v6650, %v6649
      %v6668 = vpack.c.b16 %v6652, %v6651
      %v6670 = vsel %vm3579, %v6653, 0
      %v6673 = vsel %vm3579, %v6654, 0
      %v6676 = vsel %vm3579, %v6655, 0
      %v6679 = vsel %vm3579, %v6656, 0
      %v6682 = vsel %vm3579, %v6657, 0
      %v6685 = vsel %vm3579, %v6658, 0
      %v6688 = vsel %vm3579, %v6659, 0
      %v6691 = vsel %vm3579, %v6660, 0
      %v6694 = vsel %vm3579, %v6661, 0
      %v6697 = vsel %vm3579, %v6662, 0
      %v6700 = vsel %vm3579, %v6663, 0
      %v6703 = vsel %vm3579, %v6664, 0
      %v6706 = vsel %vm3579, %v6665, 0
      %v6709 = vsel %vm3579, %v6666, 0
      %v6712 = vsel %vm3579, %v6667, 0
      %v6715 = vsel %vm3579, %v6668, 0
      %v6718 = vsel %vm3628, %v6620, 0
      %6720 = vmatpush.bf16.msra.mxu0 0
      %6721 = vmatpush.bf16.msra.mxu0 0
      %6722 = vmatpush.bf16.msra.mxu0 0
      %6723 = vmatpush.bf16.msra.mxu0 0
      %6724 = vmatpush.bf16.msra.mxu0 0
      %6725 = vmatpush.bf16.msra.mxu0 0
      %6726 = vmatpush.bf16.msra.mxu0 0
      %6727 = vmatpush.bf16.msra.mxu0 %v6718
      %6728 = vmatmul.bf16.gmra.mxu0 %v6670
      %v6729 = vpop.f32.mrf.mxu0
      %v6730 = vadd.f32 0.0, %v6729
      %v6731 = vpop.f32.mrf.mxu0
      %v6732 = vadd.f32 0.0, %v6731
      %6733 = vmatmul.bf16.gmra.mxu0 %v6673
      %v6734 = vpop.f32.mrf.mxu0
      %v6735 = vadd.f32 0.0, %v6734
      %v6736 = vpop.f32.mrf.mxu0
      %v6737 = vadd.f32 0.0, %v6736
      %6738 = vmatmul.bf16.gmra.mxu0 %v6676
      %v6739 = vpop.f32.mrf.mxu0
      %v6740 = vadd.f32 0.0, %v6739
      %v6741 = vpop.f32.mrf.mxu0
      %v6742 = vadd.f32 0.0, %v6741
      %6743 = vmatmul.bf16.gmra.mxu0 %v6679
      %v6744 = vpop.f32.mrf.mxu0
      %v6745 = vadd.f32 0.0, %v6744
      %v6746 = vpop.f32.mrf.mxu0
      %v6747 = vadd.f32 0.0, %v6746
      %6748 = vmatmul.bf16.gmra.mxu0 %v6682
      %v6749 = vpop.f32.mrf.mxu0
      %v6750 = vadd.f32 0.0, %v6749
      %v6751 = vpop.f32.mrf.mxu0
      %v6752 = vadd.f32 0.0, %v6751
      %6753 = vmatmul.bf16.gmra.mxu0 %v6685
      %v6754 = vpop.f32.mrf.mxu0
      %v6755 = vadd.f32 0.0, %v6754
      %v6756 = vpop.f32.mrf.mxu0
      %v6757 = vadd.f32 0.0, %v6756
      %6758 = vmatmul.bf16.gmra.mxu0 %v6688
      %v6759 = vpop.f32.mrf.mxu0
      %v6760 = vadd.f32 0.0, %v6759
      %v6761 = vpop.f32.mrf.mxu0
      %v6762 = vadd.f32 0.0, %v6761
      %6763 = vmatmul.bf16.gmra.mxu0 %v6691
      %v6764 = vpop.f32.mrf.mxu0
      %v6765 = vadd.f32 0.0, %v6764
      %v6766 = vpop.f32.mrf.mxu0
      %v6767 = vadd.f32 0.0, %v6766
      %6768 = vmatmul.bf16.gmra.mxu0 %v6694
      %v6769 = vpop.f32.mrf.mxu0
      %v6770 = vadd.f32 0.0, %v6769
      %v6771 = vpop.f32.mrf.mxu0
      %v6772 = vadd.f32 0.0, %v6771
      %6773 = vmatmul.bf16.gmra.mxu0 %v6697
      %v6774 = vpop.f32.mrf.mxu0
      %v6775 = vadd.f32 0.0, %v6774
      %v6776 = vpop.f32.mrf.mxu0
      %v6777 = vadd.f32 0.0, %v6776
      %6778 = vmatmul.bf16.gmra.mxu0 %v6700
      %v6779 = vpop.f32.mrf.mxu0
      %v6780 = vadd.f32 0.0, %v6779
      %v6781 = vpop.f32.mrf.mxu0
      %v6782 = vadd.f32 0.0, %v6781
      %6783 = vmatmul.bf16.gmra.mxu0 %v6703
      %v6784 = vpop.f32.mrf.mxu0
      %v6785 = vadd.f32 0.0, %v6784
      %v6786 = vpop.f32.mrf.mxu0
      %v6787 = vadd.f32 0.0, %v6786
      %6788 = vmatmul.bf16.gmra.mxu0 %v6706
      %v6789 = vpop.f32.mrf.mxu0
      %v6790 = vadd.f32 0.0, %v6789
      %v6791 = vpop.f32.mrf.mxu0
      %v6792 = vadd.f32 0.0, %v6791
      %6793 = vmatmul.bf16.gmra.mxu0 %v6709
      %v6794 = vpop.f32.mrf.mxu0
      %v6795 = vadd.f32 0.0, %v6794
      %v6796 = vpop.f32.mrf.mxu0
      %v6797 = vadd.f32 0.0, %v6796
      %6798 = vmatmul.bf16.gmra.mxu0 %v6712
      %v6799 = vpop.f32.mrf.mxu0
      %v6800 = vadd.f32 0.0, %v6799
      %v6801 = vpop.f32.mrf.mxu0
      %v6802 = vadd.f32 0.0, %v6801
      %6803 = vmatmul.bf16.gmra.mxu0 %v6715
      %v6804 = vpop.f32.mrf.mxu0
      %v6805 = vadd.f32 0.0, %v6804
      %v6806 = vpop.f32.mrf.mxu0
      %v6807 = vadd.f32 0.0, %v6806
      %6808 = vdwg.mxu0
      %v6809 = vadd.f32 %v6435, %v6730
      %v6810 = vadd.f32 %v6436, %v6732
      %v6811 = vadd.f32 %v6437, %v6735
      %v6812 = vadd.f32 %v6438, %v6737
      %v6813 = vadd.f32 %v6439, %v6740
      %v6814 = vadd.f32 %v6440, %v6742
      %v6815 = vadd.f32 %v6441, %v6745
      %v6816 = vadd.f32 %v6442, %v6747
      %v6817 = vadd.f32 %v6443, %v6750
      %v6818 = vadd.f32 %v6444, %v6752
      %v6819 = vadd.f32 %v6445, %v6755
      %v6820 = vadd.f32 %v6446, %v6757
      %v6821 = vadd.f32 %v6447, %v6760
      %v6822 = vadd.f32 %v6448, %v6762
      %v6823 = vadd.f32 %v6449, %v6765
      %v6824 = vadd.f32 %v6450, %v6767
      %v6825 = vadd.f32 %v6451, %v6770
      %v6826 = vadd.f32 %v6452, %v6772
      %v6827 = vadd.f32 %v6453, %v6775
      %v6828 = vadd.f32 %v6454, %v6777
      %v6829 = vadd.f32 %v6455, %v6780
      %v6830 = vadd.f32 %v6456, %v6782
      %v6831 = vadd.f32 %v6457, %v6785
      %v6832 = vadd.f32 %v6458, %v6787
      %v6833 = vadd.f32 %v6459, %v6790
      %v6834 = vadd.f32 %v6460, %v6792
      %v6835 = vadd.f32 %v6461, %v6795
      %v6836 = vadd.f32 %v6462, %v6797
      %v6837 = vadd.f32 %v6463, %v6800
      %v6838 = vadd.f32 %v6464, %v6802
      %v6839 = vadd.f32 %v6465, %v6805
      %v6840 = vadd.f32 %v6466, %v6807
      %v6841 = vld [vmem:[%s4] sm:$0x1]
      %v6843 = vperm.slane %v6841, 0
      %v6845 = vadd.f32 %v6809, %v6843
      %v6846 = vadd.f32 %v6810, %v6843
      %v6847 = vadd.f32 %v6811, %v6843
      %v6848 = vadd.f32 %v6812, %v6843
      %v6849 = vadd.f32 %v6813, %v6843
      %v6850 = vadd.f32 %v6814, %v6843
      %v6851 = vadd.f32 %v6815, %v6843
      %v6852 = vadd.f32 %v6816, %v6843
      %v6853 = vadd.f32 %v6817, %v6843
      %v6854 = vadd.f32 %v6818, %v6843
      %v6855 = vadd.f32 %v6819, %v6843
      %v6856 = vadd.f32 %v6820, %v6843
      %v6857 = vadd.f32 %v6821, %v6843
      %v6858 = vadd.f32 %v6822, %v6843
      %v6859 = vadd.f32 %v6823, %v6843
      %v6860 = vadd.f32 %v6824, %v6843
      %v6861 = vadd.f32 %v6825, %v6843
      %v6862 = vadd.f32 %v6826, %v6843
      %v6863 = vadd.f32 %v6827, %v6843
      %v6864 = vadd.f32 %v6828, %v6843
      %v6865 = vadd.f32 %v6829, %v6843
      %v6866 = vadd.f32 %v6830, %v6843
      %v6867 = vadd.f32 %v6831, %v6843
      %v6868 = vadd.f32 %v6832, %v6843
      %v6869 = vadd.f32 %v6833, %v6843
      %v6870 = vadd.f32 %v6834, %v6843
      %v6871 = vadd.f32 %v6835, %v6843
      %v6872 = vadd.f32 %v6836, %v6843
      %v6873 = vadd.f32 %v6837, %v6843
      %v6874 = vadd.f32 %v6838, %v6843
      %v6875 = vadd.f32 %v6839, %v6843
      %v6876 = vadd.f32 %v6840, %v6843
      %vm6877 = vcmp.gt.f32.partialorder %v6845, 0.0
      %vm6878 = vcmp.gt.f32.partialorder %v6846, 0.0
      %vm6879 = vcmp.gt.f32.partialorder %v6847, 0.0
      %vm6880 = vcmp.gt.f32.partialorder %v6848, 0.0
      %vm6881 = vcmp.gt.f32.partialorder %v6849, 0.0
      %vm6882 = vcmp.gt.f32.partialorder %v6850, 0.0
      %vm6883 = vcmp.gt.f32.partialorder %v6851, 0.0
      %vm6884 = vcmp.gt.f32.partialorder %v6852, 0.0
      %vm6885 = vcmp.gt.f32.partialorder %v6853, 0.0
      %vm6886 = vcmp.gt.f32.partialorder %v6854, 0.0
      %vm6887 = vcmp.gt.f32.partialorder %v6855, 0.0
      %vm6888 = vcmp.gt.f32.partialorder %v6856, 0.0
      %vm6889 = vcmp.gt.f32.partialorder %v6857, 0.0
      %vm6890 = vcmp.gt.f32.partialorder %v6858, 0.0
      %vm6891 = vcmp.gt.f32.partialorder %v6859, 0.0
      %vm6892 = vcmp.gt.f32.partialorder %v6860, 0.0
      %vm6893 = vcmp.gt.f32.partialorder %v6861, 0.0
      %vm6894 = vcmp.gt.f32.partialorder %v6862, 0.0
      %vm6895 = vcmp.gt.f32.partialorder %v6863, 0.0
      %vm6896 = vcmp.gt.f32.partialorder %v6864, 0.0
      %vm6897 = vcmp.gt.f32.partialorder %v6865, 0.0
      %vm6898 = vcmp.gt.f32.partialorder %v6866, 0.0
      %vm6899 = vcmp.gt.f32.partialorder %v6867, 0.0
      %vm6900 = vcmp.gt.f32.partialorder %v6868, 0.0
      %vm6901 = vcmp.gt.f32.partialorder %v6869, 0.0
      %vm6902 = vcmp.gt.f32.partialorder %v6870, 0.0
      %vm6903 = vcmp.gt.f32.partialorder %v6871, 0.0
      %vm6904 = vcmp.gt.f32.partialorder %v6872, 0.0
      %vm6905 = vcmp.gt.f32.partialorder %v6873, 0.0
      %vm6906 = vcmp.gt.f32.partialorder %v6874, 0.0
      %vm6907 = vcmp.gt.f32.partialorder %v6875, 0.0
      %vm6908 = vcmp.gt.f32.partialorder %v6876, 0.0
      %v6909 = vmul.f32 %v6845, 0.2
      %v6910 = vmul.f32 %v6846, 0.2
      %v6911 = vmul.f32 %v6847, 0.2
      %v6912 = vmul.f32 %v6848, 0.2
      %v6913 = vmul.f32 %v6849, 0.2
      %v6914 = vmul.f32 %v6850, 0.2
      %v6915 = vmul.f32 %v6851, 0.2
      %v6916 = vmul.f32 %v6852, 0.2
      %v6917 = vmul.f32 %v6853, 0.2
      %v6918 = vmul.f32 %v6854, 0.2
      %v6919 = vmul.f32 %v6855, 0.2
      %v6920 = vmul.f32 %v6856, 0.2
      %v6921 = vmul.f32 %v6857, 0.2
      %v6922 = vmul.f32 %v6858, 0.2
      %v6923 = vmul.f32 %v6859, 0.2
      %v6924 = vmul.f32 %v6860, 0.2
      %v6925 = vmul.f32 %v6861, 0.2
      %v6926 = vmul.f32 %v6862, 0.2
      %v6927 = vmul.f32 %v6863, 0.2
      %v6928 = vmul.f32 %v6864, 0.2
      %v6929 = vmul.f32 %v6865, 0.2
      %v6930 = vmul.f32 %v6866, 0.2
      %v6931 = vmul.f32 %v6867, 0.2
      %v6932 = vmul.f32 %v6868, 0.2
      %v6933 = vmul.f32 %v6869, 0.2
      %v6934 = vmul.f32 %v6870, 0.2
      %v6935 = vmul.f32 %v6871, 0.2
      %v6936 = vmul.f32 %v6872, 0.2
      %v6937 = vmul.f32 %v6873, 0.2
      %v6938 = vmul.f32 %v6874, 0.2
      %v6939 = vmul.f32 %v6875, 0.2
      %v6940 = vmul.f32 %v6876, 0.2
      %v6941 = vsel %vm6877, %v6845, %v6909
      %v6942 = vsel %vm6878, %v6846, %v6910
      %v6943 = vsel %vm6879, %v6847, %v6911
      %v6944 = vsel %vm6880, %v6848, %v6912
      %v6945 = vsel %vm6881, %v6849, %v6913
      %v6946 = vsel %vm6882, %v6850, %v6914
      %v6947 = vsel %vm6883, %v6851, %v6915
      %v6948 = vsel %vm6884, %v6852, %v6916
      %v6949 = vsel %vm6885, %v6853, %v6917
      %v6950 = vsel %vm6886, %v6854, %v6918
      %v6951 = vsel %vm6887, %v6855, %v6919
      %v6952 = vsel %vm6888, %v6856, %v6920
      %v6953 = vsel %vm6889, %v6857, %v6921
      %v6954 = vsel %vm6890, %v6858, %v6922
      %v6955 = vsel %vm6891, %v6859, %v6923
      %v6956 = vsel %vm6892, %v6860, %v6924
      %v6957 = vsel %vm6893, %v6861, %v6925
      %v6958 = vsel %vm6894, %v6862, %v6926
      %v6959 = vsel %vm6895, %v6863, %v6927
      %v6960 = vsel %vm6896, %v6864, %v6928
      %v6961 = vsel %vm6897, %v6865, %v6929
      %v6962 = vsel %vm6898, %v6866, %v6930
      %v6963 = vsel %vm6899, %v6867, %v6931
      %v6964 = vsel %vm6900, %v6868, %v6932
      %v6965 = vsel %vm6901, %v6869, %v6933
      %v6966 = vsel %vm6902, %v6870, %v6934
      %v6967 = vsel %vm6903, %v6871, %v6935
      %v6968 = vsel %vm6904, %v6872, %v6936
      %v6969 = vsel %vm6905, %v6873, %v6937
      %v6970 = vsel %vm6906, %v6874, %v6938
      %v6971 = vsel %vm6907, %v6875, %v6939
      %v6972 = vsel %vm6908, %v6876, %v6940
      %v6973 = vpack.c.bf16 %v6941, %v6941
      %v6974 = vpack.c.bf16 %v6942, %v6942
      %v6975 = vpack.c.bf16 %v6943, %v6943
      %v6976 = vpack.c.bf16 %v6944, %v6944
      %v6977 = vpack.c.bf16 %v6945, %v6945
      %v6978 = vpack.c.bf16 %v6946, %v6946
      %v6979 = vpack.c.bf16 %v6947, %v6947
      %v6980 = vpack.c.bf16 %v6948, %v6948
      %v6981 = vpack.c.bf16 %v6949, %v6949
      %v6982 = vpack.c.bf16 %v6950, %v6950
      %v6983 = vpack.c.bf16 %v6951, %v6951
      %v6984 = vpack.c.bf16 %v6952, %v6952
      %v6985 = vpack.c.bf16 %v6953, %v6953
      %v6986 = vpack.c.bf16 %v6954, %v6954
      %v6987 = vpack.c.bf16 %v6955, %v6955
      %v6988 = vpack.c.bf16 %v6956, %v6956
      %v6989 = vpack.c.bf16 %v6957, %v6957
      %v6990 = vpack.c.bf16 %v6958, %v6958
      %v6991 = vpack.c.bf16 %v6959, %v6959
      %v6992 = vpack.c.bf16 %v6960, %v6960
      %v6993 = vpack.c.bf16 %v6961, %v6961
      %v6994 = vpack.c.bf16 %v6962, %v6962
      %v6995 = vpack.c.bf16 %v6963, %v6963
      %v6996 = vpack.c.bf16 %v6964, %v6964
      %v6997 = vpack.c.bf16 %v6965, %v6965
      %v6998 = vpack.c.bf16 %v6966, %v6966
      %v6999 = vpack.c.bf16 %v6967, %v6967
      %v7000 = vpack.c.bf16 %v6968, %v6968
      %v7001 = vpack.c.bf16 %v6969, %v6969
      %v7002 = vpack.c.bf16 %v6970, %v6970
      %v7003 = vpack.c.bf16 %v6971, %v6971
      %v7004 = vpack.c.bf16 %v6972, %v6972
      %7005 = vst.msk [vmem:[%s248] sm:$0xf] %vm2892, %v6973
      %7006 = vst.msk [vmem:[%s248 + $0x4] sm:$0xf] %vm2892, %v6974
      %7007 = vst.msk [vmem:[%s248 + $0x8] sm:$0xf] %vm2892, %v6975
      %7008 = vst.msk [vmem:[%s248 + $0xc] sm:$0xf] %vm2892, %v6976
      %7009 = vst.msk [vmem:[%s248 + $0x10] sm:$0xf] %vm2892, %v6977
      %7010 = vst.msk [vmem:[%s248 + $0x14] sm:$0xf] %vm2892, %v6978
      %7011 = vst.msk [vmem:[%s248 + $0x18] sm:$0xf] %vm2892, %v6979
      %7012 = vst.msk [vmem:[%s248 + $0x1c] sm:$0xf] %vm2892, %v6980
      %7013 = vst.msk [vmem:[%s248 + $0x20] sm:$0xf] %vm2892, %v6981
      %7014 = vst.msk [vmem:[%s248 + $0x24] sm:$0xf] %vm2892, %v6982
      %7015 = vst.msk [vmem:[%s248 + $0x28] sm:$0xf] %vm2892, %v6983
      %7016 = vst.msk [vmem:[%s248 + $0x2c] sm:$0xf] %vm2892, %v6984
      %7017 = vst.msk [vmem:[%s248 + $0x30] sm:$0xf] %vm2892, %v6985
      %7018 = vst.msk [vmem:[%s248 + $0x34] sm:$0xf] %vm2892, %v6986
      %7019 = vst.msk [vmem:[%s248 + $0x38] sm:$0xf] %vm2892, %v6987
      %7020 = vst.msk [vmem:[%s248 + $0x3c] sm:$0xf] %vm2892, %v6988
      %7021 = vst.msk [vmem:[%s248 + $0x40] sm:$0xf] %vm2892, %v6989
      %7022 = vst.msk [vmem:[%s248 + $0x44] sm:$0xf] %vm2892, %v6990
      %7023 = vst.msk [vmem:[%s248 + $0x48] sm:$0xf] %vm2892, %v6991
      %7024 = vst.msk [vmem:[%s248 + $0x4c] sm:$0xf] %vm2892, %v6992
      %7025 = vst.msk [vmem:[%s248 + $0x50] sm:$0xf] %vm2892, %v6993
      %7026 = vst.msk [vmem:[%s248 + $0x54] sm:$0xf] %vm2892, %v6994
      %7027 = vst.msk [vmem:[%s248 + $0x58] sm:$0xf] %vm2892, %v6995
      %7028 = vst.msk [vmem:[%s248 + $0x5c] sm:$0xf] %vm2892, %v6996
      %7029 = vst.msk [vmem:[%s248 + $0x60] sm:$0xf] %vm2892, %v6997
      %7030 = vst.msk [vmem:[%s248 + $0x64] sm:$0xf] %vm2892, %v6998
      %7031 = vst.msk [vmem:[%s248 + $0x68] sm:$0xf] %vm2892, %v6999
      %7032 = vst.msk [vmem:[%s248 + $0x6c] sm:$0xf] %vm2892, %v7000
      %7033 = vst.msk [vmem:[%s248 + $0x70] sm:$0xf] %vm2892, %v7001
      %7034 = vst.msk [vmem:[%s248 + $0x74] sm:$0xf] %vm2892, %v7002
      %7035 = vst.msk [vmem:[%s248 + $0x78] sm:$0xf] %vm2892, %v7003
      %7036 = vst.msk [vmem:[%s248 + $0x7c] sm:$0xf] %vm2892, %v7004
      %s7037 = smul.u32 8, %s21
      %p7038 = scmp.lt.s32.totalorder %s20, 1
      %s7039 = scalar_select %p7038, %s20, 1
      %p7040 = scmp.lt.s32.totalorder %s7037, 31
      %s7041 = scalar_select %p7040, %s7037, 31
      %s7042 = smul.addr %s7041, 4
      %s7043 = smul.addr %s7039, 128
      %s7044 = sadd.s32 %s7042, %s7043
      %s7045 = smul.addr %s7044, 4
      %s7046 = scalar_lea.vmem %s5, %s7045
      // Predicated region
      $region49: #{progan_generator_block.1} parent=39 // pred_check
        %p7047 = pneg %p158
      $region50: #{progan_generator_block.1} parent=39 // pred_check_branch
        %7049 = sbr.rel (%p7047) target = $region52
      $region51: #{progan_generator_block.1} parent=39 // pred_region
        %s7050 = smul.u32 8, %s21
      $region52: #{progan_generator_block.1} parent=39 // pred_fallthru
        _
    $region40: #{progan_generator_block.1} parent=5 // pred_fallthru
      _
    %p7051 = scmp.le.s32.totalorder 2, %s11
    // Predicated region
    $region53: #{progan_generator_block.1} parent=5 // pred_check
      %p7052 = pneg %p7051
    $region54: #{progan_generator_block.1} parent=5 // pred_check_branch
      %7054 = sbr.rel (%p7052) target = $region56
    $region55: #{progan_generator_block.1} parent=5 // pred_region
      %s7055 = ssub.s32 %s11, 2
      // Predicated region
      $region57: #{progan_generator_block.1} parent=55 // pred_check
        %p7056 = pneg %p164
      $region58: #{progan_generator_block.1} parent=55 // pred_check_branch
        %7058 = sbr.rel (%p7056) target = $region60
      $region59: #{progan_generator_block.1} parent=55 // pred_region
        %s7059 = smul.u32 8, %s23
        %p7060 = scmp.lt.s32.totalorder %s22, 1
        %s7061 = scalar_select %p7060, %s22, 1
        %p7062 = scmp.lt.s32.totalorder %s7059, 31
        %s7063 = scalar_select %p7062, %s7059, 31
        %s7064 = smul.addr %s7063, 4
        %s7065 = smul.addr %s7061, 128
        %s7066 = sadd.s32 %s7064, %s7065
        %s7067 = smul.addr %s7066, 4
        %s7068 = scalar_lea.vmem %s5, %s7067
      $region60: #{progan_generator_block.1} parent=55 // pred_fallthru
        _
    $region56: #{progan_generator_block.1} parent=5 // pred_fallthru
      _
  $region6: #{progan_generator_block.1} parent=0 // loop_footer
    %s15 = sadd.s32 1, %s11
  $region7: #{progan_generator_block.1} parent=0 // loop_footer_branch
    %10 = sbr.rel target = $region3
  $region8: #{progan_generator_block.1} parent=0 // loop_exit
    _

</llo_original>
